<compile_context>
chip_gen: v7x
topology: tpu7x:2x2x1
jax: 0.10.0
libtpu: 0.0.40
codegen_flags: <defaults>
</compile_context>

<pallas_src>
import jax
import jax.numpy as jnp
from jax import lax
from jax.experimental import pallas as pl
from jax.experimental.pallas import tpu as pltpu

# ----------------------------- static config --------------------------------
NNODES, NFEAT, NHID, NCLASS = 16, 32, 32, 8
ORDERS, NORM_LAYERS = 3, 2
ALPHA, BETA, GAMMA, DELTA = 1.0, 1.0, 0.5, 0.5
DROPOUT = 0.5  # unused: eval mode => F.dropout is identity

_COE = 1.0 / (ALPHA + BETA)   # 0.5
_COE1 = 1.0 - GAMMA           # 0.5
_COE2 = 1.0 / _COE1           # 2.0
_LMIN = _COE2 * _COE2         # 4.0  (lambda_min lower bound of the SPD matrix)

# Newton-Schulz iteration split: bulk bf16-operand iterations (f32 accumulate)
# followed by f32 polish iterations.
_NS_BF16_ITERS = 10
_NS_F32_ITERS = 2

# Packed-slab row offsets (every segment starts on a sublane multiple of 8).
_ROW_X = 0                     # x            [NNODES, NFEAT]
_ROW_ADJ = 16                  # adj          [NNODES, NNODES]
_ROW_W1 = 32                   # DELTA*W1     [NFEAT,  NHID]
_ROW_W3 = 64                   # (1-D)*W3     [NNODES, NHID]
_ROW_B13 = 80                  # combined b   [1,      NHID]
_ROW_W2 = 88                   # W2           [NHID,   NCLASS]
_ROW_B2 = 120                  # b2           [1,      NCLASS]
_SLAB_ROWS, _SLAB_COLS = 128, 128

_VMEM = lambda: pl.BlockSpec(memory_space=pltpu.MemorySpace.VMEM)


# ------------------------------- fused kernel --------------------------------
def _fused_kernel(slab_ref, o_ref):
    """Whole MLP_NORM forward in one kernel; all intermediates VMEM/vreg-resident."""
    # Static ref slices of the packed slab (zero-cost views; sublane-aligned).
    x = slab_ref[_ROW_X:_ROW_X + NNODES, 0:NFEAT]
    adj = slab_ref[_ROW_ADJ:_ROW_ADJ + NNODES, 0:NNODES]
    w1f = slab_ref[_ROW_W1:_ROW_W1 + NFEAT, 0:NHID]       # DELTA * W1
    w3f = slab_ref[_ROW_W3:_ROW_W3 + NNODES, 0:NHID]      # (1-DELTA) * W3
    b13 = slab_ref[_ROW_B13:_ROW_B13 + 1, 0:NHID]         # DELTA*b1 + (1-DELTA)*b3
    w2 = slab_ref[_ROW_W2:_ROW_W2 + NHID, 0:NCLASS]
    b2 = slab_ref[_ROW_B2:_ROW_B2 + 1, 0:NCLASS]

    # ---- MLP head: fc2(relu(delta*fc1(x) + (1-delta)*fc3(adj))) -------------
    h = jnp.maximum(
        jnp.dot(x, w1f, preferred_element_type=jnp.float32)
        + jnp.dot(adj, w3f, preferred_element_type=jnp.float32)
        + b13,
        0.0)
    xc = jnp.dot(h, w2, preferred_element_type=jnp.float32) + b2   # [NNODES, NCLASS]
    h0 = xc

    # Hoisted adjacency powers (loop-invariant; overlap the NS chain).
    a2 = jnp.dot(adj, adj, preferred_element_type=jnp.float32)
    a3 = jnp.dot(adj, a2, preferred_element_type=jnp.float32)

    eye_c = jnp.eye(NCLASS, dtype=jnp.float32)
    two_eye = 2.0 * eye_c
    contract0 = (((0,), (0,)), ((), ()))   # contract over axis 0 (no .T relayout)

    # ---- norm_func1, NORM_LAYERS times (fully unrolled) ----------------------
    for _ in range(NORM_LAYERS):
        # gram = xc^T @ xc  -> [NCLASS, NCLASS]; only transposed contraction left
        # per layer after the tmp refactor (XLU transpose at worst).
        gram = lax.dot_general(xc, xc, contract0,
                               preferred_element_type=jnp.float32)
        a_mat = _LMIN * eye_c + _COE * gram     # SPD, eigenvalues in [LMIN, ninf]

        # Newton-Schulz inverse:  X0 = 2/(ninf+LMIN) * I ;  X <- X (2I - A X)
        # TODO(synk): torch.inverse has no direct Pallas primitive; SPD
        # Newton-Schulz in-kernel replaces it (matches jnp.linalg.inv to f32).
        row_abs = jnp.sum(jnp.abs(a_mat), axis=1, keepdims=True)    # [NCLASS,1]
        ninf = jnp.max(row_abs, axis=0, keepdims=True)              # [1,1]
        inv = (2.0 * pl.reciprocal(ninf + _LMIN, approx=True)) * eye_c

        # Bulk iterations: bf16 MXU operands, f32 accumulation; elementwise f32.
        a_bf = a_mat.astype(jnp.bfloat16)
        for _ in range(_NS_BF16_ITERS):
            ax = jnp.dot(a_bf, inv.astype(jnp.bfloat16),
                         preferred_element_type=jnp.float32)
            inv = jnp.dot(inv.astype(jnp.bfloat16),
                          (two_eye - ax).astype(jnp.bfloat16),
                          preferred_element_type=jnp.float32)
        # f32 polish iterations restore full f32 accuracy (self-correcting).
        for _ in range(_NS_F32_ITERS):
            ax = jnp.dot(a_mat, inv, preferred_element_type=jnp.float32)
            inv = jnp.dot(inv, two_eye - ax, preferred_element_type=jnp.float32)

        r = jnp.dot(inv, gram, preferred_element_type=jnp.float32)
        # tmp = xc^T @ res computed directly from gram/r (exact algebra):
        tmp = (_COE1 * _COE) * gram - (_COE1 * _COE * _COE) * jnp.dot(
            gram, r, preferred_element_type=jnp.float32)
        # res only feeds the adjacency-order branch; independent of tmp.
        res = (_COE1 * _COE) * xc - (_COE1 * _COE * _COE) * jnp.dot(
            xc, r, preferred_element_type=jnp.float32)

        # order_func1 with hoisted powers: 3 independent matmuls, no chain.
        sum_orders = (res
                      + jnp.dot(adj, res, preferred_element_type=jnp.float32)
                      + jnp.dot(a2, res, preferred_element_type=jnp.float32)
                      + jnp.dot(a3, res, preferred_element_type=jnp.float32))

        xc = (_COE1 * jnp.dot(xc, tmp, preferred_element_type=jnp.float32)
              + BETA * sum_orders
              - (GAMMA * _COE1) * jnp.dot(h0, tmp,
                                          preferred_element_type=jnp.float32)
              + GAMMA * h0)

    # ---- log_softmax over dim=1 ----------------------------------------------
    m = jnp.max(xc, axis=1, keepdims=True)
    s = xc - m
    lse = jnp.log(jnp.sum(jnp.exp(s), axis=1, keepdims=True))
    o_ref[...] = s - lse


# ------------------------------- wrapper --------------------------------------
@jax.jit
def mlp_norm_forward(x, adj, params):
    w1, b1, w2, b2, w3, b3 = params
    # Fold DELTA into the head weights and pack everything into ONE lane-padded
    # f32 slab (single DMA prologue; trace-time/XLA-side ops on tiny tensors).
    slab = jnp.zeros((_SLAB_ROWS, _SLAB_COLS), jnp.float32)
    slab = slab.at[_ROW_X:_ROW_X + NNODES, 0:NFEAT].set(x.astype(jnp.float32))
    slab = slab.at[_ROW_ADJ:_ROW_ADJ + NNODES, 0:NNODES].set(adj.astype(jnp.float32))
    slab = slab.at[_ROW_W1:_ROW_W1 + NFEAT, 0:NHID].set(DELTA * w1)
    slab = slab.at[_ROW_W3:_ROW_W3 + NNODES, 0:NHID].set((1.0 - DELTA) * w3)
    slab = slab.at[_ROW_B13:_ROW_B13 + 1, 0:NHID].set(DELTA * b1 + (1.0 - DELTA) * b3)
    slab = slab.at[_ROW_W2:_ROW_W2 + NHID, 0:NCLASS].set(w2)
    slab = slab.at[_ROW_B2:_ROW_B2 + 1, 0:NCLASS].set(b2)

    return pl.pallas_call(
        _fused_kernel,
        out_shape=jax.ShapeDtypeStruct((NNODES, NCLASS), jnp.float32),
        in_specs=[_VMEM()],
        out_specs=_VMEM(),
    )(slab)


# --------------------------- pure-JAX reference --------------------------------
def mlp_norm_reference(x, adj, params):
    """Straight transcription of the torch forward (eval mode), f32."""
    w1, b1, w2, b2, w3, b3 = params
    xX = x @ w1 + b1
    xA = adj @ w3 + b3
    h = jnp.maximum(DELTA * xX + (1.0 - DELTA) * xA, 0.0)
    xc = h @ w2 + b2
    h0 = xc
    eye_c = jnp.eye(NCLASS, dtype=jnp.float32)
    for _ in range(NORM_LAYERS):
        gram = xc.T @ xc
        inv = jnp.linalg.inv(_COE2 * _COE2 * eye_c + _COE * gram)
        r = inv @ gram
        res = _COE1 * _COE * xc - _COE1 * _COE * _COE * (xc @ r)
        tmp = xc.T @ res
        t = res
        s = res
        for _ in range(ORDERS):
            t = adj @ t
            s = s + t
        xc = (_COE1 * (xc @ tmp) + BETA * s
              - GAMMA * _COE1 * (h0 @ tmp) + GAMMA * h0)
    return jax.nn.log_softmax(xc, axis=1)


# ---------------------------- parameter setup ---------------------------------
def init_params(key):
    k1, k2, k3, k4, k5, k6 = jax.random.split(key, 6)
    # Weights stored pre-transposed: [in_features, out_features].
    w1 = jax.random.normal(k1, (NFEAT, NHID), jnp.float32) * (1.0 / NFEAT) ** 0.5
    b1 = jax.random.normal(k2, (1, NHID), jnp.float32) * 0.01
    w2 = jax.random.normal(k3, (NHID, NCLASS), jnp.float32) * (1.0 / NHID) ** 0.5
    b2 = jax.random.normal(k4, (1, NCLASS), jnp.float32) * 0.01
    w3 = jax.random.normal(k5, (NNODES, NHID), jnp.float32) * (1.0 / NNODES) ** 0.5
    b3 = jax.random.normal(k6, (1, NHID), jnp.float32) * 0.01
    return (w1, b1, w2, b2, w3, b3)


if __name__ == "__main__":
    key = jax.random.PRNGKey(0)
    kx, ka, kp = jax.random.split(key, 3)

    x = jax.random.normal(kx, (NNODES, NFEAT), jnp.float32)

    # Symmetric, row-normalized dense adjacency with self loops.
    a = (jax.random.uniform(ka, (NNODES, NNODES)) > 0.7).astype(jnp.float32)
    a = jnp.maximum(a, a.T) + jnp.eye(NNODES, dtype=jnp.float32)
    adj = a / jnp.sum(a, axis=1, keepdims=True)

    params = init_params(kp)

    out = mlp_norm_forward(x, adj, params)
    out = jax.block_until_ready(out)

    assert out.shape == (NNODES, NCLASS)
    # rows of log_softmax must logsumexp to ~0
    assert bool(jnp.all(jnp.abs(jax.scipy.special.logsumexp(out, axis=1)) < 1e-4))
    # check against the pure-JAX reference (jnp.linalg.inv) with a loose f32 tol
    ref = mlp_norm_reference(x, adj, params)
    assert bool(jnp.allclose(out, ref, rtol=2e-3, atol=2e-3))
    print("KERNEL_OK")
</pallas_src>

<mosaic_0001>
module attributes {stable_mosaic.version = 11 : i64} {
  func.func @_fused_kernel(%arg0: memref<128x128xf32, #tpu.memory_space<vmem>>, %arg1: memref<16x8xf32, #tpu.memory_space<vmem>>) attributes {dimension_semantics = [], scalar_prefetch = 0 : i64, scratch_operands = 0 : i64, tpu.core_type = #tpu.core_type<tc>} {
    %c0 = arith.constant 0 : index
    %c0_0 = arith.constant 0 : index
    %0 = vector.load %arg0[%c0, %c0_0] : memref<128x128xf32, #tpu.memory_space<vmem>>, vector<16x32xf32>
    %c16 = arith.constant 16 : index
    %c0_1 = arith.constant 0 : index
    %1 = vector.load %arg0[%c16, %c0_1] : memref<128x128xf32, #tpu.memory_space<vmem>>, vector<16x16xf32>
    %c32 = arith.constant 32 : index
    %c0_2 = arith.constant 0 : index
    %2 = vector.load %arg0[%c32, %c0_2] : memref<128x128xf32, #tpu.memory_space<vmem>>, vector<32x32xf32>
    %c64 = arith.constant 64 : index
    %c0_3 = arith.constant 0 : index
    %3 = vector.load %arg0[%c64, %c0_3] : memref<128x128xf32, #tpu.memory_space<vmem>>, vector<16x32xf32>
    %c80 = arith.constant 80 : index
    %c0_4 = arith.constant 0 : index
    %4 = vector.load %arg0[%c80, %c0_4] : memref<128x128xf32, #tpu.memory_space<vmem>>, vector<1x32xf32>
    %c88 = arith.constant 88 : index
    %c0_5 = arith.constant 0 : index
    %5 = vector.load %arg0[%c88, %c0_5] : memref<128x128xf32, #tpu.memory_space<vmem>>, vector<32x8xf32>
    %c120 = arith.constant 120 : index
    %c0_6 = arith.constant 0 : index
    %6 = vector.load %arg0[%c120, %c0_6] : memref<128x128xf32, #tpu.memory_space<vmem>>, vector<1x8xf32>
    %cst = arith.constant dense<0.000000e+00> : vector<16x32xf32>
    %7 = tpu.matmul %0, %2, %cst {dimension_numbers = #tpu.dot_dimension_numbers<[1], [0], [0], [1], [0, 0, 1, 1], [], []>} : vector<16x32xf32>, vector<32x32xf32>, vector<16x32xf32> -> vector<16x32xf32>
    %cst_7 = arith.constant dense<0.000000e+00> : vector<16x32xf32>
    %8 = tpu.matmul %1, %3, %cst_7 {dimension_numbers = #tpu.dot_dimension_numbers<[1], [0], [0], [1], [0, 0, 1, 1], [], []>} : vector<16x16xf32>, vector<16x32xf32>, vector<16x32xf32> -> vector<16x32xf32>
    %9 = arith.addf %7, %8 : vector<16x32xf32>
    %10 = vector.broadcast %4 : vector<1x32xf32> to vector<16x32xf32>
    %11 = arith.addf %9, %10 : vector<16x32xf32>
    %cst_8 = arith.constant 0.000000e+00 : f32
    %12 = vector.broadcast %cst_8 : f32 to vector<16x32xf32>
    %13 = arith.maximumf %11, %12 : vector<16x32xf32>
    %cst_9 = arith.constant dense<0.000000e+00> : vector<16x8xf32>
    %14 = tpu.matmul %13, %5, %cst_9 {dimension_numbers = #tpu.dot_dimension_numbers<[1], [0], [0], [1], [0, 0, 1, 1], [], []>} : vector<16x32xf32>, vector<32x8xf32>, vector<16x8xf32> -> vector<16x8xf32>
    %15 = vector.broadcast %6 : vector<1x8xf32> to vector<16x8xf32>
    %16 = arith.addf %14, %15 : vector<16x8xf32>
    %cst_10 = arith.constant dense<0.000000e+00> : vector<16x16xf32>
    %17 = tpu.matmul %1, %1, %cst_10 {dimension_numbers = #tpu.dot_dimension_numbers<[1], [0], [0], [1], [0, 0, 1, 1], [], []>} : vector<16x16xf32>, vector<16x16xf32>, vector<16x16xf32> -> vector<16x16xf32>
    %cst_11 = arith.constant dense<0.000000e+00> : vector<16x16xf32>
    %18 = tpu.matmul %1, %17, %cst_11 {dimension_numbers = #tpu.dot_dimension_numbers<[1], [0], [0], [1], [0, 0, 1, 1], [], []>} : vector<16x16xf32>, vector<16x16xf32>, vector<16x16xf32> -> vector<16x16xf32>
    %19 = tpu.iota {dimensions = array<i32: 0>} : vector<8x8xi32>
    %20 = tpu.iota {dimensions = array<i32: 1>} : vector<8x8xi32>
    %c0_i32 = arith.constant 0 : i32
    %21 = vector.broadcast %c0_i32 : i32 to vector<8x8xi32>
    %22 = arith.addi %19, %21 : vector<8x8xi32>
    %23 = arith.cmpi eq, %22, %20 : vector<8x8xi32>
    %24 = arith.extui %23 : vector<8x8xi1> to vector<8x8xi32>
    %25 = arith.sitofp %24 : vector<8x8xi32> to vector<8x8xf32>
    %cst_12 = arith.constant 2.000000e+00 : f32
    %26 = vector.broadcast %cst_12 : f32 to vector<8x8xf32>
    %27 = arith.mulf %26, %25 : vector<8x8xf32>
    %cst_13 = arith.constant dense<0.000000e+00> : vector<8x8xf32>
    %28 = tpu.matmul %16, %16, %cst_13 {dimension_numbers = #tpu.dot_dimension_numbers<[0], [0], [1], [1], [0, 1, 1, 1], [], []>} : vector<16x8xf32>, vector<16x8xf32>, vector<8x8xf32> -> vector<8x8xf32>
    %cst_14 = arith.constant 4.000000e+00 : f32
    %29 = vector.broadcast %cst_14 : f32 to vector<8x8xf32>
    %30 = arith.mulf %29, %25 : vector<8x8xf32>
    %cst_15 = arith.constant 5.000000e-01 : f32
    %31 = vector.broadcast %cst_15 : f32 to vector<8x8xf32>
    %32 = arith.mulf %31, %28 : vector<8x8xf32>
    %33 = arith.addf %30, %32 : vector<8x8xf32>
    %34 = math.absf %33 : vector<8x8xf32>
    %cst_16 = arith.constant dense<0.000000e+00> : vector<8xf32>
    %35 = vector.multi_reduction <add>, %34, %cst_16 [1] : vector<8x8xf32> to vector<8xf32>
    %36 = vector.shape_cast %35 : vector<8xf32> to vector<8x1xf32>
    %cst_17 = arith.constant dense<0xFF800000> : vector<1xf32>
    %37 = vector.multi_reduction <maximumf>, %36, %cst_17 [0] : vector<8x1xf32> to vector<1xf32>
    %38 = vector.shape_cast %37 : vector<1xf32> to vector<1x1xf32>
    %cst_18 = arith.constant 4.000000e+00 : f32
    %39 = vector.broadcast %cst_18 : f32 to vector<1x1xf32>
    %40 = arith.addf %38, %39 : vector<1x1xf32>
    %41 = tpu.reciprocal %40 {approx = true} : vector<1x1xf32> -> vector<1x1xf32>
    %cst_19 = arith.constant 2.000000e+00 : f32
    %42 = vector.broadcast %cst_19 : f32 to vector<1x1xf32>
    %43 = arith.mulf %42, %41 : vector<1x1xf32>
    %44 = vector.broadcast %43 : vector<1x1xf32> to vector<8x8xf32>
    %45 = arith.mulf %44, %25 : vector<8x8xf32>
    %46 = arith.truncf %33 : vector<8x8xf32> to vector<8x8xbf16>
    %47 = arith.truncf %45 : vector<8x8xf32> to vector<8x8xbf16>
    %cst_20 = arith.constant dense<0.000000e+00> : vector<8x8xf32>
    %48 = tpu.matmul %46, %47, %cst_20 {dimension_numbers = #tpu.dot_dimension_numbers<[1], [0], [0], [1], [0, 0, 1, 1], [], []>} : vector<8x8xbf16>, vector<8x8xbf16>, vector<8x8xf32> -> vector<8x8xf32>
    %49 = arith.truncf %45 : vector<8x8xf32> to vector<8x8xbf16>
    %50 = arith.subf %27, %48 : vector<8x8xf32>
    %51 = arith.truncf %50 : vector<8x8xf32> to vector<8x8xbf16>
    %cst_21 = arith.constant dense<0.000000e+00> : vector<8x8xf32>
    %52 = tpu.matmul %49, %51, %cst_21 {dimension_numbers = #tpu.dot_dimension_numbers<[1], [0], [0], [1], [0, 0, 1, 1], [], []>} : vector<8x8xbf16>, vector<8x8xbf16>, vector<8x8xf32> -> vector<8x8xf32>
    %53 = arith.truncf %52 : vector<8x8xf32> to vector<8x8xbf16>
    %cst_22 = arith.constant dense<0.000000e+00> : vector<8x8xf32>
    %54 = tpu.matmul %46, %53, %cst_22 {dimension_numbers = #tpu.dot_dimension_numbers<[1], [0], [0], [1], [0, 0, 1, 1], [], []>} : vector<8x8xbf16>, vector<8x8xbf16>, vector<8x8xf32> -> vector<8x8xf32>
    %55 = arith.truncf %52 : vector<8x8xf32> to vector<8x8xbf16>
    %56 = arith.subf %27, %54 : vector<8x8xf32>
    %57 = arith.truncf %56 : vector<8x8xf32> to vector<8x8xbf16>
    %cst_23 = arith.constant dense<0.000000e+00> : vector<8x8xf32>
    %58 = tpu.matmul %55, %57, %cst_23 {dimension_numbers = #tpu.dot_dimension_numbers<[1], [0], [0], [1], [0, 0, 1, 1], [], []>} : vector<8x8xbf16>, vector<8x8xbf16>, vector<8x8xf32> -> vector<8x8xf32>
    %59 = arith.truncf %58 : vector<8x8xf32> to vector<8x8xbf16>
    %cst_24 = arith.constant dense<0.000000e+00> : vector<8x8xf32>
    %60 = tpu.matmul %46, %59, %cst_24 {dimension_numbers = #tpu.dot_dimension_numbers<[1], [0], [0], [1], [0, 0, 1, 1], [], []>} : vector<8x8xbf16>, vector<8x8xbf16>, vector<8x8xf32> -> vector<8x8xf32>
    %61 = arith.truncf %58 : vector<8x8xf32> to vector<8x8xbf16>
    %62 = arith.subf %27, %60 : vector<8x8xf32>
    %63 = arith.truncf %62 : vector<8x8xf32> to vector<8x8xbf16>
    %cst_25 = arith.constant dense<0.000000e+00> : vector<8x8xf32>
    %64 = tpu.matmul %61, %63, %cst_25 {dimension_numbers = #tpu.dot_dimension_numbers<[1], [0], [0], [1], [0, 0, 1, 1], [], []>} : vector<8x8xbf16>, vector<8x8xbf16>, vector<8x8xf32> -> vector<8x8xf32>
    %65 = arith.truncf %64 : vector<8x8xf32> to vector<8x8xbf16>
    %cst_26 = arith.constant dense<0.000000e+00> : vector<8x8xf32>
    %66 = tpu.matmul %46, %65, %cst_26 {dimension_numbers = #tpu.dot_dimension_numbers<[1], [0], [0], [1], [0, 0, 1, 1], [], []>} : vector<8x8xbf16>, vector<8x8xbf16>, vector<8x8xf32> -> vector<8x8xf32>
    %67 = arith.truncf %64 : vector<8x8xf32> to vector<8x8xbf16>
    %68 = arith.subf %27, %66 : vector<8x8xf32>
    %69 = arith.truncf %68 : vector<8x8xf32> to vector<8x8xbf16>
    %cst_27 = arith.constant dense<0.000000e+00> : vector<8x8xf32>
    %70 = tpu.matmul %67, %69, %cst_27 {dimension_numbers = #tpu.dot_dimension_numbers<[1], [0], [0], [1], [0, 0, 1, 1], [], []>} : vector<8x8xbf16>, vector<8x8xbf16>, vector<8x8xf32> -> vector<8x8xf32>
    %71 = arith.truncf %70 : vector<8x8xf32> to vector<8x8xbf16>
    %cst_28 = arith.constant dense<0.000000e+00> : vector<8x8xf32>
    %72 = tpu.matmul %46, %71, %cst_28 {dimension_numbers = #tpu.dot_dimension_numbers<[1], [0], [0], [1], [0, 0, 1, 1], [], []>} : vector<8x8xbf16>, vector<8x8xbf16>, vector<8x8xf32> -> vector<8x8xf32>
    %73 = arith.truncf %70 : vector<8x8xf32> to vector<8x8xbf16>
    %74 = arith.subf %27, %72 : vector<8x8xf32>
    %75 = arith.truncf %74 : vector<8x8xf32> to vector<8x8xbf16>
    %cst_29 = arith.constant dense<0.000000e+00> : vector<8x8xf32>
    %76 = tpu.matmul %73, %75, %cst_29 {dimension_numbers = #tpu.dot_dimension_numbers<[1], [0], [0], [1], [0, 0, 1, 1], [], []>} : vector<8x8xbf16>, vector<8x8xbf16>, vector<8x8xf32> -> vector<8x8xf32>
    %77 = arith.truncf %76 : vector<8x8xf32> to vector<8x8xbf16>
    %cst_30 = arith.constant dense<0.000000e+00> : vector<8x8xf32>
    %78 = tpu.matmul %46, %77, %cst_30 {dimension_numbers = #tpu.dot_dimension_numbers<[1], [0], [0], [1], [0, 0, 1, 1], [], []>} : vector<8x8xbf16>, vector<8x8xbf16>, vector<8x8xf32> -> vector<8x8xf32>
    %79 = arith.truncf %76 : vector<8x8xf32> to vector<8x8xbf16>
    %80 = arith.subf %27, %78 : vector<8x8xf32>
    %81 = arith.truncf %80 : vector<8x8xf32> to vector<8x8xbf16>
    %cst_31 = arith.constant dense<0.000000e+00> : vector<8x8xf32>
    %82 = tpu.matmul %79, %81, %cst_31 {dimension_numbers = #tpu.dot_dimension_numbers<[1], [0], [0], [1], [0, 0, 1, 1], [], []>} : vector<8x8xbf16>, vector<8x8xbf16>, vector<8x8xf32> -> vector<8x8xf32>
    %83 = arith.truncf %82 : vector<8x8xf32> to vector<8x8xbf16>
    %cst_32 = arith.constant dense<0.000000e+00> : vector<8x8xf32>
    %84 = tpu.matmul %46, %83, %cst_32 {dimension_numbers = #tpu.dot_dimension_numbers<[1], [0], [0], [1], [0, 0, 1, 1], [], []>} : vector<8x8xbf16>, vector<8x8xbf16>, vector<8x8xf32> -> vector<8x8xf32>
    %85 = arith.truncf %82 : vector<8x8xf32> to vector<8x8xbf16>
    %86 = arith.subf %27, %84 : vector<8x8xf32>
    %87 = arith.truncf %86 : vector<8x8xf32> to vector<8x8xbf16>
    %cst_33 = arith.constant dense<0.000000e+00> : vector<8x8xf32>
    %88 = tpu.matmul %85, %87, %cst_33 {dimension_numbers = #tpu.dot_dimension_numbers<[1], [0], [0], [1], [0, 0, 1, 1], [], []>} : vector<8x8xbf16>, vector<8x8xbf16>, vector<8x8xf32> -> vector<8x8xf32>
    %89 = arith.truncf %88 : vector<8x8xf32> to vector<8x8xbf16>
    %cst_34 = arith.constant dense<0.000000e+00> : vector<8x8xf32>
    %90 = tpu.matmul %46, %89, %cst_34 {dimension_numbers = #tpu.dot_dimension_numbers<[1], [0], [0], [1], [0, 0, 1, 1], [], []>} : vector<8x8xbf16>, vector<8x8xbf16>, vector<8x8xf32> -> vector<8x8xf32>
    %91 = arith.truncf %88 : vector<8x8xf32> to vector<8x8xbf16>
    %92 = arith.subf %27, %90 : vector<8x8xf32>
    %93 = arith.truncf %92 : vector<8x8xf32> to vector<8x8xbf16>
    %cst_35 = arith.constant dense<0.000000e+00> : vector<8x8xf32>
    %94 = tpu.matmul %91, %93, %cst_35 {dimension_numbers = #tpu.dot_dimension_numbers<[1], [0], [0], [1], [0, 0, 1, 1], [], []>} : vector<8x8xbf16>, vector<8x8xbf16>, vector<8x8xf32> -> vector<8x8xf32>
    %95 = arith.truncf %94 : vector<8x8xf32> to vector<8x8xbf16>
    %cst_36 = arith.constant dense<0.000000e+00> : vector<8x8xf32>
    %96 = tpu.matmul %46, %95, %cst_36 {dimension_numbers = #tpu.dot_dimension_numbers<[1], [0], [0], [1], [0, 0, 1, 1], [], []>} : vector<8x8xbf16>, vector<8x8xbf16>, vector<8x8xf32> -> vector<8x8xf32>
    %97 = arith.truncf %94 : vector<8x8xf32> to vector<8x8xbf16>
    %98 = arith.subf %27, %96 : vector<8x8xf32>
    %99 = arith.truncf %98 : vector<8x8xf32> to vector<8x8xbf16>
    %cst_37 = arith.constant dense<0.000000e+00> : vector<8x8xf32>
    %100 = tpu.matmul %97, %99, %cst_37 {dimension_numbers = #tpu.dot_dimension_numbers<[1], [0], [0], [1], [0, 0, 1, 1], [], []>} : vector<8x8xbf16>, vector<8x8xbf16>, vector<8x8xf32> -> vector<8x8xf32>
    %101 = arith.truncf %100 : vector<8x8xf32> to vector<8x8xbf16>
    %cst_38 = arith.constant dense<0.000000e+00> : vector<8x8xf32>
    %102 = tpu.matmul %46, %101, %cst_38 {dimension_numbers = #tpu.dot_dimension_numbers<[1], [0], [0], [1], [0, 0, 1, 1], [], []>} : vector<8x8xbf16>, vector<8x8xbf16>, vector<8x8xf32> -> vector<8x8xf32>
    %103 = arith.truncf %100 : vector<8x8xf32> to vector<8x8xbf16>
    %104 = arith.subf %27, %102 : vector<8x8xf32>
    %105 = arith.truncf %104 : vector<8x8xf32> to vector<8x8xbf16>
    %cst_39 = arith.constant dense<0.000000e+00> : vector<8x8xf32>
    %106 = tpu.matmul %103, %105, %cst_39 {dimension_numbers = #tpu.dot_dimension_numbers<[1], [0], [0], [1], [0, 0, 1, 1], [], []>} : vector<8x8xbf16>, vector<8x8xbf16>, vector<8x8xf32> -> vector<8x8xf32>
    %cst_40 = arith.constant dense<0.000000e+00> : vector<8x8xf32>
    %107 = tpu.matmul %33, %106, %cst_40 {dimension_numbers = #tpu.dot_dimension_numbers<[1], [0], [0], [1], [0, 0, 1, 1], [], []>} : vector<8x8xf32>, vector<8x8xf32>, vector<8x8xf32> -> vector<8x8xf32>
    %108 = arith.subf %27, %107 : vector<8x8xf32>
    %cst_41 = arith.constant dense<0.000000e+00> : vector<8x8xf32>
    %109 = tpu.matmul %106, %108, %cst_41 {dimension_numbers = #tpu.dot_dimension_numbers<[1], [0], [0], [1], [0, 0, 1, 1], [], []>} : vector<8x8xf32>, vector<8x8xf32>, vector<8x8xf32> -> vector<8x8xf32>
    %cst_42 = arith.constant dense<0.000000e+00> : vector<8x8xf32>
    %110 = tpu.matmul %33, %109, %cst_42 {dimension_numbers = #tpu.dot_dimension_numbers<[1], [0], [0], [1], [0, 0, 1, 1], [], []>} : vector<8x8xf32>, vector<8x8xf32>, vector<8x8xf32> -> vector<8x8xf32>
    %111 = arith.subf %27, %110 : vector<8x8xf32>
    %cst_43 = arith.constant dense<0.000000e+00> : vector<8x8xf32>
    %112 = tpu.matmul %109, %111, %cst_43 {dimension_numbers = #tpu.dot_dimension_numbers<[1], [0], [0], [1], [0, 0, 1, 1], [], []>} : vector<8x8xf32>, vector<8x8xf32>, vector<8x8xf32> -> vector<8x8xf32>
    %cst_44 = arith.constant dense<0.000000e+00> : vector<8x8xf32>
    %113 = tpu.matmul %112, %28, %cst_44 {dimension_numbers = #tpu.dot_dimension_numbers<[1], [0], [0], [1], [0, 0, 1, 1], [], []>} : vector<8x8xf32>, vector<8x8xf32>, vector<8x8xf32> -> vector<8x8xf32>
    %cst_45 = arith.constant 2.500000e-01 : f32
    %114 = vector.broadcast %cst_45 : f32 to vector<8x8xf32>
    %115 = arith.mulf %114, %28 : vector<8x8xf32>
    %cst_46 = arith.constant dense<0.000000e+00> : vector<8x8xf32>
    %116 = tpu.matmul %28, %113, %cst_46 {dimension_numbers = #tpu.dot_dimension_numbers<[1], [0], [0], [1], [0, 0, 1, 1], [], []>} : vector<8x8xf32>, vector<8x8xf32>, vector<8x8xf32> -> vector<8x8xf32>
    %cst_47 = arith.constant 1.250000e-01 : f32
    %117 = vector.broadcast %cst_47 : f32 to vector<8x8xf32>
    %118 = arith.mulf %117, %116 : vector<8x8xf32>
    %119 = arith.subf %115, %118 : vector<8x8xf32>
    %cst_48 = arith.constant 2.500000e-01 : f32
    %120 = vector.broadcast %cst_48 : f32 to vector<16x8xf32>
    %121 = arith.mulf %120, %16 : vector<16x8xf32>
    %cst_49 = arith.constant dense<0.000000e+00> : vector<16x8xf32>
    %122 = tpu.matmul %16, %113, %cst_49 {dimension_numbers = #tpu.dot_dimension_numbers<[1], [0], [0], [1], [0, 0, 1, 1], [], []>} : vector<16x8xf32>, vector<8x8xf32>, vector<16x8xf32> -> vector<16x8xf32>
    %cst_50 = arith.constant 1.250000e-01 : f32
    %123 = vector.broadcast %cst_50 : f32 to vector<16x8xf32>
    %124 = arith.mulf %123, %122 : vector<16x8xf32>
    %125 = arith.subf %121, %124 : vector<16x8xf32>
    %cst_51 = arith.constant dense<0.000000e+00> : vector<16x8xf32>
    %126 = tpu.matmul %1, %125, %cst_51 {dimension_numbers = #tpu.dot_dimension_numbers<[1], [0], [0], [1], [0, 0, 1, 1], [], []>} : vector<16x16xf32>, vector<16x8xf32>, vector<16x8xf32> -> vector<16x8xf32>
    %127 = arith.addf %125, %126 : vector<16x8xf32>
    %cst_52 = arith.constant dense<0.000000e+00> : vector<16x8xf32>
    %128 = tpu.matmul %17, %125, %cst_52 {dimension_numbers = #tpu.dot_dimension_numbers<[1], [0], [0], [1], [0, 0, 1, 1], [], []>} : vector<16x16xf32>, vector<16x8xf32>, vector<16x8xf32> -> vector<16x8xf32>
    %129 = arith.addf %127, %128 : vector<16x8xf32>
    %cst_53 = arith.constant dense<0.000000e+00> : vector<16x8xf32>
    %130 = tpu.matmul %18, %125, %cst_53 {dimension_numbers = #tpu.dot_dimension_numbers<[1], [0], [0], [1], [0, 0, 1, 1], [], []>} : vector<16x16xf32>, vector<16x8xf32>, vector<16x8xf32> -> vector<16x8xf32>
    %131 = arith.addf %129, %130 : vector<16x8xf32>
    %cst_54 = arith.constant dense<0.000000e+00> : vector<16x8xf32>
    %132 = tpu.matmul %16, %119, %cst_54 {dimension_numbers = #tpu.dot_dimension_numbers<[1], [0], [0], [1], [0, 0, 1, 1], [], []>} : vector<16x8xf32>, vector<8x8xf32>, vector<16x8xf32> -> vector<16x8xf32>
    %cst_55 = arith.constant 5.000000e-01 : f32
    %133 = vector.broadcast %cst_55 : f32 to vector<16x8xf32>
    %134 = arith.mulf %133, %132 : vector<16x8xf32>
    %cst_56 = arith.constant 1.000000e+00 : f32
    %135 = vector.broadcast %cst_56 : f32 to vector<16x8xf32>
    %136 = arith.mulf %135, %131 : vector<16x8xf32>
    %137 = arith.addf %134, %136 : vector<16x8xf32>
    %cst_57 = arith.constant dense<0.000000e+00> : vector<16x8xf32>
    %138 = tpu.matmul %16, %119, %cst_57 {dimension_numbers = #tpu.dot_dimension_numbers<[1], [0], [0], [1], [0, 0, 1, 1], [], []>} : vector<16x8xf32>, vector<8x8xf32>, vector<16x8xf32> -> vector<16x8xf32>
    %cst_58 = arith.constant 2.500000e-01 : f32
    %139 = vector.broadcast %cst_58 : f32 to vector<16x8xf32>
    %140 = arith.mulf %139, %138 : vector<16x8xf32>
    %141 = arith.subf %137, %140 : vector<16x8xf32>
    %cst_59 = arith.constant 5.000000e-01 : f32
    %142 = vector.broadcast %cst_59 : f32 to vector<16x8xf32>
    %143 = arith.mulf %142, %16 : vector<16x8xf32>
    %144 = arith.addf %141, %143 : vector<16x8xf32>
    %cst_60 = arith.constant dense<0.000000e+00> : vector<8x8xf32>
    %145 = tpu.matmul %144, %144, %cst_60 {dimension_numbers = #tpu.dot_dimension_numbers<[0], [0], [1], [1], [0, 1, 1, 1], [], []>} : vector<16x8xf32>, vector<16x8xf32>, vector<8x8xf32> -> vector<8x8xf32>
    %cst_61 = arith.constant 4.000000e+00 : f32
    %146 = vector.broadcast %cst_61 : f32 to vector<8x8xf32>
    %147 = arith.mulf %146, %25 : vector<8x8xf32>
    %cst_62 = arith.constant 5.000000e-01 : f32
    %148 = vector.broadcast %cst_62 : f32 to vector<8x8xf32>
    %149 = arith.mulf %148, %145 : vector<8x8xf32>
    %150 = arith.addf %147, %149 : vector<8x8xf32>
    %151 = math.absf %150 : vector<8x8xf32>
    %cst_63 = arith.constant dense<0.000000e+00> : vector<8xf32>
    %152 = vector.multi_reduction <add>, %151, %cst_63 [1] : vector<8x8xf32> to vector<8xf32>
    %153 = vector.shape_cast %152 : vector<8xf32> to vector<8x1xf32>
    %cst_64 = arith.constant dense<0xFF800000> : vector<1xf32>
    %154 = vector.multi_reduction <maximumf>, %153, %cst_64 [0] : vector<8x1xf32> to vector<1xf32>
    %155 = vector.shape_cast %154 : vector<1xf32> to vector<1x1xf32>
    %cst_65 = arith.constant 4.000000e+00 : f32
    %156 = vector.broadcast %cst_65 : f32 to vector<1x1xf32>
    %157 = arith.addf %155, %156 : vector<1x1xf32>
    %158 = tpu.reciprocal %157 {approx = true} : vector<1x1xf32> -> vector<1x1xf32>
    %cst_66 = arith.constant 2.000000e+00 : f32
    %159 = vector.broadcast %cst_66 : f32 to vector<1x1xf32>
    %160 = arith.mulf %159, %158 : vector<1x1xf32>
    %161 = vector.broadcast %160 : vector<1x1xf32> to vector<8x8xf32>
    %162 = arith.mulf %161, %25 : vector<8x8xf32>
    %163 = arith.truncf %150 : vector<8x8xf32> to vector<8x8xbf16>
    %164 = arith.truncf %162 : vector<8x8xf32> to vector<8x8xbf16>
    %cst_67 = arith.constant dense<0.000000e+00> : vector<8x8xf32>
    %165 = tpu.matmul %163, %164, %cst_67 {dimension_numbers = #tpu.dot_dimension_numbers<[1], [0], [0], [1], [0, 0, 1, 1], [], []>} : vector<8x8xbf16>, vector<8x8xbf16>, vector<8x8xf32> -> vector<8x8xf32>
    %166 = arith.truncf %162 : vector<8x8xf32> to vector<8x8xbf16>
    %167 = arith.subf %27, %165 : vector<8x8xf32>
    %168 = arith.truncf %167 : vector<8x8xf32> to vector<8x8xbf16>
    %cst_68 = arith.constant dense<0.000000e+00> : vector<8x8xf32>
    %169 = tpu.matmul %166, %168, %cst_68 {dimension_numbers = #tpu.dot_dimension_numbers<[1], [0], [0], [1], [0, 0, 1, 1], [], []>} : vector<8x8xbf16>, vector<8x8xbf16>, vector<8x8xf32> -> vector<8x8xf32>
    %170 = arith.truncf %169 : vector<8x8xf32> to vector<8x8xbf16>
    %cst_69 = arith.constant dense<0.000000e+00> : vector<8x8xf32>
    %171 = tpu.matmul %163, %170, %cst_69 {dimension_numbers = #tpu.dot_dimension_numbers<[1], [0], [0], [1], [0, 0, 1, 1], [], []>} : vector<8x8xbf16>, vector<8x8xbf16>, vector<8x8xf32> -> vector<8x8xf32>
    %172 = arith.truncf %169 : vector<8x8xf32> to vector<8x8xbf16>
    %173 = arith.subf %27, %171 : vector<8x8xf32>
    %174 = arith.truncf %173 : vector<8x8xf32> to vector<8x8xbf16>
    %cst_70 = arith.constant dense<0.000000e+00> : vector<8x8xf32>
    %175 = tpu.matmul %172, %174, %cst_70 {dimension_numbers = #tpu.dot_dimension_numbers<[1], [0], [0], [1], [0, 0, 1, 1], [], []>} : vector<8x8xbf16>, vector<8x8xbf16>, vector<8x8xf32> -> vector<8x8xf32>
    %176 = arith.truncf %175 : vector<8x8xf32> to vector<8x8xbf16>
    %cst_71 = arith.constant dense<0.000000e+00> : vector<8x8xf32>
    %177 = tpu.matmul %163, %176, %cst_71 {dimension_numbers = #tpu.dot_dimension_numbers<[1], [0], [0], [1], [0, 0, 1, 1], [], []>} : vector<8x8xbf16>, vector<8x8xbf16>, vector<8x8xf32> -> vector<8x8xf32>
    %178 = arith.truncf %175 : vector<8x8xf32> to vector<8x8xbf16>
    %179 = arith.subf %27, %177 : vector<8x8xf32>
    %180 = arith.truncf %179 : vector<8x8xf32> to vector<8x8xbf16>
    %cst_72 = arith.constant dense<0.000000e+00> : vector<8x8xf32>
    %181 = tpu.matmul %178, %180, %cst_72 {dimension_numbers = #tpu.dot_dimension_numbers<[1], [0], [0], [1], [0, 0, 1, 1], [], []>} : vector<8x8xbf16>, vector<8x8xbf16>, vector<8x8xf32> -> vector<8x8xf32>
    %182 = arith.truncf %181 : vector<8x8xf32> to vector<8x8xbf16>
    %cst_73 = arith.constant dense<0.000000e+00> : vector<8x8xf32>
    %183 = tpu.matmul %163, %182, %cst_73 {dimension_numbers = #tpu.dot_dimension_numbers<[1], [0], [0], [1], [0, 0, 1, 1], [], []>} : vector<8x8xbf16>, vector<8x8xbf16>, vector<8x8xf32> -> vector<8x8xf32>
    %184 = arith.truncf %181 : vector<8x8xf32> to vector<8x8xbf16>
    %185 = arith.subf %27, %183 : vector<8x8xf32>
    %186 = arith.truncf %185 : vector<8x8xf32> to vector<8x8xbf16>
    %cst_74 = arith.constant dense<0.000000e+00> : vector<8x8xf32>
    %187 = tpu.matmul %184, %186, %cst_74 {dimension_numbers = #tpu.dot_dimension_numbers<[1], [0], [0], [1], [0, 0, 1, 1], [], []>} : vector<8x8xbf16>, vector<8x8xbf16>, vector<8x8xf32> -> vector<8x8xf32>
    %188 = arith.truncf %187 : vector<8x8xf32> to vector<8x8xbf16>
    %cst_75 = arith.constant dense<0.000000e+00> : vector<8x8xf32>
    %189 = tpu.matmul %163, %188, %cst_75 {dimension_numbers = #tpu.dot_dimension_numbers<[1], [0], [0], [1], [0, 0, 1, 1], [], []>} : vector<8x8xbf16>, vector<8x8xbf16>, vector<8x8xf32> -> vector<8x8xf32>
    %190 = arith.truncf %187 : vector<8x8xf32> to vector<8x8xbf16>
    %191 = arith.subf %27, %189 : vector<8x8xf32>
    %192 = arith.truncf %191 : vector<8x8xf32> to vector<8x8xbf16>
    %cst_76 = arith.constant dense<0.000000e+00> : vector<8x8xf32>
    %193 = tpu.matmul %190, %192, %cst_76 {dimension_numbers = #tpu.dot_dimension_numbers<[1], [0], [0], [1], [0, 0, 1, 1], [], []>} : vector<8x8xbf16>, vector<8x8xbf16>, vector<8x8xf32> -> vector<8x8xf32>
    %194 = arith.truncf %193 : vector<8x8xf32> to vector<8x8xbf16>
    %cst_77 = arith.constant dense<0.000000e+00> : vector<8x8xf32>
    %195 = tpu.matmul %163, %194, %cst_77 {dimension_numbers = #tpu.dot_dimension_numbers<[1], [0], [0], [1], [0, 0, 1, 1], [], []>} : vector<8x8xbf16>, vector<8x8xbf16>, vector<8x8xf32> -> vector<8x8xf32>
    %196 = arith.truncf %193 : vector<8x8xf32> to vector<8x8xbf16>
    %197 = arith.subf %27, %195 : vector<8x8xf32>
    %198 = arith.truncf %197 : vector<8x8xf32> to vector<8x8xbf16>
    %cst_78 = arith.constant dense<0.000000e+00> : vector<8x8xf32>
    %199 = tpu.matmul %196, %198, %cst_78 {dimension_numbers = #tpu.dot_dimension_numbers<[1], [0], [0], [1], [0, 0, 1, 1], [], []>} : vector<8x8xbf16>, vector<8x8xbf16>, vector<8x8xf32> -> vector<8x8xf32>
    %200 = arith.truncf %199 : vector<8x8xf32> to vector<8x8xbf16>
    %cst_79 = arith.constant dense<0.000000e+00> : vector<8x8xf32>
    %201 = tpu.matmul %163, %200, %cst_79 {dimension_numbers = #tpu.dot_dimension_numbers<[1], [0], [0], [1], [0, 0, 1, 1], [], []>} : vector<8x8xbf16>, vector<8x8xbf16>, vector<8x8xf32> -> vector<8x8xf32>
    %202 = arith.truncf %199 : vector<8x8xf32> to vector<8x8xbf16>
    %203 = arith.subf %27, %201 : vector<8x8xf32>
    %204 = arith.truncf %203 : vector<8x8xf32> to vector<8x8xbf16>
    %cst_80 = arith.constant dense<0.000000e+00> : vector<8x8xf32>
    %205 = tpu.matmul %202, %204, %cst_80 {dimension_numbers = #tpu.dot_dimension_numbers<[1], [0], [0], [1], [0, 0, 1, 1], [], []>} : vector<8x8xbf16>, vector<8x8xbf16>, vector<8x8xf32> -> vector<8x8xf32>
    %206 = arith.truncf %205 : vector<8x8xf32> to vector<8x8xbf16>
    %cst_81 = arith.constant dense<0.000000e+00> : vector<8x8xf32>
    %207 = tpu.matmul %163, %206, %cst_81 {dimension_numbers = #tpu.dot_dimension_numbers<[1], [0], [0], [1], [0, 0, 1, 1], [], []>} : vector<8x8xbf16>, vector<8x8xbf16>, vector<8x8xf32> -> vector<8x8xf32>
    %208 = arith.truncf %205 : vector<8x8xf32> to vector<8x8xbf16>
    %209 = arith.subf %27, %207 : vector<8x8xf32>
    %210 = arith.truncf %209 : vector<8x8xf32> to vector<8x8xbf16>
    %cst_82 = arith.constant dense<0.000000e+00> : vector<8x8xf32>
    %211 = tpu.matmul %208, %210, %cst_82 {dimension_numbers = #tpu.dot_dimension_numbers<[1], [0], [0], [1], [0, 0, 1, 1], [], []>} : vector<8x8xbf16>, vector<8x8xbf16>, vector<8x8xf32> -> vector<8x8xf32>
    %212 = arith.truncf %211 : vector<8x8xf32> to vector<8x8xbf16>
    %cst_83 = arith.constant dense<0.000000e+00> : vector<8x8xf32>
    %213 = tpu.matmul %163, %212, %cst_83 {dimension_numbers = #tpu.dot_dimension_numbers<[1], [0], [0], [1], [0, 0, 1, 1], [], []>} : vector<8x8xbf16>, vector<8x8xbf16>, vector<8x8xf32> -> vector<8x8xf32>
    %214 = arith.truncf %211 : vector<8x8xf32> to vector<8x8xbf16>
    %215 = arith.subf %27, %213 : vector<8x8xf32>
    %216 = arith.truncf %215 : vector<8x8xf32> to vector<8x8xbf16>
    %cst_84 = arith.constant dense<0.000000e+00> : vector<8x8xf32>
    %217 = tpu.matmul %214, %216, %cst_84 {dimension_numbers = #tpu.dot_dimension_numbers<[1], [0], [0], [1], [0, 0, 1, 1], [], []>} : vector<8x8xbf16>, vector<8x8xbf16>, vector<8x8xf32> -> vector<8x8xf32>
    %218 = arith.truncf %217 : vector<8x8xf32> to vector<8x8xbf16>
    %cst_85 = arith.constant dense<0.000000e+00> : vector<8x8xf32>
    %219 = tpu.matmul %163, %218, %cst_85 {dimension_numbers = #tpu.dot_dimension_numbers<[1], [0], [0], [1], [0, 0, 1, 1], [], []>} : vector<8x8xbf16>, vector<8x8xbf16>, vector<8x8xf32> -> vector<8x8xf32>
    %220 = arith.truncf %217 : vector<8x8xf32> to vector<8x8xbf16>
    %221 = arith.subf %27, %219 : vector<8x8xf32>
    %222 = arith.truncf %221 : vector<8x8xf32> to vector<8x8xbf16>
    %cst_86 = arith.constant dense<0.000000e+00> : vector<8x8xf32>
    %223 = tpu.matmul %220, %222, %cst_86 {dimension_numbers = #tpu.dot_dimension_numbers<[1], [0], [0], [1], [0, 0, 1, 1], [], []>} : vector<8x8xbf16>, vector<8x8xbf16>, vector<8x8xf32> -> vector<8x8xf32>
    %cst_87 = arith.constant dense<0.000000e+00> : vector<8x8xf32>
    %224 = tpu.matmul %150, %223, %cst_87 {dimension_numbers = #tpu.dot_dimension_numbers<[1], [0], [0], [1], [0, 0, 1, 1], [], []>} : vector<8x8xf32>, vector<8x8xf32>, vector<8x8xf32> -> vector<8x8xf32>
    %225 = arith.subf %27, %224 : vector<8x8xf32>
    %cst_88 = arith.constant dense<0.000000e+00> : vector<8x8xf32>
    %226 = tpu.matmul %223, %225, %cst_88 {dimension_numbers = #tpu.dot_dimension_numbers<[1], [0], [0], [1], [0, 0, 1, 1], [], []>} : vector<8x8xf32>, vector<8x8xf32>, vector<8x8xf32> -> vector<8x8xf32>
    %cst_89 = arith.constant dense<0.000000e+00> : vector<8x8xf32>
    %227 = tpu.matmul %150, %226, %cst_89 {dimension_numbers = #tpu.dot_dimension_numbers<[1], [0], [0], [1], [0, 0, 1, 1], [], []>} : vector<8x8xf32>, vector<8x8xf32>, vector<8x8xf32> -> vector<8x8xf32>
    %228 = arith.subf %27, %227 : vector<8x8xf32>
    %cst_90 = arith.constant dense<0.000000e+00> : vector<8x8xf32>
    %229 = tpu.matmul %226, %228, %cst_90 {dimension_numbers = #tpu.dot_dimension_numbers<[1], [0], [0], [1], [0, 0, 1, 1], [], []>} : vector<8x8xf32>, vector<8x8xf32>, vector<8x8xf32> -> vector<8x8xf32>
    %cst_91 = arith.constant dense<0.000000e+00> : vector<8x8xf32>
    %230 = tpu.matmul %229, %145, %cst_91 {dimension_numbers = #tpu.dot_dimension_numbers<[1], [0], [0], [1], [0, 0, 1, 1], [], []>} : vector<8x8xf32>, vector<8x8xf32>, vector<8x8xf32> -> vector<8x8xf32>
    %cst_92 = arith.constant 2.500000e-01 : f32
    %231 = vector.broadcast %cst_92 : f32 to vector<8x8xf32>
    %232 = arith.mulf %231, %145 : vector<8x8xf32>
    %cst_93 = arith.constant dense<0.000000e+00> : vector<8x8xf32>
    %233 = tpu.matmul %145, %230, %cst_93 {dimension_numbers = #tpu.dot_dimension_numbers<[1], [0], [0], [1], [0, 0, 1, 1], [], []>} : vector<8x8xf32>, vector<8x8xf32>, vector<8x8xf32> -> vector<8x8xf32>
    %cst_94 = arith.constant 1.250000e-01 : f32
    %234 = vector.broadcast %cst_94 : f32 to vector<8x8xf32>
    %235 = arith.mulf %234, %233 : vector<8x8xf32>
    %236 = arith.subf %232, %235 : vector<8x8xf32>
    %cst_95 = arith.constant 2.500000e-01 : f32
    %237 = vector.broadcast %cst_95 : f32 to vector<16x8xf32>
    %238 = arith.mulf %237, %144 : vector<16x8xf32>
    %cst_96 = arith.constant dense<0.000000e+00> : vector<16x8xf32>
    %239 = tpu.matmul %144, %230, %cst_96 {dimension_numbers = #tpu.dot_dimension_numbers<[1], [0], [0], [1], [0, 0, 1, 1], [], []>} : vector<16x8xf32>, vector<8x8xf32>, vector<16x8xf32> -> vector<16x8xf32>
    %cst_97 = arith.constant 1.250000e-01 : f32
    %240 = vector.broadcast %cst_97 : f32 to vector<16x8xf32>
    %241 = arith.mulf %240, %239 : vector<16x8xf32>
    %242 = arith.subf %238, %241 : vector<16x8xf32>
    %cst_98 = arith.constant dense<0.000000e+00> : vector<16x8xf32>
    %243 = tpu.matmul %1, %242, %cst_98 {dimension_numbers = #tpu.dot_dimension_numbers<[1], [0], [0], [1], [0, 0, 1, 1], [], []>} : vector<16x16xf32>, vector<16x8xf32>, vector<16x8xf32> -> vector<16x8xf32>
    %244 = arith.addf %242, %243 : vector<16x8xf32>
    %cst_99 = arith.constant dense<0.000000e+00> : vector<16x8xf32>
    %245 = tpu.matmul %17, %242, %cst_99 {dimension_numbers = #tpu.dot_dimension_numbers<[1], [0], [0], [1], [0, 0, 1, 1], [], []>} : vector<16x16xf32>, vector<16x8xf32>, vector<16x8xf32> -> vector<16x8xf32>
    %246 = arith.addf %244, %245 : vector<16x8xf32>
    %cst_100 = arith.constant dense<0.000000e+00> : vector<16x8xf32>
    %247 = tpu.matmul %18, %242, %cst_100 {dimension_numbers = #tpu.dot_dimension_numbers<[1], [0], [0], [1], [0, 0, 1, 1], [], []>} : vector<16x16xf32>, vector<16x8xf32>, vector<16x8xf32> -> vector<16x8xf32>
    %248 = arith.addf %246, %247 : vector<16x8xf32>
    %cst_101 = arith.constant dense<0.000000e+00> : vector<16x8xf32>
    %249 = tpu.matmul %144, %236, %cst_101 {dimension_numbers = #tpu.dot_dimension_numbers<[1], [0], [0], [1], [0, 0, 1, 1], [], []>} : vector<16x8xf32>, vector<8x8xf32>, vector<16x8xf32> -> vector<16x8xf32>
    %cst_102 = arith.constant 5.000000e-01 : f32
    %250 = vector.broadcast %cst_102 : f32 to vector<16x8xf32>
    %251 = arith.mulf %250, %249 : vector<16x8xf32>
    %cst_103 = arith.constant 1.000000e+00 : f32
    %252 = vector.broadcast %cst_103 : f32 to vector<16x8xf32>
    %253 = arith.mulf %252, %248 : vector<16x8xf32>
    %254 = arith.addf %251, %253 : vector<16x8xf32>
    %cst_104 = arith.constant dense<0.000000e+00> : vector<16x8xf32>
    %255 = tpu.matmul %16, %236, %cst_104 {dimension_numbers = #tpu.dot_dimension_numbers<[1], [0], [0], [1], [0, 0, 1, 1], [], []>} : vector<16x8xf32>, vector<8x8xf32>, vector<16x8xf32> -> vector<16x8xf32>
    %cst_105 = arith.constant 2.500000e-01 : f32
    %256 = vector.broadcast %cst_105 : f32 to vector<16x8xf32>
    %257 = arith.mulf %256, %255 : vector<16x8xf32>
    %258 = arith.subf %254, %257 : vector<16x8xf32>
    %cst_106 = arith.constant 5.000000e-01 : f32
    %259 = vector.broadcast %cst_106 : f32 to vector<16x8xf32>
    %260 = arith.mulf %259, %16 : vector<16x8xf32>
    %261 = arith.addf %258, %260 : vector<16x8xf32>
    %cst_107 = arith.constant dense<0xFF800000> : vector<16xf32>
    %262 = vector.multi_reduction <maximumf>, %261, %cst_107 [1] : vector<16x8xf32> to vector<16xf32>
    %263 = vector.shape_cast %262 : vector<16xf32> to vector<16x1xf32>
    %264 = vector.broadcast %263 : vector<16x1xf32> to vector<16x8xf32>
    %265 = arith.subf %261, %264 : vector<16x8xf32>
    %266 = math.exp %265 : vector<16x8xf32>
    %cst_108 = arith.constant dense<0.000000e+00> : vector<16xf32>
    %267 = vector.multi_reduction <add>, %266, %cst_108 [1] : vector<16x8xf32> to vector<16xf32>
    %268 = vector.shape_cast %267 : vector<16xf32> to vector<16x1xf32>
    %269 = math.log %268 : vector<16x1xf32>
    %270 = vector.broadcast %269 : vector<16x1xf32> to vector<16x8xf32>
    %271 = arith.subf %265, %270 : vector<16x8xf32>
    %c0_109 = arith.constant 0 : index
    %c0_110 = arith.constant 0 : index
    %272 = vector.load %arg1[%c0_109, %c0_110] : memref<16x8xf32, #tpu.memory_space<vmem>>, vector<16x8xf32>
    tpu.vector_store %arg1[%c0_109, %c0_110], %271 {strides = array<i32>} : memref<16x8xf32, #tpu.memory_space<vmem>>, vector<16x8xf32>,
    return
  }
}

</mosaic_0001>

<llo_original>
// kernel: mlp_norm_forward.1
$region0: #{mlp_norm_forward.1}
  #allocation0 [shape = 'u32[]', space=smem, size = 0x4, offset = 0x4, fixed_abs, tag = 'smem constant byte address 0x4 - core index']
  #allocation1 [shape = 'u32[144,128]{1,0:T(1,128)}', space=vmem, size = 0x12000, scoped, tag = 'internal scratch']
  %s0 = inlined_call_operand.vmem [shape: f32[128,128], index: 0, kind: input, shape index: {}]
  %s1 = inlined_call_operand.vmem [shape: f32[16,8], index: 1, kind: output, shape index: {}]
  %s2 = sld [smem:[#allocation0]]
  $region14: #{mlp_norm_forward.1} parent=0
    _
  %s4 = ssub.s32 1, %s2
  %s5 = scalar_select 0, %s4, %s2
  // Predicated region
  $region2: #{mlp_norm_forward.1} parent=0 // pred_check
    _
  $region3: #{mlp_norm_forward.1} parent=0 // pred_check_branch
    %7 = sbr.rel (0) target = $region5
  $region4: #{mlp_norm_forward.1} parent=0 // pred_region
    _
  $region5: #{mlp_norm_forward.1} parent=0 // pred_fallthru
    _
  %v9 = vld [vmem:[%s0] sm:$0xff]
  %v10 = vld [vmem:[%s0 + $0x8] sm:$0xff]
  %v11 = vld [vmem:[%s0 + $0x10] sm:$0xff]
  %v12 = vld [vmem:[%s0 + $0x18] sm:$0xff]
  %v13 = vld [vmem:[%s0 + $0x20] sm:$0xff]
  %v14 = vld [vmem:[%s0 + $0x28] sm:$0xff]
  %v15 = vld [vmem:[%s0 + $0x30] sm:$0xff]
  %v16 = vld [vmem:[%s0 + $0x38] sm:$0xff]
  %v17 = vld [vmem:[%s0 + $0x40] sm:$0xff]
  %v18 = vld [vmem:[%s0 + $0x48] sm:$0xff]
  %v19 = vld [vmem:[%s0 + $0x50] sm:$0x1]
  %v20 = vld [vmem:[%s0 + $0x58] sm:$0xff]
  %v21 = vld [vmem:[%s0 + $0x60] sm:$0xff]
  %v22 = vld [vmem:[%s0 + $0x68] sm:$0xff]
  %v23 = vld [vmem:[%s0 + $0x70] sm:$0xff]
  %v24 = vld [vmem:[%s0 + $0x78] sm:$0x1]
  %vm25 = vcmask 130048
  %v27 = vsel %vm25, %v11, 0
  %v30 = vsel %vm25, %v12, 0
  %32 = vmatprep.subr.mxu0 0.0
  %33 = vmatpush1.msra.mxu0 %v17
  %34 = vmatprep.subr.mxu0 0.0
  %35 = vmatpush1.msra.mxu0 %v18
  %36 = vmatprep.subr.mxu0 0.0
  %37 = vmatpush1.msra.mxu0 0.0
  %38 = vmatprep.subr.mxu0 0.0
  %39 = vmatpush1.msra.mxu0 0.0
  %40 = vmatprep.subr.mxu0 0.0
  %41 = vmatpush1.msra.mxu0 0.0
  %42 = vmatprep.subr.mxu0 0.0
  %43 = vmatpush1.msra.mxu0 0.0
  %44 = vmatprep.subr.mxu0 0.0
  %45 = vmatpush1.msra.mxu0 0.0
  %46 = vmatprep.subr.mxu0 0.0
  %47 = vmatpush1.msra.mxu0 0.0
  %48 = vmatprep.subr.mxu0 0.0
  %49 = vmatpush1.msra.mxu0 0.0
  %50 = vmatprep.subr.mxu0 0.0
  %51 = vmatpush1.msra.mxu0 0.0
  %52 = vmatprep.subr.mxu0 0.0
  %53 = vmatpush1.msra.mxu0 0.0
  %54 = vmatprep.subr.mxu0 0.0
  %55 = vmatpush1.msra.mxu0 0.0
  %56 = vmatprep.subr.mxu0 0.0
  %57 = vmatpush1.msra.mxu0 0.0
  %58 = vmatprep.subr.mxu0 0.0
  %59 = vmatpush1.msra.mxu0 0.0
  %60 = vmatprep.subr.mxu0 0.0
  %61 = vmatpush1.msra.mxu0 0.0
  %62 = vmatprep.subr.mxu0 0.0
  %63 = vmatpush1.msra.mxu0 0.0
  %64 = vmatprep.subr.mxu0 0.0
  %65 = vmatpush1.msra.mxu0 0.0
  %66 = vmatprep.subr.mxu0 0.0
  %67 = vmatpush1.msra.mxu0 0.0
  %68 = vmatprep.subr.mxu0 0.0
  %69 = vmatpush1.msra.mxu0 0.0
  %70 = vmatprep.subr.mxu0 0.0
  %71 = vmatpush1.msra.mxu0 0.0
  %72 = vmatprep.subr.mxu0 0.0
  %73 = vmatpush1.msra.mxu0 0.0
  %74 = vmatprep.subr.mxu0 0.0
  %75 = vmatpush1.msra.mxu0 0.0
  %76 = vmatprep.subr.mxu0 0.0
  %77 = vmatpush1.msra.mxu0 0.0
  %78 = vmatprep.subr.mxu0 0.0
  %79 = vmatpush1.msra.mxu0 0.0
  %80 = vmatprep.subr.mxu0 0.0
  %81 = vmatpush1.msra.mxu0 0.0
  %82 = vmatprep.subr.mxu0 0.0
  %83 = vmatpush1.msra.mxu0 0.0
  %84 = vmatprep.subr.mxu0 0.0
  %85 = vmatpush1.msra.mxu0 0.0
  %86 = vmatprep.subr.mxu0 0.0
  %87 = vmatpush1.msra.mxu0 0.0
  %88 = vmatprep.subr.mxu0 0.0
  %89 = vmatpush1.msra.mxu0 0.0
  %90 = vmatprep.subr.mxu0 0.0
  %91 = vmatpush1.msra.mxu0 0.0
  %92 = vmatprep.subr.mxu0 0.0
  %93 = vmatpush1.msra.mxu0 0.0
  %94 = vmatprep.subr.mxu0 0.0
  %95 = vmatpush1.msra.mxu0 0.0
  %96 = vmatprep.mubr.f32.mxu0 0.0
  %97 = vmatmul.mubr.f32.gmra.mrb[0].mxu0 %v27
  %v98 = vpop.f32.mrb[0].mxu0
  %v99 = vadd.f32 0.0, %v98
  %v100 = vpop.f32.mrb[0].mxu0
  %101 = vmatprep.mubr.f32.mxu0 0.0
  %102 = vmatmul.mubr.f32.gmra.mrb[0].mxu0 %v30
  %v103 = vpop.f32.mrb[0].mxu0
  %v104 = vadd.f32 0.0, %v103
  %v105 = vpop.f32.mrb[0].mxu0
  %106 = vdwg.mxu0
  %vm107 = vcmask 261120
  %v109 = vsel %vm107, %v9, 0
  %v112 = vsel %vm107, %v10, 0
  %114 = vmatprep.subr.mxu0 0.0
  %115 = vmatpush1.msra.mxu0 %v13
  %116 = vmatprep.subr.mxu0 0.0
  %117 = vmatpush1.msra.mxu0 %v14
  %118 = vmatprep.subr.mxu0 0.0
  %119 = vmatpush1.msra.mxu0 %v15
  %120 = vmatprep.subr.mxu0 0.0
  %121 = vmatpush1.msra.mxu0 %v16
  %122 = vmatprep.subr.mxu0 0.0
  %123 = vmatpush1.msra.mxu0 0.0
  %124 = vmatprep.subr.mxu0 0.0
  %125 = vmatpush1.msra.mxu0 0.0
  %126 = vmatprep.subr.mxu0 0.0
  %127 = vmatpush1.msra.mxu0 0.0
  %128 = vmatprep.subr.mxu0 0.0
  %129 = vmatpush1.msra.mxu0 0.0
  %130 = vmatprep.subr.mxu0 0.0
  %131 = vmatpush1.msra.mxu0 0.0
  %132 = vmatprep.subr.mxu0 0.0
  %133 = vmatpush1.msra.mxu0 0.0
  %134 = vmatprep.subr.mxu0 0.0
  %135 = vmatpush1.msra.mxu0 0.0
  %136 = vmatprep.subr.mxu0 0.0
  %137 = vmatpush1.msra.mxu0 0.0
  %138 = vmatprep.subr.mxu0 0.0
  %139 = vmatpush1.msra.mxu0 0.0
  %140 = vmatprep.subr.mxu0 0.0
  %141 = vmatpush1.msra.mxu0 0.0
  %142 = vmatprep.subr.mxu0 0.0
  %143 = vmatpush1.msra.mxu0 0.0
  %144 = vmatprep.subr.mxu0 0.0
  %145 = vmatpush1.msra.mxu0 0.0
  %146 = vmatprep.subr.mxu0 0.0
  %147 = vmatpush1.msra.mxu0 0.0
  %148 = vmatprep.subr.mxu0 0.0
  %149 = vmatpush1.msra.mxu0 0.0
  %150 = vmatprep.subr.mxu0 0.0
  %151 = vmatpush1.msra.mxu0 0.0
  %152 = vmatprep.subr.mxu0 0.0
  %153 = vmatpush1.msra.mxu0 0.0
  %154 = vmatprep.subr.mxu0 0.0
  %155 = vmatpush1.msra.mxu0 0.0
  %156 = vmatprep.subr.mxu0 0.0
  %157 = vmatpush1.msra.mxu0 0.0
  %158 = vmatprep.subr.mxu0 0.0
  %159 = vmatpush1.msra.mxu0 0.0
  %160 = vmatprep.subr.mxu0 0.0
  %161 = vmatpush1.msra.mxu0 0.0
  %162 = vmatprep.subr.mxu0 0.0
  %163 = vmatpush1.msra.mxu0 0.0
  %164 = vmatprep.subr.mxu0 0.0
  %165 = vmatpush1.msra.mxu0 0.0
  %166 = vmatprep.subr.mxu0 0.0
  %167 = vmatpush1.msra.mxu0 0.0
  %168 = vmatprep.subr.mxu0 0.0
  %169 = vmatpush1.msra.mxu0 0.0
  %170 = vmatprep.subr.mxu0 0.0
  %171 = vmatpush1.msra.mxu0 0.0
  %172 = vmatprep.subr.mxu0 0.0
  %173 = vmatpush1.msra.mxu0 0.0
  %174 = vmatprep.subr.mxu0 0.0
  %175 = vmatpush1.msra.mxu0 0.0
  %176 = vmatprep.subr.mxu0 0.0
  %177 = vmatpush1.msra.mxu0 0.0
  %178 = vmatprep.mubr.f32.mxu0 0.0
  %179 = vmatmul.mubr.f32.gmra.mrb[0].mxu0 %v109
  %v180 = vpop.f32.mrb[0].mxu0
  %v181 = vadd.f32 %v99, %v180
  %v182 = vpop.f32.mrb[0].mxu0
  %183 = vmatprep.mubr.f32.mxu0 0.0
  %184 = vmatmul.mubr.f32.gmra.mrb[0].mxu0 %v112
  %v185 = vpop.f32.mrb[0].mxu0
  %v186 = vadd.f32 %v104, %v185
  %v187 = vpop.f32.mrb[0].mxu0
  %188 = vdwg.mxu0
  %v189 = vlaneseq
  %v190 = vshrl.u32 %v189, 7
  %v191 = vsub.s32 0, %v190
  %v192 = vrot.slane %v19, %v191
  %v193 = vadd.f32 %v181, %v192
  %v194 = vadd.f32 %v186, %v192
  %v195 = vmax.f32 %v193, 0.0
  %v196 = vmax.f32 %v194, 0.0
  %v197 = vlaneseq
  %v198 = vshrl.u32 %v197, 7
  %v199 = vsub.s32 0, %v198
  %v200 = vrot.slane %v24, %v199
  %v202 = vsel %vm107, %v195, 0
  %v205 = vsel %vm107, %v196, 0
  %207 = vmatprep.subr.mxu0 0.0
  %208 = vmatpush1.msra.mxu0 %v20
  %209 = vmatprep.subr.mxu0 0.0
  %210 = vmatpush1.msra.mxu0 %v21
  %211 = vmatprep.subr.mxu0 0.0
  %212 = vmatpush1.msra.mxu0 %v22
  %213 = vmatprep.subr.mxu0 0.0
  %214 = vmatpush1.msra.mxu0 %v23
  %215 = vmatprep.subr.mxu0 0.0
  %216 = vmatpush1.msra.mxu0 0.0
  %217 = vmatprep.subr.mxu0 0.0
  %218 = vmatpush1.msra.mxu0 0.0
  %219 = vmatprep.subr.mxu0 0.0
  %220 = vmatpush1.msra.mxu0 0.0
  %221 = vmatprep.subr.mxu0 0.0
  %222 = vmatpush1.msra.mxu0 0.0
  %223 = vmatprep.subr.mxu0 0.0
  %224 = vmatpush1.msra.mxu0 0.0
  %225 = vmatprep.subr.mxu0 0.0
  %226 = vmatpush1.msra.mxu0 0.0
  %227 = vmatprep.subr.mxu0 0.0
  %228 = vmatpush1.msra.mxu0 0.0
  %229 = vmatprep.subr.mxu0 0.0
  %230 = vmatpush1.msra.mxu0 0.0
  %231 = vmatprep.subr.mxu0 0.0
  %232 = vmatpush1.msra.mxu0 0.0
  %233 = vmatprep.subr.mxu0 0.0
  %234 = vmatpush1.msra.mxu0 0.0
  %235 = vmatprep.subr.mxu0 0.0
  %236 = vmatpush1.msra.mxu0 0.0
  %237 = vmatprep.subr.mxu0 0.0
  %238 = vmatpush1.msra.mxu0 0.0
  %239 = vmatprep.subr.mxu0 0.0
  %240 = vmatpush1.msra.mxu0 0.0
  %241 = vmatprep.subr.mxu0 0.0
  %242 = vmatpush1.msra.mxu0 0.0
  %243 = vmatprep.subr.mxu0 0.0
  %244 = vmatpush1.msra.mxu0 0.0
  %245 = vmatprep.subr.mxu0 0.0
  %246 = vmatpush1.msra.mxu0 0.0
  %247 = vmatprep.subr.mxu0 0.0
  %248 = vmatpush1.msra.mxu0 0.0
  %249 = vmatprep.subr.mxu0 0.0
  %250 = vmatpush1.msra.mxu0 0.0
  %251 = vmatprep.subr.mxu0 0.0
  %252 = vmatpush1.msra.mxu0 0.0
  %253 = vmatprep.subr.mxu0 0.0
  %254 = vmatpush1.msra.mxu0 0.0
  %255 = vmatprep.subr.mxu0 0.0
  %256 = vmatpush1.msra.mxu0 0.0
  %257 = vmatprep.subr.mxu0 0.0
  %258 = vmatpush1.msra.mxu0 0.0
  %259 = vmatprep.subr.mxu0 0.0
  %260 = vmatpush1.msra.mxu0 0.0
  %261 = vmatprep.subr.mxu0 0.0
  %262 = vmatpush1.msra.mxu0 0.0
  %263 = vmatprep.subr.mxu0 0.0
  %264 = vmatpush1.msra.mxu0 0.0
  %265 = vmatprep.subr.mxu0 0.0
  %266 = vmatpush1.msra.mxu0 0.0
  %267 = vmatprep.subr.mxu0 0.0
  %268 = vmatpush1.msra.mxu0 0.0
  %269 = vmatprep.subr.mxu0 0.0
  %270 = vmatpush1.msra.mxu0 0.0
  %271 = vmatprep.mubr.f32.mxu0 0.0
  %272 = vmatmul.mubr.f32.gmra.mrb[0].mxu0 %v202
  %v273 = vpop.f32.mrb[0].mxu0
  %v274 = vadd.f32 %v200, %v273
  %v275 = vpop.f32.mrb[0].mxu0
  %276 = vmatprep.mubr.f32.mxu0 0.0
  %277 = vmatmul.mubr.f32.gmra.mrb[0].mxu0 %v205
  %v278 = vpop.f32.mrb[0].mxu0
  %v279 = vadd.f32 %v200, %v278
  %v280 = vpop.f32.mrb[0].mxu0
  %281 = vdwg.mxu0
  %282 = vmatprep.subr.mxu0 0.0
  %283 = vmatpush1.msra.mxu0 %v11
  %284 = vmatprep.subr.mxu0 0.0
  %285 = vmatpush1.msra.mxu0 %v12
  %286 = vmatprep.subr.mxu0 0.0
  %287 = vmatpush1.msra.mxu0 0.0
  %288 = vmatprep.subr.mxu0 0.0
  %289 = vmatpush1.msra.mxu0 0.0
  %290 = vmatprep.subr.mxu0 0.0
  %291 = vmatpush1.msra.mxu0 0.0
  %292 = vmatprep.subr.mxu0 0.0
  %293 = vmatpush1.msra.mxu0 0.0
  %294 = vmatprep.subr.mxu0 0.0
  %295 = vmatpush1.msra.mxu0 0.0
  %296 = vmatprep.subr.mxu0 0.0
  %297 = vmatpush1.msra.mxu0 0.0
  %298 = vmatprep.subr.mxu0 0.0
  %299 = vmatpush1.msra.mxu0 0.0
  %300 = vmatprep.subr.mxu0 0.0
  %301 = vmatpush1.msra.mxu0 0.0
  %302 = vmatprep.subr.mxu0 0.0
  %303 = vmatpush1.msra.mxu0 0.0
  %304 = vmatprep.subr.mxu0 0.0
  %305 = vmatpush1.msra.mxu0 0.0
  %306 = vmatprep.subr.mxu0 0.0
  %307 = vmatpush1.msra.mxu0 0.0
  %308 = vmatprep.subr.mxu0 0.0
  %309 = vmatpush1.msra.mxu0 0.0
  %310 = vmatprep.subr.mxu0 0.0
  %311 = vmatpush1.msra.mxu0 0.0
  %312 = vmatprep.subr.mxu0 0.0
  %313 = vmatpush1.msra.mxu0 0.0
  %314 = vmatprep.subr.mxu0 0.0
  %315 = vmatpush1.msra.mxu0 0.0
  %316 = vmatprep.subr.mxu0 0.0
  %317 = vmatpush1.msra.mxu0 0.0
  %318 = vmatprep.subr.mxu0 0.0
  %319 = vmatpush1.msra.mxu0 0.0
  %320 = vmatprep.subr.mxu0 0.0
  %321 = vmatpush1.msra.mxu0 0.0
  %322 = vmatprep.subr.mxu0 0.0
  %323 = vmatpush1.msra.mxu0 0.0
  %324 = vmatprep.subr.mxu0 0.0
  %325 = vmatpush1.msra.mxu0 0.0
  %326 = vmatprep.subr.mxu0 0.0
  %327 = vmatpush1.msra.mxu0 0.0
  %328 = vmatprep.subr.mxu0 0.0
  %329 = vmatpush1.msra.mxu0 0.0
  %330 = vmatprep.subr.mxu0 0.0
  %331 = vmatpush1.msra.mxu0 0.0
  %332 = vmatprep.subr.mxu0 0.0
  %333 = vmatpush1.msra.mxu0 0.0
  %334 = vmatprep.subr.mxu0 0.0
  %335 = vmatpush1.msra.mxu0 0.0
  %336 = vmatprep.subr.mxu0 0.0
  %337 = vmatpush1.msra.mxu0 0.0
  %338 = vmatprep.subr.mxu0 0.0
  %339 = vmatpush1.msra.mxu0 0.0
  %340 = vmatprep.subr.mxu0 0.0
  %341 = vmatpush1.msra.mxu0 0.0
  %342 = vmatprep.subr.mxu0 0.0
  %343 = vmatpush1.msra.mxu0 0.0
  %344 = vmatprep.subr.mxu0 0.0
  %345 = vmatpush1.msra.mxu0 0.0
  %346 = vmatprep.mubr.f32.mxu0 0.0
  %347 = vmatmul.mubr.f32.gmra.mrb[0].mxu0 %v27
  %v348 = vpop.f32.mrb[0].mxu0
  %v349 = vadd.f32 0.0, %v348
  %v350 = vpop.f32.mrb[0].mxu0
  %351 = vmatprep.mubr.f32.mxu0 0.0
  %352 = vmatmul.mubr.f32.gmra.mrb[0].mxu0 %v30
  %v353 = vpop.f32.mrb[0].mxu0
  %v354 = vadd.f32 0.0, %v353
  %v355 = vpop.f32.mrb[0].mxu0
  %356 = vdwg.mxu0
  %357 = vmatprep.subr.mxu0 0.0
  %358 = vmatpush1.msra.mxu0 %v349
  %359 = vmatprep.subr.mxu0 0.0
  %360 = vmatpush1.msra.mxu0 %v354
  %361 = vmatprep.subr.mxu0 0.0
  %362 = vmatpush1.msra.mxu0 0.0
  %363 = vmatprep.subr.mxu0 0.0
  %364 = vmatpush1.msra.mxu0 0.0
  %365 = vmatprep.subr.mxu0 0.0
  %366 = vmatpush1.msra.mxu0 0.0
  %367 = vmatprep.subr.mxu0 0.0
  %368 = vmatpush1.msra.mxu0 0.0
  %369 = vmatprep.subr.mxu0 0.0
  %370 = vmatpush1.msra.mxu0 0.0
  %371 = vmatprep.subr.mxu0 0.0
  %372 = vmatpush1.msra.mxu0 0.0
  %373 = vmatprep.subr.mxu0 0.0
  %374 = vmatpush1.msra.mxu0 0.0
  %375 = vmatprep.subr.mxu0 0.0
  %376 = vmatpush1.msra.mxu0 0.0
  %377 = vmatprep.subr.mxu0 0.0
  %378 = vmatpush1.msra.mxu0 0.0
  %379 = vmatprep.subr.mxu0 0.0
  %380 = vmatpush1.msra.mxu0 0.0
  %381 = vmatprep.subr.mxu0 0.0
  %382 = vmatpush1.msra.mxu0 0.0
  %383 = vmatprep.subr.mxu0 0.0
  %384 = vmatpush1.msra.mxu0 0.0
  %385 = vmatprep.subr.mxu0 0.0
  %386 = vmatpush1.msra.mxu0 0.0
  %387 = vmatprep.subr.mxu0 0.0
  %388 = vmatpush1.msra.mxu0 0.0
  %389 = vmatprep.subr.mxu0 0.0
  %390 = vmatpush1.msra.mxu0 0.0
  %391 = vmatprep.subr.mxu0 0.0
  %392 = vmatpush1.msra.mxu0 0.0
  %393 = vmatprep.subr.mxu0 0.0
  %394 = vmatpush1.msra.mxu0 0.0
  %395 = vmatprep.subr.mxu0 0.0
  %396 = vmatpush1.msra.mxu0 0.0
  %397 = vmatprep.subr.mxu0 0.0
  %398 = vmatpush1.msra.mxu0 0.0
  %399 = vmatprep.subr.mxu0 0.0
  %400 = vmatpush1.msra.mxu0 0.0
  %401 = vmatprep.subr.mxu0 0.0
  %402 = vmatpush1.msra.mxu0 0.0
  %403 = vmatprep.subr.mxu0 0.0
  %404 = vmatpush1.msra.mxu0 0.0
  %405 = vmatprep.subr.mxu0 0.0
  %406 = vmatpush1.msra.mxu0 0.0
  %407 = vmatprep.subr.mxu0 0.0
  %408 = vmatpush1.msra.mxu0 0.0
  %409 = vmatprep.subr.mxu0 0.0
  %410 = vmatpush1.msra.mxu0 0.0
  %411 = vmatprep.subr.mxu0 0.0
  %412 = vmatpush1.msra.mxu0 0.0
  %413 = vmatprep.subr.mxu0 0.0
  %414 = vmatpush1.msra.mxu0 0.0
  %415 = vmatprep.subr.mxu0 0.0
  %416 = vmatpush1.msra.mxu0 0.0
  %417 = vmatprep.subr.mxu0 0.0
  %418 = vmatpush1.msra.mxu0 0.0
  %419 = vmatprep.subr.mxu0 0.0
  %420 = vmatpush1.msra.mxu0 0.0
  %421 = vmatprep.mubr.f32.mxu0 0.0
  %422 = vmatmul.mubr.f32.gmra.mrb[0].mxu0 %v27
  %v423 = vpop.f32.mrb[0].mxu0
  %v424 = vadd.f32 0.0, %v423
  %v425 = vpop.f32.mrb[0].mxu0
  %426 = vmatprep.mubr.f32.mxu0 0.0
  %427 = vmatmul.mubr.f32.gmra.mrb[0].mxu0 %v30
  %v428 = vpop.f32.mrb[0].mxu0
  %v429 = vadd.f32 0.0, %v428
  %v430 = vpop.f32.mrb[0].mxu0
  %431 = vdwg.mxu0
  %v432 = vlaneseq
  %v433 = vshrl.u32 %v432, 7
  %v434 = vlaneseq
  %v435 = vand.u32 %v434, 127
  %vm436 = vcmp.eq.s32.totalorder %v433, %v435
  %v437 = vsel %vm436, 1, 0
  %v438 = vcvt.s32.f32 %v437
  %v439 = vmul.f32 %v438, 2.0
  %440 = vxpose.xlu0.b32.start [1/16] %v274, 128
  %441 = vxpose.xlu0.b32.cont [2/16] %v279, 128
  %442 = vxpose.xlu0.b32.cont [3/16] 0.0, 128
  %443 = vxpose.xlu0.b32.cont [4/16] 0.0, 128
  %444 = vxpose.xlu0.b32.cont [5/16] 0.0, 128
  %445 = vxpose.xlu0.b32.cont [6/16] 0.0, 128
  %446 = vxpose.xlu0.b32.cont [7/16] 0.0, 128
  %447 = vxpose.xlu0.b32.cont [8/16] 0.0, 128
  %448 = vxpose.xlu0.b32.cont [9/16] 0.0, 128
  %449 = vxpose.xlu0.b32.cont [10/16] 0.0, 128
  %450 = vxpose.xlu0.b32.cont [11/16] 0.0, 128
  %451 = vxpose.xlu0.b32.cont [12/16] 0.0, 128
  %452 = vxpose.xlu0.b32.cont [13/16] 0.0, 128
  %453 = vxpose.xlu0.b32.cont [14/16] 0.0, 128
  %454 = vxpose.xlu0.b32.cont [15/16] 0.0, 128
  %455 = vxpose.xlu0.b32.end [16/16] 0.0, 128
  %v456 = vpop.trf.xlu0
  %v457 = vpop.trf.xlu0
  %v458 = vpop.trf.xlu0
  %v459 = vpop.trf.xlu0
  %v460 = vpop.trf.xlu0
  %v461 = vpop.trf.xlu0
  %v462 = vpop.trf.xlu0
  %v463 = vpop.trf.xlu0
  %v464 = vpop.trf.xlu0
  %v465 = vpop.trf.xlu0
  %v466 = vpop.trf.xlu0
  %v467 = vpop.trf.xlu0
  %v468 = vpop.trf.xlu0
  %v469 = vpop.trf.xlu0
  %v470 = vpop.trf.xlu0
  %v471 = vpop.trf.xlu0
  %v473 = vsel %vm25, %v456, 0
  %475 = vmatprep.subr.mxu0 0.0
  %476 = vmatpush1.msra.mxu0 %v274
  %477 = vmatprep.subr.mxu0 0.0
  %478 = vmatpush1.msra.mxu0 %v279
  %479 = vmatprep.subr.mxu0 0.0
  %480 = vmatpush1.msra.mxu0 0.0
  %481 = vmatprep.subr.mxu0 0.0
  %482 = vmatpush1.msra.mxu0 0.0
  %483 = vmatprep.subr.mxu0 0.0
  %484 = vmatpush1.msra.mxu0 0.0
  %485 = vmatprep.subr.mxu0 0.0
  %486 = vmatpush1.msra.mxu0 0.0
  %487 = vmatprep.subr.mxu0 0.0
  %488 = vmatpush1.msra.mxu0 0.0
  %489 = vmatprep.subr.mxu0 0.0
  %490 = vmatpush1.msra.mxu0 0.0
  %491 = vmatprep.subr.mxu0 0.0
  %492 = vmatpush1.msra.mxu0 0.0
  %493 = vmatprep.subr.mxu0 0.0
  %494 = vmatpush1.msra.mxu0 0.0
  %495 = vmatprep.subr.mxu0 0.0
  %496 = vmatpush1.msra.mxu0 0.0
  %497 = vmatprep.subr.mxu0 0.0
  %498 = vmatpush1.msra.mxu0 0.0
  %499 = vmatprep.subr.mxu0 0.0
  %500 = vmatpush1.msra.mxu0 0.0
  %501 = vmatprep.subr.mxu0 0.0
  %502 = vmatpush1.msra.mxu0 0.0
  %503 = vmatprep.subr.mxu0 0.0
  %504 = vmatpush1.msra.mxu0 0.0
  %505 = vmatprep.subr.mxu0 0.0
  %506 = vmatpush1.msra.mxu0 0.0
  %507 = vmatprep.subr.mxu0 0.0
  %508 = vmatpush1.msra.mxu0 0.0
  %509 = vmatprep.subr.mxu0 0.0
  %510 = vmatpush1.msra.mxu0 0.0
  %511 = vmatprep.subr.mxu0 0.0
  %512 = vmatpush1.msra.mxu0 0.0
  %513 = vmatprep.subr.mxu0 0.0
  %514 = vmatpush1.msra.mxu0 0.0
  %515 = vmatprep.subr.mxu0 0.0
  %516 = vmatpush1.msra.mxu0 0.0
  %517 = vmatprep.subr.mxu0 0.0
  %518 = vmatpush1.msra.mxu0 0.0
  %519 = vmatprep.subr.mxu0 0.0
  %520 = vmatpush1.msra.mxu0 0.0
  %521 = vmatprep.subr.mxu0 0.0
  %522 = vmatpush1.msra.mxu0 0.0
  %523 = vmatprep.subr.mxu0 0.0
  %524 = vmatpush1.msra.mxu0 0.0
  %525 = vmatprep.subr.mxu0 0.0
  %526 = vmatpush1.msra.mxu0 0.0
  %527 = vmatprep.subr.mxu0 0.0
  %528 = vmatpush1.msra.mxu0 0.0
  %529 = vmatprep.subr.mxu0 0.0
  %530 = vmatpush1.msra.mxu0 0.0
  %531 = vmatprep.subr.mxu0 0.0
  %532 = vmatpush1.msra.mxu0 0.0
  %533 = vmatprep.subr.mxu0 0.0
  %534 = vmatpush1.msra.mxu0 0.0
  %535 = vmatprep.subr.mxu0 0.0
  %536 = vmatpush1.msra.mxu0 0.0
  %537 = vmatprep.subr.mxu0 0.0
  %538 = vmatpush1.msra.mxu0 0.0
  %539 = vmatprep.mubr.f32.mxu0 0.0
  %540 = vmatmul.mubr.f32.gmra.mrb[0].mxu0 %v473
  %v541 = vpop.f32.mrb[0].mxu0
  %v542 = vadd.f32 0.0, %v541
  %v543 = vpop.f32.mrb[0].mxu0
  %544 = vdwg.mxu0
  %v545 = vmul.f32 %v438, 4.0
  %v546 = vmul.f32 %v542, 0.5
  %v547 = vadd.f32 %v545, %v546
  %v548 = vand.u32 2147483647, %v547
  %vm549 = vcmask 64512
  %v550 = vsel %vm549, %v548, 0.0
  %551 = vadd.xlane.f32.xlu0 %v550
  %v552 = vpop.xlane.xlu0 %551
  %v553 = vrot.slane %v552, 4
  %v554 = vmax.f32 %v552, %v553
  %v555 = vrot.slane %v554, 2
  %v556 = vmax.f32 %v554, %v555
  %v557 = vrot.slane %v556, 1
  %v558 = vmax.f32 %v556, %v557
  %v559 = vadd.f32 %v558, 4.0
  %v560 = vrcp.pop %v559
  %v561 = vmul.f32 %v560, 2.0
  %v562 = vmul.f32 %v561, %v438
  %v563 = vpack.c.bf16 %v547, %v547
  %v564 = vpack.c.bf16 %v562, %v562
  %v566 = vsel %vm549, %v563, 0
  %vm568 = vcmask 1043456
  %v570 = vsel %vm568, %v564, 0
  %572 = vmatprep.subr.bf16.mxu0 0
  %573 = vmatpush1.bf16.msra.mxu0 %v570
  %574 = vmatprep.subr.bf16.mxu0 0
  %575 = vmatpush1.bf16.msra.mxu0 0
  %576 = vmatprep.subr.bf16.mxu0 0
  %577 = vmatpush1.bf16.msra.mxu0 0
  %578 = vmatprep.subr.bf16.mxu0 0
  %579 = vmatpush1.bf16.msra.mxu0 0
  %580 = vmatprep.subr.bf16.mxu0 0
  %581 = vmatpush1.bf16.msra.mxu0 0
  %582 = vmatprep.subr.bf16.mxu0 0
  %583 = vmatpush1.bf16.msra.mxu0 0
  %584 = vmatprep.subr.bf16.mxu0 0
  %585 = vmatpush1.bf16.msra.mxu0 0
  %586 = vmatprep.subr.bf16.mxu0 0
  %587 = vmatpush1.bf16.msra.mxu0 0
  %588 = vmatprep.subr.bf16.mxu0 0
  %589 = vmatpush1.bf16.msra.mxu0 0
  %590 = vmatprep.subr.bf16.mxu0 0
  %591 = vmatpush1.bf16.msra.mxu0 0
  %592 = vmatprep.subr.bf16.mxu0 0
  %593 = vmatpush1.bf16.msra.mxu0 0
  %594 = vmatprep.subr.bf16.mxu0 0
  %595 = vmatpush1.bf16.msra.mxu0 0
  %596 = vmatprep.subr.bf16.mxu0 0
  %597 = vmatpush1.bf16.msra.mxu0 0
  %598 = vmatprep.subr.bf16.mxu0 0
  %599 = vmatpush1.bf16.msra.mxu0 0
  %600 = vmatprep.subr.bf16.mxu0 0
  %601 = vmatpush1.bf16.msra.mxu0 0
  %602 = vmatprep.subr.bf16.mxu0 0
  %603 = vmatpush1.bf16.msra.mxu0 0
  %604 = vmatprep.mubr.bf16.mxu0 0
  %605 = vmatmul.mubr.bf16.gmra.mrb[0].mxu0 %v566
  %v606 = vpop.f32.mrb[0].mxu0
  %v607 = vadd.f32 0.0, %v606
  %v608 = vpop.f32.mrb[0].mxu0
  %v609 = vpop.f32.mrb[0].mxu0
  %v610 = vpop.f32.mrb[0].mxu0
  %611 = vdwg.mxu0
  %v612 = vsub.f32 %v439, %v607
  %v613 = vpack.c.bf16 %v612, %v612
  %v614 = vsel %vm549, %v564, 0
  %v617 = vsel %vm568, %v613, 0
  %619 = vmatprep.subr.bf16.mxu0 0
  %620 = vmatpush1.bf16.msra.mxu0 %v617
  %621 = vmatprep.subr.bf16.mxu0 0
  %622 = vmatpush1.bf16.msra.mxu0 0
  %623 = vmatprep.subr.bf16.mxu0 0
  %624 = vmatpush1.bf16.msra.mxu0 0
  %625 = vmatprep.subr.bf16.mxu0 0
  %626 = vmatpush1.bf16.msra.mxu0 0
  %627 = vmatprep.subr.bf16.mxu0 0
  %628 = vmatpush1.bf16.msra.mxu0 0
  %629 = vmatprep.subr.bf16.mxu0 0
  %630 = vmatpush1.bf16.msra.mxu0 0
  %631 = vmatprep.subr.bf16.mxu0 0
  %632 = vmatpush1.bf16.msra.mxu0 0
  %633 = vmatprep.subr.bf16.mxu0 0
  %634 = vmatpush1.bf16.msra.mxu0 0
  %635 = vmatprep.subr.bf16.mxu0 0
  %636 = vmatpush1.bf16.msra.mxu0 0
  %637 = vmatprep.subr.bf16.mxu0 0
  %638 = vmatpush1.bf16.msra.mxu0 0
  %639 = vmatprep.subr.bf16.mxu0 0
  %640 = vmatpush1.bf16.msra.mxu0 0
  %641 = vmatprep.subr.bf16.mxu0 0
  %642 = vmatpush1.bf16.msra.mxu0 0
  %643 = vmatprep.subr.bf16.mxu0 0
  %644 = vmatpush1.bf16.msra.mxu0 0
  %645 = vmatprep.subr.bf16.mxu0 0
  %646 = vmatpush1.bf16.msra.mxu0 0
  %647 = vmatprep.subr.bf16.mxu0 0
  %648 = vmatpush1.bf16.msra.mxu0 0
  %649 = vmatprep.subr.bf16.mxu0 0
  %650 = vmatpush1.bf16.msra.mxu0 0
  %651 = vmatprep.mubr.bf16.mxu0 0
  %652 = vmatmul.mubr.bf16.gmra.mrb[0].mxu0 %v614
  %v653 = vpop.f32.mrb[0].mxu0
  %v654 = vadd.f32 0.0, %v653
  %v655 = vpop.f32.mrb[0].mxu0
  %v656 = vpop.f32.mrb[0].mxu0
  %v657 = vpop.f32.mrb[0].mxu0
  %658 = vdwg.mxu0
  %v659 = vpack.c.bf16 %v654, %v654
  %v661 = vsel %vm568, %v659, 0
  %663 = vmatprep.subr.bf16.mxu0 0
  %664 = vmatpush1.bf16.msra.mxu0 %v661
  %665 = vmatprep.subr.bf16.mxu0 0
  %666 = vmatpush1.bf16.msra.mxu0 0
  %667 = vmatprep.subr.bf16.mxu0 0
  %668 = vmatpush1.bf16.msra.mxu0 0
  %669 = vmatprep.subr.bf16.mxu0 0
  %670 = vmatpush1.bf16.msra.mxu0 0
  %671 = vmatprep.subr.bf16.mxu0 0
  %672 = vmatpush1.bf16.msra.mxu0 0
  %673 = vmatprep.subr.bf16.mxu0 0
  %674 = vmatpush1.bf16.msra.mxu0 0
  %675 = vmatprep.subr.bf16.mxu0 0
  %676 = vmatpush1.bf16.msra.mxu0 0
  %677 = vmatprep.subr.bf16.mxu0 0
  %678 = vmatpush1.bf16.msra.mxu0 0
  %679 = vmatprep.subr.bf16.mxu0 0
  %680 = vmatpush1.bf16.msra.mxu0 0
  %681 = vmatprep.subr.bf16.mxu0 0
  %682 = vmatpush1.bf16.msra.mxu0 0
  %683 = vmatprep.subr.bf16.mxu0 0
  %684 = vmatpush1.bf16.msra.mxu0 0
  %685 = vmatprep.subr.bf16.mxu0 0
  %686 = vmatpush1.bf16.msra.mxu0 0
  %687 = vmatprep.subr.bf16.mxu0 0
  %688 = vmatpush1.bf16.msra.mxu0 0
  %689 = vmatprep.subr.bf16.mxu0 0
  %690 = vmatpush1.bf16.msra.mxu0 0
  %691 = vmatprep.subr.bf16.mxu0 0
  %692 = vmatpush1.bf16.msra.mxu0 0
  %693 = vmatprep.subr.bf16.mxu0 0
  %694 = vmatpush1.bf16.msra.mxu0 0
  %695 = vmatprep.mubr.bf16.mxu0 0
  %696 = vmatmul.mubr.bf16.gmra.mrb[0].mxu0 %v566
  %v697 = vpop.f32.mrb[0].mxu0
  %v698 = vadd.f32 0.0, %v697
  %v699 = vpop.f32.mrb[0].mxu0
  %v700 = vpop.f32.mrb[0].mxu0
  %v701 = vpop.f32.mrb[0].mxu0
  %702 = vdwg.mxu0
  %v703 = vsub.f32 %v439, %v698
  %v704 = vpack.c.bf16 %v703, %v703
  %v705 = vsel %vm549, %v659, 0
  %v708 = vsel %vm568, %v704, 0
  %710 = vmatprep.subr.bf16.mxu0 0
  %711 = vmatpush1.bf16.msra.mxu0 %v708
  %712 = vmatprep.subr.bf16.mxu0 0
  %713 = vmatpush1.bf16.msra.mxu0 0
  %714 = vmatprep.subr.bf16.mxu0 0
  %715 = vmatpush1.bf16.msra.mxu0 0
  %716 = vmatprep.subr.bf16.mxu0 0
  %717 = vmatpush1.bf16.msra.mxu0 0
  %718 = vmatprep.subr.bf16.mxu0 0
  %719 = vmatpush1.bf16.msra.mxu0 0
  %720 = vmatprep.subr.bf16.mxu0 0
  %721 = vmatpush1.bf16.msra.mxu0 0
  %722 = vmatprep.subr.bf16.mxu0 0
  %723 = vmatpush1.bf16.msra.mxu0 0
  %724 = vmatprep.subr.bf16.mxu0 0
  %725 = vmatpush1.bf16.msra.mxu0 0
  %726 = vmatprep.subr.bf16.mxu0 0
  %727 = vmatpush1.bf16.msra.mxu0 0
  %728 = vmatprep.subr.bf16.mxu0 0
  %729 = vmatpush1.bf16.msra.mxu0 0
  %730 = vmatprep.subr.bf16.mxu0 0
  %731 = vmatpush1.bf16.msra.mxu0 0
  %732 = vmatprep.subr.bf16.mxu0 0
  %733 = vmatpush1.bf16.msra.mxu0 0
  %734 = vmatprep.subr.bf16.mxu0 0
  %735 = vmatpush1.bf16.msra.mxu0 0
  %736 = vmatprep.subr.bf16.mxu0 0
  %737 = vmatpush1.bf16.msra.mxu0 0
  %738 = vmatprep.subr.bf16.mxu0 0
  %739 = vmatpush1.bf16.msra.mxu0 0
  %740 = vmatprep.subr.bf16.mxu0 0
  %741 = vmatpush1.bf16.msra.mxu0 0
  %742 = vmatprep.mubr.bf16.mxu0 0
  %743 = vmatmul.mubr.bf16.gmra.mrb[0].mxu0 %v705
  %v744 = vpop.f32.mrb[0].mxu0
  %v745 = vadd.f32 0.0, %v744
  %v746 = vpop.f32.mrb[0].mxu0
  %v747 = vpop.f32.mrb[0].mxu0
  %v748 = vpop.f32.mrb[0].mxu0
  %749 = vdwg.mxu0
  %v750 = vpack.c.bf16 %v745, %v745
  %v752 = vsel %vm568, %v750, 0
  %754 = vmatprep.subr.bf16.mxu0 0
  %755 = vmatpush1.bf16.msra.mxu0 %v752
  %756 = vmatprep.subr.bf16.mxu0 0
  %757 = vmatpush1.bf16.msra.mxu0 0
  %758 = vmatprep.subr.bf16.mxu0 0
  %759 = vmatpush1.bf16.msra.mxu0 0
  %760 = vmatprep.subr.bf16.mxu0 0
  %761 = vmatpush1.bf16.msra.mxu0 0
  %762 = vmatprep.subr.bf16.mxu0 0
  %763 = vmatpush1.bf16.msra.mxu0 0
  %764 = vmatprep.subr.bf16.mxu0 0
  %765 = vmatpush1.bf16.msra.mxu0 0
  %766 = vmatprep.subr.bf16.mxu0 0
  %767 = vmatpush1.bf16.msra.mxu0 0
  %768 = vmatprep.subr.bf16.mxu0 0
  %769 = vmatpush1.bf16.msra.mxu0 0
  %770 = vmatprep.subr.bf16.mxu0 0
  %771 = vmatpush1.bf16.msra.mxu0 0
  %772 = vmatprep.subr.bf16.mxu0 0
  %773 = vmatpush1.bf16.msra.mxu0 0
  %774 = vmatprep.subr.bf16.mxu0 0
  %775 = vmatpush1.bf16.msra.mxu0 0
  %776 = vmatprep.subr.bf16.mxu0 0
  %777 = vmatpush1.bf16.msra.mxu0 0
  %778 = vmatprep.subr.bf16.mxu0 0
  %779 = vmatpush1.bf16.msra.mxu0 0
  %780 = vmatprep.subr.bf16.mxu0 0
  %781 = vmatpush1.bf16.msra.mxu0 0
  %782 = vmatprep.subr.bf16.mxu0 0
  %783 = vmatpush1.bf16.msra.mxu0 0
  %784 = vmatprep.subr.bf16.mxu0 0
  %785 = vmatpush1.bf16.msra.mxu0 0
  %786 = vmatprep.mubr.bf16.mxu0 0
  %787 = vmatmul.mubr.bf16.gmra.mrb[0].mxu0 %v566
  %v788 = vpop.f32.mrb[0].mxu0
  %v789 = vadd.f32 0.0, %v788
  %v790 = vpop.f32.mrb[0].mxu0
  %v791 = vpop.f32.mrb[0].mxu0
  %v792 = vpop.f32.mrb[0].mxu0
  %793 = vdwg.mxu0
  %v794 = vsub.f32 %v439, %v789
  %v795 = vpack.c.bf16 %v794, %v794
  %v796 = vsel %vm549, %v750, 0
  %v799 = vsel %vm568, %v795, 0
  %801 = vmatprep.subr.bf16.mxu0 0
  %802 = vmatpush1.bf16.msra.mxu0 %v799
  %803 = vmatprep.subr.bf16.mxu0 0
  %804 = vmatpush1.bf16.msra.mxu0 0
  %805 = vmatprep.subr.bf16.mxu0 0
  %806 = vmatpush1.bf16.msra.mxu0 0
  %807 = vmatprep.subr.bf16.mxu0 0
  %808 = vmatpush1.bf16.msra.mxu0 0
  %809 = vmatprep.subr.bf16.mxu0 0
  %810 = vmatpush1.bf16.msra.mxu0 0
  %811 = vmatprep.subr.bf16.mxu0 0
  %812 = vmatpush1.bf16.msra.mxu0 0
  %813 = vmatprep.subr.bf16.mxu0 0
  %814 = vmatpush1.bf16.msra.mxu0 0
  %815 = vmatprep.subr.bf16.mxu0 0
  %816 = vmatpush1.bf16.msra.mxu0 0
  %817 = vmatprep.subr.bf16.mxu0 0
  %818 = vmatpush1.bf16.msra.mxu0 0
  %819 = vmatprep.subr.bf16.mxu0 0
  %820 = vmatpush1.bf16.msra.mxu0 0
  %821 = vmatprep.subr.bf16.mxu0 0
  %822 = vmatpush1.bf16.msra.mxu0 0
  %823 = vmatprep.subr.bf16.mxu0 0
  %824 = vmatpush1.bf16.msra.mxu0 0
  %825 = vmatprep.subr.bf16.mxu0 0
  %826 = vmatpush1.bf16.msra.mxu0 0
  %827 = vmatprep.subr.bf16.mxu0 0
  %828 = vmatpush1.bf16.msra.mxu0 0
  %829 = vmatprep.subr.bf16.mxu0 0
  %830 = vmatpush1.bf16.msra.mxu0 0
  %831 = vmatprep.subr.bf16.mxu0 0
  %832 = vmatpush1.bf16.msra.mxu0 0
  %833 = vmatprep.mubr.bf16.mxu0 0
  %834 = vmatmul.mubr.bf16.gmra.mrb[0].mxu0 %v796
  %v835 = vpop.f32.mrb[0].mxu0
  %v836 = vadd.f32 0.0, %v835
  %v837 = vpop.f32.mrb[0].mxu0
  %v838 = vpop.f32.mrb[0].mxu0
  %v839 = vpop.f32.mrb[0].mxu0
  %840 = vdwg.mxu0
  %v841 = vpack.c.bf16 %v836, %v836
  %v843 = vsel %vm568, %v841, 0
  %845 = vmatprep.subr.bf16.mxu0 0
  %846 = vmatpush1.bf16.msra.mxu0 %v843
  %847 = vmatprep.subr.bf16.mxu0 0
  %848 = vmatpush1.bf16.msra.mxu0 0
  %849 = vmatprep.subr.bf16.mxu0 0
  %850 = vmatpush1.bf16.msra.mxu0 0
  %851 = vmatprep.subr.bf16.mxu0 0
  %852 = vmatpush1.bf16.msra.mxu0 0
  %853 = vmatprep.subr.bf16.mxu0 0
  %854 = vmatpush1.bf16.msra.mxu0 0
  %855 = vmatprep.subr.bf16.mxu0 0
  %856 = vmatpush1.bf16.msra.mxu0 0
  %857 = vmatprep.subr.bf16.mxu0 0
  %858 = vmatpush1.bf16.msra.mxu0 0
  %859 = vmatprep.subr.bf16.mxu0 0
  %860 = vmatpush1.bf16.msra.mxu0 0
  %861 = vmatprep.subr.bf16.mxu0 0
  %862 = vmatpush1.bf16.msra.mxu0 0
  %863 = vmatprep.subr.bf16.mxu0 0
  %864 = vmatpush1.bf16.msra.mxu0 0
  %865 = vmatprep.subr.bf16.mxu0 0
  %866 = vmatpush1.bf16.msra.mxu0 0
  %867 = vmatprep.subr.bf16.mxu0 0
  %868 = vmatpush1.bf16.msra.mxu0 0
  %869 = vmatprep.subr.bf16.mxu0 0
  %870 = vmatpush1.bf16.msra.mxu0 0
  %871 = vmatprep.subr.bf16.mxu0 0
  %872 = vmatpush1.bf16.msra.mxu0 0
  %873 = vmatprep.subr.bf16.mxu0 0
  %874 = vmatpush1.bf16.msra.mxu0 0
  %875 = vmatprep.subr.bf16.mxu0 0
  %876 = vmatpush1.bf16.msra.mxu0 0
  %877 = vmatprep.mubr.bf16.mxu0 0
  %878 = vmatmul.mubr.bf16.gmra.mrb[0].mxu0 %v566
  %v879 = vpop.f32.mrb[0].mxu0
  %v880 = vadd.f32 0.0, %v879
  %v881 = vpop.f32.mrb[0].mxu0
  %v882 = vpop.f32.mrb[0].mxu0
  %v883 = vpop.f32.mrb[0].mxu0
  %884 = vdwg.mxu0
  %v885 = vsub.f32 %v439, %v880
  %v886 = vpack.c.bf16 %v885, %v885
  %v887 = vsel %vm549, %v841, 0
  %v890 = vsel %vm568, %v886, 0
  %892 = vmatprep.subr.bf16.mxu0 0
  %893 = vmatpush1.bf16.msra.mxu0 %v890
  %894 = vmatprep.subr.bf16.mxu0 0
  %895 = vmatpush1.bf16.msra.mxu0 0
  %896 = vmatprep.subr.bf16.mxu0 0
  %897 = vmatpush1.bf16.msra.mxu0 0
  %898 = vmatprep.subr.bf16.mxu0 0
  %899 = vmatpush1.bf16.msra.mxu0 0
  %900 = vmatprep.subr.bf16.mxu0 0
  %901 = vmatpush1.bf16.msra.mxu0 0
  %902 = vmatprep.subr.bf16.mxu0 0
  %903 = vmatpush1.bf16.msra.mxu0 0
  %904 = vmatprep.subr.bf16.mxu0 0
  %905 = vmatpush1.bf16.msra.mxu0 0
  %906 = vmatprep.subr.bf16.mxu0 0
  %907 = vmatpush1.bf16.msra.mxu0 0
  %908 = vmatprep.subr.bf16.mxu0 0
  %909 = vmatpush1.bf16.msra.mxu0 0
  %910 = vmatprep.subr.bf16.mxu0 0
  %911 = vmatpush1.bf16.msra.mxu0 0
  %912 = vmatprep.subr.bf16.mxu0 0
  %913 = vmatpush1.bf16.msra.mxu0 0
  %914 = vmatprep.subr.bf16.mxu0 0
  %915 = vmatpush1.bf16.msra.mxu0 0
  %916 = vmatprep.subr.bf16.mxu0 0
  %917 = vmatpush1.bf16.msra.mxu0 0
  %918 = vmatprep.subr.bf16.mxu0 0
  %919 = vmatpush1.bf16.msra.mxu0 0
  %920 = vmatprep.subr.bf16.mxu0 0
  %921 = vmatpush1.bf16.msra.mxu0 0
  %922 = vmatprep.subr.bf16.mxu0 0
  %923 = vmatpush1.bf16.msra.mxu0 0
  %924 = vmatprep.mubr.bf16.mxu0 0
  %925 = vmatmul.mubr.bf16.gmra.mrb[0].mxu0 %v887
  %v926 = vpop.f32.mrb[0].mxu0
  %v927 = vadd.f32 0.0, %v926
  %v928 = vpop.f32.mrb[0].mxu0
  %v929 = vpop.f32.mrb[0].mxu0
  %v930 = vpop.f32.mrb[0].mxu0
  %931 = vdwg.mxu0
  %v932 = vpack.c.bf16 %v927, %v927
  %v934 = vsel %vm568, %v932, 0
  %936 = vmatprep.subr.bf16.mxu0 0
  %937 = vmatpush1.bf16.msra.mxu0 %v934
  %938 = vmatprep.subr.bf16.mxu0 0
  %939 = vmatpush1.bf16.msra.mxu0 0
  %940 = vmatprep.subr.bf16.mxu0 0
  %941 = vmatpush1.bf16.msra.mxu0 0
  %942 = vmatprep.subr.bf16.mxu0 0
  %943 = vmatpush1.bf16.msra.mxu0 0
  %944 = vmatprep.subr.bf16.mxu0 0
  %945 = vmatpush1.bf16.msra.mxu0 0
  %946 = vmatprep.subr.bf16.mxu0 0
  %947 = vmatpush1.bf16.msra.mxu0 0
  %948 = vmatprep.subr.bf16.mxu0 0
  %949 = vmatpush1.bf16.msra.mxu0 0
  %950 = vmatprep.subr.bf16.mxu0 0
  %951 = vmatpush1.bf16.msra.mxu0 0
  %952 = vmatprep.subr.bf16.mxu0 0
  %953 = vmatpush1.bf16.msra.mxu0 0
  %954 = vmatprep.subr.bf16.mxu0 0
  %955 = vmatpush1.bf16.msra.mxu0 0
  %956 = vmatprep.subr.bf16.mxu0 0
  %957 = vmatpush1.bf16.msra.mxu0 0
  %958 = vmatprep.subr.bf16.mxu0 0
  %959 = vmatpush1.bf16.msra.mxu0 0
  %960 = vmatprep.subr.bf16.mxu0 0
  %961 = vmatpush1.bf16.msra.mxu0 0
  %962 = vmatprep.subr.bf16.mxu0 0
  %963 = vmatpush1.bf16.msra.mxu0 0
  %964 = vmatprep.subr.bf16.mxu0 0
  %965 = vmatpush1.bf16.msra.mxu0 0
  %966 = vmatprep.subr.bf16.mxu0 0
  %967 = vmatpush1.bf16.msra.mxu0 0
  %968 = vmatprep.mubr.bf16.mxu0 0
  %969 = vmatmul.mubr.bf16.gmra.mrb[0].mxu0 %v566
  %v970 = vpop.f32.mrb[0].mxu0
  %v971 = vadd.f32 0.0, %v970
  %v972 = vpop.f32.mrb[0].mxu0
  %v973 = vpop.f32.mrb[0].mxu0
  %v974 = vpop.f32.mrb[0].mxu0
  %975 = vdwg.mxu0
  %v976 = vsub.f32 %v439, %v971
  %v977 = vpack.c.bf16 %v976, %v976
  %v978 = vsel %vm549, %v932, 0
  %v981 = vsel %vm568, %v977, 0
  %983 = vmatprep.subr.bf16.mxu0 0
  %984 = vmatpush1.bf16.msra.mxu0 %v981
  %985 = vmatprep.subr.bf16.mxu0 0
  %986 = vmatpush1.bf16.msra.mxu0 0
  %987 = vmatprep.subr.bf16.mxu0 0
  %988 = vmatpush1.bf16.msra.mxu0 0
  %989 = vmatprep.subr.bf16.mxu0 0
  %990 = vmatpush1.bf16.msra.mxu0 0
  %991 = vmatprep.subr.bf16.mxu0 0
  %992 = vmatpush1.bf16.msra.mxu0 0
  %993 = vmatprep.subr.bf16.mxu0 0
  %994 = vmatpush1.bf16.msra.mxu0 0
  %995 = vmatprep.subr.bf16.mxu0 0
  %996 = vmatpush1.bf16.msra.mxu0 0
  %997 = vmatprep.subr.bf16.mxu0 0
  %998 = vmatpush1.bf16.msra.mxu0 0
  %999 = vmatprep.subr.bf16.mxu0 0
  %1000 = vmatpush1.bf16.msra.mxu0 0
  %1001 = vmatprep.subr.bf16.mxu0 0
  %1002 = vmatpush1.bf16.msra.mxu0 0
  %1003 = vmatprep.subr.bf16.mxu0 0
  %1004 = vmatpush1.bf16.msra.mxu0 0
  %1005 = vmatprep.subr.bf16.mxu0 0
  %1006 = vmatpush1.bf16.msra.mxu0 0
  %1007 = vmatprep.subr.bf16.mxu0 0
  %1008 = vmatpush1.bf16.msra.mxu0 0
  %1009 = vmatprep.subr.bf16.mxu0 0
  %1010 = vmatpush1.bf16.msra.mxu0 0
  %1011 = vmatprep.subr.bf16.mxu0 0
  %1012 = vmatpush1.bf16.msra.mxu0 0
  %1013 = vmatprep.subr.bf16.mxu0 0
  %1014 = vmatpush1.bf16.msra.mxu0 0
  %1015 = vmatprep.mubr.bf16.mxu0 0
  %1016 = vmatmul.mubr.bf16.gmra.mrb[0].mxu0 %v978
  %v1017 = vpop.f32.mrb[0].mxu0
  %v1018 = vadd.f32 0.0, %v1017
  %v1019 = vpop.f32.mrb[0].mxu0
  %v1020 = vpop.f32.mrb[0].mxu0
  %v1021 = vpop.f32.mrb[0].mxu0
  %1022 = vdwg.mxu0
  %v1023 = vpack.c.bf16 %v1018, %v1018
  %v1025 = vsel %vm568, %v1023, 0
  %1027 = vmatprep.subr.bf16.mxu0 0
  %1028 = vmatpush1.bf16.msra.mxu0 %v1025
  %1029 = vmatprep.subr.bf16.mxu0 0
  %1030 = vmatpush1.bf16.msra.mxu0 0
  %1031 = vmatprep.subr.bf16.mxu0 0
  %1032 = vmatpush1.bf16.msra.mxu0 0
  %1033 = vmatprep.subr.bf16.mxu0 0
  %1034 = vmatpush1.bf16.msra.mxu0 0
  %1035 = vmatprep.subr.bf16.mxu0 0
  %1036 = vmatpush1.bf16.msra.mxu0 0
  %1037 = vmatprep.subr.bf16.mxu0 0
  %1038 = vmatpush1.bf16.msra.mxu0 0
  %1039 = vmatprep.subr.bf16.mxu0 0
  %1040 = vmatpush1.bf16.msra.mxu0 0
  %1041 = vmatprep.subr.bf16.mxu0 0
  %1042 = vmatpush1.bf16.msra.mxu0 0
  %1043 = vmatprep.subr.bf16.mxu0 0
  %1044 = vmatpush1.bf16.msra.mxu0 0
  %1045 = vmatprep.subr.bf16.mxu0 0
  %1046 = vmatpush1.bf16.msra.mxu0 0
  %1047 = vmatprep.subr.bf16.mxu0 0
  %1048 = vmatpush1.bf16.msra.mxu0 0
  %1049 = vmatprep.subr.bf16.mxu0 0
  %1050 = vmatpush1.bf16.msra.mxu0 0
  %1051 = vmatprep.subr.bf16.mxu0 0
  %1052 = vmatpush1.bf16.msra.mxu0 0
  %1053 = vmatprep.subr.bf16.mxu0 0
  %1054 = vmatpush1.bf16.msra.mxu0 0
  %1055 = vmatprep.subr.bf16.mxu0 0
  %1056 = vmatpush1.bf16.msra.mxu0 0
  %1057 = vmatprep.subr.bf16.mxu0 0
  %1058 = vmatpush1.bf16.msra.mxu0 0
  %1059 = vmatprep.mubr.bf16.mxu0 0
  %1060 = vmatmul.mubr.bf16.gmra.mrb[0].mxu0 %v566
  %v1061 = vpop.f32.mrb[0].mxu0
  %v1062 = vadd.f32 0.0, %v1061
  %v1063 = vpop.f32.mrb[0].mxu0
  %v1064 = vpop.f32.mrb[0].mxu0
  %v1065 = vpop.f32.mrb[0].mxu0
  %1066 = vdwg.mxu0
  %v1067 = vsub.f32 %v439, %v1062
  %v1068 = vpack.c.bf16 %v1067, %v1067
  %v1069 = vsel %vm549, %v1023, 0
  %v1072 = vsel %vm568, %v1068, 0
  %1074 = vmatprep.subr.bf16.mxu0 0
  %1075 = vmatpush1.bf16.msra.mxu0 %v1072
  %1076 = vmatprep.subr.bf16.mxu0 0
  %1077 = vmatpush1.bf16.msra.mxu0 0
  %1078 = vmatprep.subr.bf16.mxu0 0
  %1079 = vmatpush1.bf16.msra.mxu0 0
  %1080 = vmatprep.subr.bf16.mxu0 0
  %1081 = vmatpush1.bf16.msra.mxu0 0
  %1082 = vmatprep.subr.bf16.mxu0 0
  %1083 = vmatpush1.bf16.msra.mxu0 0
  %1084 = vmatprep.subr.bf16.mxu0 0
  %1085 = vmatpush1.bf16.msra.mxu0 0
  %1086 = vmatprep.subr.bf16.mxu0 0
  %1087 = vmatpush1.bf16.msra.mxu0 0
  %1088 = vmatprep.subr.bf16.mxu0 0
  %1089 = vmatpush1.bf16.msra.mxu0 0
  %1090 = vmatprep.subr.bf16.mxu0 0
  %1091 = vmatpush1.bf16.msra.mxu0 0
  %1092 = vmatprep.subr.bf16.mxu0 0
  %1093 = vmatpush1.bf16.msra.mxu0 0
  %1094 = vmatprep.subr.bf16.mxu0 0
  %1095 = vmatpush1.bf16.msra.mxu0 0
  %1096 = vmatprep.subr.bf16.mxu0 0
  %1097 = vmatpush1.bf16.msra.mxu0 0
  %1098 = vmatprep.subr.bf16.mxu0 0
  %1099 = vmatpush1.bf16.msra.mxu0 0
  %1100 = vmatprep.subr.bf16.mxu0 0
  %1101 = vmatpush1.bf16.msra.mxu0 0
  %1102 = vmatprep.subr.bf16.mxu0 0
  %1103 = vmatpush1.bf16.msra.mxu0 0
  %1104 = vmatprep.subr.bf16.mxu0 0
  %1105 = vmatpush1.bf16.msra.mxu0 0
  %1106 = vmatprep.mubr.bf16.mxu0 0
  %1107 = vmatmul.mubr.bf16.gmra.mrb[0].mxu0 %v1069
  %v1108 = vpop.f32.mrb[0].mxu0
  %v1109 = vadd.f32 0.0, %v1108
  %v1110 = vpop.f32.mrb[0].mxu0
  %v1111 = vpop.f32.mrb[0].mxu0
  %v1112 = vpop.f32.mrb[0].mxu0
  %1113 = vdwg.mxu0
  %v1114 = vpack.c.bf16 %v1109, %v1109
  %v1116 = vsel %vm568, %v1114, 0
  %1118 = vmatprep.subr.bf16.mxu0 0
  %1119 = vmatpush1.bf16.msra.mxu0 %v1116
  %1120 = vmatprep.subr.bf16.mxu0 0
  %1121 = vmatpush1.bf16.msra.mxu0 0
  %1122 = vmatprep.subr.bf16.mxu0 0
  %1123 = vmatpush1.bf16.msra.mxu0 0
  %1124 = vmatprep.subr.bf16.mxu0 0
  %1125 = vmatpush1.bf16.msra.mxu0 0
  %1126 = vmatprep.subr.bf16.mxu0 0
  %1127 = vmatpush1.bf16.msra.mxu0 0
  %1128 = vmatprep.subr.bf16.mxu0 0
  %1129 = vmatpush1.bf16.msra.mxu0 0
  %1130 = vmatprep.subr.bf16.mxu0 0
  %1131 = vmatpush1.bf16.msra.mxu0 0
  %1132 = vmatprep.subr.bf16.mxu0 0
  %1133 = vmatpush1.bf16.msra.mxu0 0
  %1134 = vmatprep.subr.bf16.mxu0 0
  %1135 = vmatpush1.bf16.msra.mxu0 0
  %1136 = vmatprep.subr.bf16.mxu0 0
  %1137 = vmatpush1.bf16.msra.mxu0 0
  %1138 = vmatprep.subr.bf16.mxu0 0
  %1139 = vmatpush1.bf16.msra.mxu0 0
  %1140 = vmatprep.subr.bf16.mxu0 0
  %1141 = vmatpush1.bf16.msra.mxu0 0
  %1142 = vmatprep.subr.bf16.mxu0 0
  %1143 = vmatpush1.bf16.msra.mxu0 0
  %1144 = vmatprep.subr.bf16.mxu0 0
  %1145 = vmatpush1.bf16.msra.mxu0 0
  %1146 = vmatprep.subr.bf16.mxu0 0
  %1147 = vmatpush1.bf16.msra.mxu0 0
  %1148 = vmatprep.subr.bf16.mxu0 0
  %1149 = vmatpush1.bf16.msra.mxu0 0
  %1150 = vmatprep.mubr.bf16.mxu0 0
  %1151 = vmatmul.mubr.bf16.gmra.mrb[0].mxu0 %v566
  %v1152 = vpop.f32.mrb[0].mxu0
  %v1153 = vadd.f32 0.0, %v1152
  %v1154 = vpop.f32.mrb[0].mxu0
  %v1155 = vpop.f32.mrb[0].mxu0
  %v1156 = vpop.f32.mrb[0].mxu0
  %1157 = vdwg.mxu0
  %v1158 = vsub.f32 %v439, %v1153
  %v1159 = vpack.c.bf16 %v1158, %v1158
  %v1160 = vsel %vm549, %v1114, 0
  %v1163 = vsel %vm568, %v1159, 0
  %1165 = vmatprep.subr.bf16.mxu0 0
  %1166 = vmatpush1.bf16.msra.mxu0 %v1163
  %1167 = vmatprep.subr.bf16.mxu0 0
  %1168 = vmatpush1.bf16.msra.mxu0 0
  %1169 = vmatprep.subr.bf16.mxu0 0
  %1170 = vmatpush1.bf16.msra.mxu0 0
  %1171 = vmatprep.subr.bf16.mxu0 0
  %1172 = vmatpush1.bf16.msra.mxu0 0
  %1173 = vmatprep.subr.bf16.mxu0 0
  %1174 = vmatpush1.bf16.msra.mxu0 0
  %1175 = vmatprep.subr.bf16.mxu0 0
  %1176 = vmatpush1.bf16.msra.mxu0 0
  %1177 = vmatprep.subr.bf16.mxu0 0
  %1178 = vmatpush1.bf16.msra.mxu0 0
  %1179 = vmatprep.subr.bf16.mxu0 0
  %1180 = vmatpush1.bf16.msra.mxu0 0
  %1181 = vmatprep.subr.bf16.mxu0 0
  %1182 = vmatpush1.bf16.msra.mxu0 0
  %1183 = vmatprep.subr.bf16.mxu0 0
  %1184 = vmatpush1.bf16.msra.mxu0 0
  %1185 = vmatprep.subr.bf16.mxu0 0
  %1186 = vmatpush1.bf16.msra.mxu0 0
  %1187 = vmatprep.subr.bf16.mxu0 0
  %1188 = vmatpush1.bf16.msra.mxu0 0
  %1189 = vmatprep.subr.bf16.mxu0 0
  %1190 = vmatpush1.bf16.msra.mxu0 0
  %1191 = vmatprep.subr.bf16.mxu0 0
  %1192 = vmatpush1.bf16.msra.mxu0 0
  %1193 = vmatprep.subr.bf16.mxu0 0
  %1194 = vmatpush1.bf16.msra.mxu0 0
  %1195 = vmatprep.subr.bf16.mxu0 0
  %1196 = vmatpush1.bf16.msra.mxu0 0
  %1197 = vmatprep.mubr.bf16.mxu0 0
  %1198 = vmatmul.mubr.bf16.gmra.mrb[0].mxu0 %v1160
  %v1199 = vpop.f32.mrb[0].mxu0
  %v1200 = vadd.f32 0.0, %v1199
  %v1201 = vpop.f32.mrb[0].mxu0
  %v1202 = vpop.f32.mrb[0].mxu0
  %v1203 = vpop.f32.mrb[0].mxu0
  %1204 = vdwg.mxu0
  %v1205 = vpack.c.bf16 %v1200, %v1200
  %v1207 = vsel %vm568, %v1205, 0
  %1209 = vmatprep.subr.bf16.mxu0 0
  %1210 = vmatpush1.bf16.msra.mxu0 %v1207
  %1211 = vmatprep.subr.bf16.mxu0 0
  %1212 = vmatpush1.bf16.msra.mxu0 0
  %1213 = vmatprep.subr.bf16.mxu0 0
  %1214 = vmatpush1.bf16.msra.mxu0 0
  %1215 = vmatprep.subr.bf16.mxu0 0
  %1216 = vmatpush1.bf16.msra.mxu0 0
  %1217 = vmatprep.subr.bf16.mxu0 0
  %1218 = vmatpush1.bf16.msra.mxu0 0
  %1219 = vmatprep.subr.bf16.mxu0 0
  %1220 = vmatpush1.bf16.msra.mxu0 0
  %1221 = vmatprep.subr.bf16.mxu0 0
  %1222 = vmatpush1.bf16.msra.mxu0 0
  %1223 = vmatprep.subr.bf16.mxu0 0
  %1224 = vmatpush1.bf16.msra.mxu0 0
  %1225 = vmatprep.subr.bf16.mxu0 0
  %1226 = vmatpush1.bf16.msra.mxu0 0
  %1227 = vmatprep.subr.bf16.mxu0 0
  %1228 = vmatpush1.bf16.msra.mxu0 0
  %1229 = vmatprep.subr.bf16.mxu0 0
  %1230 = vmatpush1.bf16.msra.mxu0 0
  %1231 = vmatprep.subr.bf16.mxu0 0
  %1232 = vmatpush1.bf16.msra.mxu0 0
  %1233 = vmatprep.subr.bf16.mxu0 0
  %1234 = vmatpush1.bf16.msra.mxu0 0
  %1235 = vmatprep.subr.bf16.mxu0 0
  %1236 = vmatpush1.bf16.msra.mxu0 0
  %1237 = vmatprep.subr.bf16.mxu0 0
  %1238 = vmatpush1.bf16.msra.mxu0 0
  %1239 = vmatprep.subr.bf16.mxu0 0
  %1240 = vmatpush1.bf16.msra.mxu0 0
  %1241 = vmatprep.mubr.bf16.mxu0 0
  %1242 = vmatmul.mubr.bf16.gmra.mrb[0].mxu0 %v566
  %v1243 = vpop.f32.mrb[0].mxu0
  %v1244 = vadd.f32 0.0, %v1243
  %v1245 = vpop.f32.mrb[0].mxu0
  %v1246 = vpop.f32.mrb[0].mxu0
  %v1247 = vpop.f32.mrb[0].mxu0
  %1248 = vdwg.mxu0
  %v1249 = vsub.f32 %v439, %v1244
  %v1250 = vpack.c.bf16 %v1249, %v1249
  %v1251 = vsel %vm549, %v1205, 0
  %v1254 = vsel %vm568, %v1250, 0
  %1256 = vmatprep.subr.bf16.mxu0 0
  %1257 = vmatpush1.bf16.msra.mxu0 %v1254
  %1258 = vmatprep.subr.bf16.mxu0 0
  %1259 = vmatpush1.bf16.msra.mxu0 0
  %1260 = vmatprep.subr.bf16.mxu0 0
  %1261 = vmatpush1.bf16.msra.mxu0 0
  %1262 = vmatprep.subr.bf16.mxu0 0
  %1263 = vmatpush1.bf16.msra.mxu0 0
  %1264 = vmatprep.subr.bf16.mxu0 0
  %1265 = vmatpush1.bf16.msra.mxu0 0
  %1266 = vmatprep.subr.bf16.mxu0 0
  %1267 = vmatpush1.bf16.msra.mxu0 0
  %1268 = vmatprep.subr.bf16.mxu0 0
  %1269 = vmatpush1.bf16.msra.mxu0 0
  %1270 = vmatprep.subr.bf16.mxu0 0
  %1271 = vmatpush1.bf16.msra.mxu0 0
  %1272 = vmatprep.subr.bf16.mxu0 0
  %1273 = vmatpush1.bf16.msra.mxu0 0
  %1274 = vmatprep.subr.bf16.mxu0 0
  %1275 = vmatpush1.bf16.msra.mxu0 0
  %1276 = vmatprep.subr.bf16.mxu0 0
  %1277 = vmatpush1.bf16.msra.mxu0 0
  %1278 = vmatprep.subr.bf16.mxu0 0
  %1279 = vmatpush1.bf16.msra.mxu0 0
  %1280 = vmatprep.subr.bf16.mxu0 0
  %1281 = vmatpush1.bf16.msra.mxu0 0
  %1282 = vmatprep.subr.bf16.mxu0 0
  %1283 = vmatpush1.bf16.msra.mxu0 0
  %1284 = vmatprep.subr.bf16.mxu0 0
  %1285 = vmatpush1.bf16.msra.mxu0 0
  %1286 = vmatprep.subr.bf16.mxu0 0
  %1287 = vmatpush1.bf16.msra.mxu0 0
  %1288 = vmatprep.mubr.bf16.mxu0 0
  %1289 = vmatmul.mubr.bf16.gmra.mrb[0].mxu0 %v1251
  %v1290 = vpop.f32.mrb[0].mxu0
  %v1291 = vadd.f32 0.0, %v1290
  %v1292 = vpop.f32.mrb[0].mxu0
  %v1293 = vpop.f32.mrb[0].mxu0
  %v1294 = vpop.f32.mrb[0].mxu0
  %1295 = vdwg.mxu0
  %v1296 = vpack.c.bf16 %v1291, %v1291
  %v1298 = vsel %vm568, %v1296, 0
  %1300 = vmatprep.subr.bf16.mxu0 0
  %1301 = vmatpush1.bf16.msra.mxu0 %v1298
  %1302 = vmatprep.subr.bf16.mxu0 0
  %1303 = vmatpush1.bf16.msra.mxu0 0
  %1304 = vmatprep.subr.bf16.mxu0 0
  %1305 = vmatpush1.bf16.msra.mxu0 0
  %1306 = vmatprep.subr.bf16.mxu0 0
  %1307 = vmatpush1.bf16.msra.mxu0 0
  %1308 = vmatprep.subr.bf16.mxu0 0
  %1309 = vmatpush1.bf16.msra.mxu0 0
  %1310 = vmatprep.subr.bf16.mxu0 0
  %1311 = vmatpush1.bf16.msra.mxu0 0
  %1312 = vmatprep.subr.bf16.mxu0 0
  %1313 = vmatpush1.bf16.msra.mxu0 0
  %1314 = vmatprep.subr.bf16.mxu0 0
  %1315 = vmatpush1.bf16.msra.mxu0 0
  %1316 = vmatprep.subr.bf16.mxu0 0
  %1317 = vmatpush1.bf16.msra.mxu0 0
  %1318 = vmatprep.subr.bf16.mxu0 0
  %1319 = vmatpush1.bf16.msra.mxu0 0
  %1320 = vmatprep.subr.bf16.mxu0 0
  %1321 = vmatpush1.bf16.msra.mxu0 0
  %1322 = vmatprep.subr.bf16.mxu0 0
  %1323 = vmatpush1.bf16.msra.mxu0 0
  %1324 = vmatprep.subr.bf16.mxu0 0
  %1325 = vmatpush1.bf16.msra.mxu0 0
  %1326 = vmatprep.subr.bf16.mxu0 0
  %1327 = vmatpush1.bf16.msra.mxu0 0
  %1328 = vmatprep.subr.bf16.mxu0 0
  %1329 = vmatpush1.bf16.msra.mxu0 0
  %1330 = vmatprep.subr.bf16.mxu0 0
  %1331 = vmatpush1.bf16.msra.mxu0 0
  %1332 = vmatprep.mubr.bf16.mxu0 0
  %1333 = vmatmul.mubr.bf16.gmra.mrb[0].mxu0 %v566
  %v1334 = vpop.f32.mrb[0].mxu0
  %v1335 = vadd.f32 0.0, %v1334
  %v1336 = vpop.f32.mrb[0].mxu0
  %v1337 = vpop.f32.mrb[0].mxu0
  %v1338 = vpop.f32.mrb[0].mxu0
  %1339 = vdwg.mxu0
  %v1340 = vsub.f32 %v439, %v1335
  %v1341 = vpack.c.bf16 %v1340, %v1340
  %v1342 = vsel %vm549, %v1296, 0
  %v1345 = vsel %vm568, %v1341, 0
  %1347 = vmatprep.subr.bf16.mxu0 0
  %1348 = vmatpush1.bf16.msra.mxu0 %v1345
  %1349 = vmatprep.subr.bf16.mxu0 0
  %1350 = vmatpush1.bf16.msra.mxu0 0
  %1351 = vmatprep.subr.bf16.mxu0 0
  %1352 = vmatpush1.bf16.msra.mxu0 0
  %1353 = vmatprep.subr.bf16.mxu0 0
  %1354 = vmatpush1.bf16.msra.mxu0 0
  %1355 = vmatprep.subr.bf16.mxu0 0
  %1356 = vmatpush1.bf16.msra.mxu0 0
  %1357 = vmatprep.subr.bf16.mxu0 0
  %1358 = vmatpush1.bf16.msra.mxu0 0
  %1359 = vmatprep.subr.bf16.mxu0 0
  %1360 = vmatpush1.bf16.msra.mxu0 0
  %1361 = vmatprep.subr.bf16.mxu0 0
  %1362 = vmatpush1.bf16.msra.mxu0 0
  %1363 = vmatprep.subr.bf16.mxu0 0
  %1364 = vmatpush1.bf16.msra.mxu0 0
  %1365 = vmatprep.subr.bf16.mxu0 0
  %1366 = vmatpush1.bf16.msra.mxu0 0
  %1367 = vmatprep.subr.bf16.mxu0 0
  %1368 = vmatpush1.bf16.msra.mxu0 0
  %1369 = vmatprep.subr.bf16.mxu0 0
  %1370 = vmatpush1.bf16.msra.mxu0 0
  %1371 = vmatprep.subr.bf16.mxu0 0
  %1372 = vmatpush1.bf16.msra.mxu0 0
  %1373 = vmatprep.subr.bf16.mxu0 0
  %1374 = vmatpush1.bf16.msra.mxu0 0
  %1375 = vmatprep.subr.bf16.mxu0 0
  %1376 = vmatpush1.bf16.msra.mxu0 0
  %1377 = vmatprep.subr.bf16.mxu0 0
  %1378 = vmatpush1.bf16.msra.mxu0 0
  %1379 = vmatprep.mubr.bf16.mxu0 0
  %1380 = vmatmul.mubr.bf16.gmra.mrb[0].mxu0 %v1342
  %v1381 = vpop.f32.mrb[0].mxu0
  %v1382 = vadd.f32 0.0, %v1381
  %v1383 = vpop.f32.mrb[0].mxu0
  %v1384 = vpop.f32.mrb[0].mxu0
  %v1385 = vpop.f32.mrb[0].mxu0
  %1386 = vdwg.mxu0
  %v1387 = vpack.c.bf16 %v1382, %v1382
  %v1389 = vsel %vm568, %v1387, 0
  %1391 = vmatprep.subr.bf16.mxu0 0
  %1392 = vmatpush1.bf16.msra.mxu0 %v1389
  %1393 = vmatprep.subr.bf16.mxu0 0
  %1394 = vmatpush1.bf16.msra.mxu0 0
  %1395 = vmatprep.subr.bf16.mxu0 0
  %1396 = vmatpush1.bf16.msra.mxu0 0
  %1397 = vmatprep.subr.bf16.mxu0 0
  %1398 = vmatpush1.bf16.msra.mxu0 0
  %1399 = vmatprep.subr.bf16.mxu0 0
  %1400 = vmatpush1.bf16.msra.mxu0 0
  %1401 = vmatprep.subr.bf16.mxu0 0
  %1402 = vmatpush1.bf16.msra.mxu0 0
  %1403 = vmatprep.subr.bf16.mxu0 0
  %1404 = vmatpush1.bf16.msra.mxu0 0
  %1405 = vmatprep.subr.bf16.mxu0 0
  %1406 = vmatpush1.bf16.msra.mxu0 0
  %1407 = vmatprep.subr.bf16.mxu0 0
  %1408 = vmatpush1.bf16.msra.mxu0 0
  %1409 = vmatprep.subr.bf16.mxu0 0
  %1410 = vmatpush1.bf16.msra.mxu0 0
  %1411 = vmatprep.subr.bf16.mxu0 0
  %1412 = vmatpush1.bf16.msra.mxu0 0
  %1413 = vmatprep.subr.bf16.mxu0 0
  %1414 = vmatpush1.bf16.msra.mxu0 0
  %1415 = vmatprep.subr.bf16.mxu0 0
  %1416 = vmatpush1.bf16.msra.mxu0 0
  %1417 = vmatprep.subr.bf16.mxu0 0
  %1418 = vmatpush1.bf16.msra.mxu0 0
  %1419 = vmatprep.subr.bf16.mxu0 0
  %1420 = vmatpush1.bf16.msra.mxu0 0
  %1421 = vmatprep.subr.bf16.mxu0 0
  %1422 = vmatpush1.bf16.msra.mxu0 0
  %1423 = vmatprep.mubr.bf16.mxu0 0
  %1424 = vmatmul.mubr.bf16.gmra.mrb[0].mxu0 %v566
  %v1425 = vpop.f32.mrb[0].mxu0
  %v1426 = vadd.f32 0.0, %v1425
  %v1427 = vpop.f32.mrb[0].mxu0
  %v1428 = vpop.f32.mrb[0].mxu0
  %v1429 = vpop.f32.mrb[0].mxu0
  %1430 = vdwg.mxu0
  %v1431 = vsub.f32 %v439, %v1426
  %v1432 = vpack.c.bf16 %v1431, %v1431
  %v1433 = vsel %vm549, %v1387, 0
  %v1436 = vsel %vm568, %v1432, 0
  %1438 = vmatprep.subr.bf16.mxu0 0
  %1439 = vmatpush1.bf16.msra.mxu0 %v1436
  %1440 = vmatprep.subr.bf16.mxu0 0
  %1441 = vmatpush1.bf16.msra.mxu0 0
  %1442 = vmatprep.subr.bf16.mxu0 0
  %1443 = vmatpush1.bf16.msra.mxu0 0
  %1444 = vmatprep.subr.bf16.mxu0 0
  %1445 = vmatpush1.bf16.msra.mxu0 0
  %1446 = vmatprep.subr.bf16.mxu0 0
  %1447 = vmatpush1.bf16.msra.mxu0 0
  %1448 = vmatprep.subr.bf16.mxu0 0
  %1449 = vmatpush1.bf16.msra.mxu0 0
  %1450 = vmatprep.subr.bf16.mxu0 0
  %1451 = vmatpush1.bf16.msra.mxu0 0
  %1452 = vmatprep.subr.bf16.mxu0 0
  %1453 = vmatpush1.bf16.msra.mxu0 0
  %1454 = vmatprep.subr.bf16.mxu0 0
  %1455 = vmatpush1.bf16.msra.mxu0 0
  %1456 = vmatprep.subr.bf16.mxu0 0
  %1457 = vmatpush1.bf16.msra.mxu0 0
  %1458 = vmatprep.subr.bf16.mxu0 0
  %1459 = vmatpush1.bf16.msra.mxu0 0
  %1460 = vmatprep.subr.bf16.mxu0 0
  %1461 = vmatpush1.bf16.msra.mxu0 0
  %1462 = vmatprep.subr.bf16.mxu0 0
  %1463 = vmatpush1.bf16.msra.mxu0 0
  %1464 = vmatprep.subr.bf16.mxu0 0
  %1465 = vmatpush1.bf16.msra.mxu0 0
  %1466 = vmatprep.subr.bf16.mxu0 0
  %1467 = vmatpush1.bf16.msra.mxu0 0
  %1468 = vmatprep.subr.bf16.mxu0 0
  %1469 = vmatpush1.bf16.msra.mxu0 0
  %1470 = vmatprep.mubr.bf16.mxu0 0
  %1471 = vmatmul.mubr.bf16.gmra.mrb[0].mxu0 %v1433
  %v1472 = vpop.f32.mrb[0].mxu0
  %v1473 = vadd.f32 0.0, %v1472
  %v1474 = vpop.f32.mrb[0].mxu0
  %v1475 = vpop.f32.mrb[0].mxu0
  %v1476 = vpop.f32.mrb[0].mxu0
  %1477 = vdwg.mxu0
  %v1479 = vsel %vm549, %v547, 0
  %1481 = vmatprep.subr.mxu0 0.0
  %1482 = vmatpush1.msra.mxu0 %v1473
  %1483 = vmatprep.subr.mxu0 0.0
  %1484 = vmatpush1.msra.mxu0 0.0
  %1485 = vmatprep.subr.mxu0 0.0
  %1486 = vmatpush1.msra.mxu0 0.0
  %1487 = vmatprep.subr.mxu0 0.0
  %1488 = vmatpush1.msra.mxu0 0.0
  %1489 = vmatprep.subr.mxu0 0.0
  %1490 = vmatpush1.msra.mxu0 0.0
  %1491 = vmatprep.subr.mxu0 0.0
  %1492 = vmatpush1.msra.mxu0 0.0
  %1493 = vmatprep.subr.mxu0 0.0
  %1494 = vmatpush1.msra.mxu0 0.0
  %1495 = vmatprep.subr.mxu0 0.0
  %1496 = vmatpush1.msra.mxu0 0.0
  %1497 = vmatprep.subr.mxu0 0.0
  %1498 = vmatpush1.msra.mxu0 0.0
  %1499 = vmatprep.subr.mxu0 0.0
  %1500 = vmatpush1.msra.mxu0 0.0
  %1501 = vmatprep.subr.mxu0 0.0
  %1502 = vmatpush1.msra.mxu0 0.0
  %1503 = vmatprep.subr.mxu0 0.0
  %1504 = vmatpush1.msra.mxu0 0.0
  %1505 = vmatprep.subr.mxu0 0.0
  %1506 = vmatpush1.msra.mxu0 0.0
  %1507 = vmatprep.subr.mxu0 0.0
  %1508 = vmatpush1.msra.mxu0 0.0
  %1509 = vmatprep.subr.mxu0 0.0
  %1510 = vmatpush1.msra.mxu0 0.0
  %1511 = vmatprep.subr.mxu0 0.0
  %1512 = vmatpush1.msra.mxu0 0.0
  %1513 = vmatprep.subr.mxu0 0.0
  %1514 = vmatpush1.msra.mxu0 0.0
  %1515 = vmatprep.subr.mxu0 0.0
  %1516 = vmatpush1.msra.mxu0 0.0
  %1517 = vmatprep.subr.mxu0 0.0
  %1518 = vmatpush1.msra.mxu0 0.0
  %1519 = vmatprep.subr.mxu0 0.0
  %1520 = vmatpush1.msra.mxu0 0.0
  %1521 = vmatprep.subr.mxu0 0.0
  %1522 = vmatpush1.msra.mxu0 0.0
  %1523 = vmatprep.subr.mxu0 0.0
  %1524 = vmatpush1.msra.mxu0 0.0
  %1525 = vmatprep.subr.mxu0 0.0
  %1526 = vmatpush1.msra.mxu0 0.0
  %1527 = vmatprep.subr.mxu0 0.0
  %1528 = vmatpush1.msra.mxu0 0.0
  %1529 = vmatprep.subr.mxu0 0.0
  %1530 = vmatpush1.msra.mxu0 0.0
  %1531 = vmatprep.subr.mxu0 0.0
  %1532 = vmatpush1.msra.mxu0 0.0
  %1533 = vmatprep.subr.mxu0 0.0
  %1534 = vmatpush1.msra.mxu0 0.0
  %1535 = vmatprep.subr.mxu0 0.0
  %1536 = vmatpush1.msra.mxu0 0.0
  %1537 = vmatprep.subr.mxu0 0.0
  %1538 = vmatpush1.msra.mxu0 0.0
  %1539 = vmatprep.subr.mxu0 0.0
  %1540 = vmatpush1.msra.mxu0 0.0
  %1541 = vmatprep.subr.mxu0 0.0
  %1542 = vmatpush1.msra.mxu0 0.0
  %1543 = vmatprep.subr.mxu0 0.0
  %1544 = vmatpush1.msra.mxu0 0.0
  %1545 = vmatprep.mubr.f32.mxu0 0.0
  %1546 = vmatmul.mubr.f32.gmra.mrb[0].mxu0 %v1479
  %v1547 = vpop.f32.mrb[0].mxu0
  %v1548 = vadd.f32 0.0, %v1547
  %v1549 = vpop.f32.mrb[0].mxu0
  %1550 = vdwg.mxu0
  %v1551 = vsub.f32 %v439, %v1548
  %v1553 = vsel %vm549, %v1473, 0
  %1555 = vmatprep.subr.mxu0 0.0
  %1556 = vmatpush1.msra.mxu0 %v1551
  %1557 = vmatprep.subr.mxu0 0.0
  %1558 = vmatpush1.msra.mxu0 0.0
  %1559 = vmatprep.subr.mxu0 0.0
  %1560 = vmatpush1.msra.mxu0 0.0
  %1561 = vmatprep.subr.mxu0 0.0
  %1562 = vmatpush1.msra.mxu0 0.0
  %1563 = vmatprep.subr.mxu0 0.0
  %1564 = vmatpush1.msra.mxu0 0.0
  %1565 = vmatprep.subr.mxu0 0.0
  %1566 = vmatpush1.msra.mxu0 0.0
  %1567 = vmatprep.subr.mxu0 0.0
  %1568 = vmatpush1.msra.mxu0 0.0
  %1569 = vmatprep.subr.mxu0 0.0
  %1570 = vmatpush1.msra.mxu0 0.0
  %1571 = vmatprep.subr.mxu0 0.0
  %1572 = vmatpush1.msra.mxu0 0.0
  %1573 = vmatprep.subr.mxu0 0.0
  %1574 = vmatpush1.msra.mxu0 0.0
  %1575 = vmatprep.subr.mxu0 0.0
  %1576 = vmatpush1.msra.mxu0 0.0
  %1577 = vmatprep.subr.mxu0 0.0
  %1578 = vmatpush1.msra.mxu0 0.0
  %1579 = vmatprep.subr.mxu0 0.0
  %1580 = vmatpush1.msra.mxu0 0.0
  %1581 = vmatprep.subr.mxu0 0.0
  %1582 = vmatpush1.msra.mxu0 0.0
  %1583 = vmatprep.subr.mxu0 0.0
  %1584 = vmatpush1.msra.mxu0 0.0
  %1585 = vmatprep.subr.mxu0 0.0
  %1586 = vmatpush1.msra.mxu0 0.0
  %1587 = vmatprep.subr.mxu0 0.0
  %1588 = vmatpush1.msra.mxu0 0.0
  %1589 = vmatprep.subr.mxu0 0.0
  %1590 = vmatpush1.msra.mxu0 0.0
  %1591 = vmatprep.subr.mxu0 0.0
  %1592 = vmatpush1.msra.mxu0 0.0
  %1593 = vmatprep.subr.mxu0 0.0
  %1594 = vmatpush1.msra.mxu0 0.0
  %1595 = vmatprep.subr.mxu0 0.0
  %1596 = vmatpush1.msra.mxu0 0.0
  %1597 = vmatprep.subr.mxu0 0.0
  %1598 = vmatpush1.msra.mxu0 0.0
  %1599 = vmatprep.subr.mxu0 0.0
  %1600 = vmatpush1.msra.mxu0 0.0
  %1601 = vmatprep.subr.mxu0 0.0
  %1602 = vmatpush1.msra.mxu0 0.0
  %1603 = vmatprep.subr.mxu0 0.0
  %1604 = vmatpush1.msra.mxu0 0.0
  %1605 = vmatprep.subr.mxu0 0.0
  %1606 = vmatpush1.msra.mxu0 0.0
  %1607 = vmatprep.subr.mxu0 0.0
  %1608 = vmatpush1.msra.mxu0 0.0
  %1609 = vmatprep.subr.mxu0 0.0
  %1610 = vmatpush1.msra.mxu0 0.0
  %1611 = vmatprep.subr.mxu0 0.0
  %1612 = vmatpush1.msra.mxu0 0.0
  %1613 = vmatprep.subr.mxu0 0.0
  %1614 = vmatpush1.msra.mxu0 0.0
  %1615 = vmatprep.subr.mxu0 0.0
  %1616 = vmatpush1.msra.mxu0 0.0
  %1617 = vmatprep.subr.mxu0 0.0
  %1618 = vmatpush1.msra.mxu0 0.0
  %1619 = vmatprep.mubr.f32.mxu0 0.0
  %1620 = vmatmul.mubr.f32.gmra.mrb[0].mxu0 %v1553
  %v1621 = vpop.f32.mrb[0].mxu0
  %v1622 = vadd.f32 0.0, %v1621
  %v1623 = vpop.f32.mrb[0].mxu0
  %1624 = vdwg.mxu0
  %1625 = vmatprep.subr.mxu0 0.0
  %1626 = vmatpush1.msra.mxu0 %v1622
  %1627 = vmatprep.subr.mxu0 0.0
  %1628 = vmatpush1.msra.mxu0 0.0
  %1629 = vmatprep.subr.mxu0 0.0
  %1630 = vmatpush1.msra.mxu0 0.0
  %1631 = vmatprep.subr.mxu0 0.0
  %1632 = vmatpush1.msra.mxu0 0.0
  %1633 = vmatprep.subr.mxu0 0.0
  %1634 = vmatpush1.msra.mxu0 0.0
  %1635 = vmatprep.subr.mxu0 0.0
  %1636 = vmatpush1.msra.mxu0 0.0
  %1637 = vmatprep.subr.mxu0 0.0
  %1638 = vmatpush1.msra.mxu0 0.0
  %1639 = vmatprep.subr.mxu0 0.0
  %1640 = vmatpush1.msra.mxu0 0.0
  %1641 = vmatprep.subr.mxu0 0.0
  %1642 = vmatpush1.msra.mxu0 0.0
  %1643 = vmatprep.subr.mxu0 0.0
  %1644 = vmatpush1.msra.mxu0 0.0
  %1645 = vmatprep.subr.mxu0 0.0
  %1646 = vmatpush1.msra.mxu0 0.0
  %1647 = vmatprep.subr.mxu0 0.0
  %1648 = vmatpush1.msra.mxu0 0.0
  %1649 = vmatprep.subr.mxu0 0.0
  %1650 = vmatpush1.msra.mxu0 0.0
  %1651 = vmatprep.subr.mxu0 0.0
  %1652 = vmatpush1.msra.mxu0 0.0
  %1653 = vmatprep.subr.mxu0 0.0
  %1654 = vmatpush1.msra.mxu0 0.0
  %1655 = vmatprep.subr.mxu0 0.0
  %1656 = vmatpush1.msra.mxu0 0.0
  %1657 = vmatprep.subr.mxu0 0.0
  %1658 = vmatpush1.msra.mxu0 0.0
  %1659 = vmatprep.subr.mxu0 0.0
  %1660 = vmatpush1.msra.mxu0 0.0
  %1661 = vmatprep.subr.mxu0 0.0
  %1662 = vmatpush1.msra.mxu0 0.0
  %1663 = vmatprep.subr.mxu0 0.0
  %1664 = vmatpush1.msra.mxu0 0.0
  %1665 = vmatprep.subr.mxu0 0.0
  %1666 = vmatpush1.msra.mxu0 0.0
  %1667 = vmatprep.subr.mxu0 0.0
  %1668 = vmatpush1.msra.mxu0 0.0
  %1669 = vmatprep.subr.mxu0 0.0
  %1670 = vmatpush1.msra.mxu0 0.0
  %1671 = vmatprep.subr.mxu0 0.0
  %1672 = vmatpush1.msra.mxu0 0.0
  %1673 = vmatprep.subr.mxu0 0.0
  %1674 = vmatpush1.msra.mxu0 0.0
  %1675 = vmatprep.subr.mxu0 0.0
  %1676 = vmatpush1.msra.mxu0 0.0
  %1677 = vmatprep.subr.mxu0 0.0
  %1678 = vmatpush1.msra.mxu0 0.0
  %1679 = vmatprep.subr.mxu0 0.0
  %1680 = vmatpush1.msra.mxu0 0.0
  %1681 = vmatprep.subr.mxu0 0.0
  %1682 = vmatpush1.msra.mxu0 0.0
  %1683 = vmatprep.subr.mxu0 0.0
  %1684 = vmatpush1.msra.mxu0 0.0
  %1685 = vmatprep.subr.mxu0 0.0
  %1686 = vmatpush1.msra.mxu0 0.0
  %1687 = vmatprep.subr.mxu0 0.0
  %1688 = vmatpush1.msra.mxu0 0.0
  %1689 = vmatprep.mubr.f32.mxu0 0.0
  %1690 = vmatmul.mubr.f32.gmra.mrb[0].mxu0 %v1479
  %v1691 = vpop.f32.mrb[0].mxu0
  %v1692 = vadd.f32 0.0, %v1691
  %v1693 = vpop.f32.mrb[0].mxu0
  %1694 = vdwg.mxu0
  %v1695 = vsub.f32 %v439, %v1692
  %v1697 = vsel %vm549, %v1622, 0
  %1699 = vmatprep.subr.mxu0 0.0
  %1700 = vmatpush1.msra.mxu0 %v1695
  %1701 = vmatprep.subr.mxu0 0.0
  %1702 = vmatpush1.msra.mxu0 0.0
  %1703 = vmatprep.subr.mxu0 0.0
  %1704 = vmatpush1.msra.mxu0 0.0
  %1705 = vmatprep.subr.mxu0 0.0
  %1706 = vmatpush1.msra.mxu0 0.0
  %1707 = vmatprep.subr.mxu0 0.0
  %1708 = vmatpush1.msra.mxu0 0.0
  %1709 = vmatprep.subr.mxu0 0.0
  %1710 = vmatpush1.msra.mxu0 0.0
  %1711 = vmatprep.subr.mxu0 0.0
  %1712 = vmatpush1.msra.mxu0 0.0
  %1713 = vmatprep.subr.mxu0 0.0
  %1714 = vmatpush1.msra.mxu0 0.0
  %1715 = vmatprep.subr.mxu0 0.0
  %1716 = vmatpush1.msra.mxu0 0.0
  %1717 = vmatprep.subr.mxu0 0.0
  %1718 = vmatpush1.msra.mxu0 0.0
  %1719 = vmatprep.subr.mxu0 0.0
  %1720 = vmatpush1.msra.mxu0 0.0
  %1721 = vmatprep.subr.mxu0 0.0
  %1722 = vmatpush1.msra.mxu0 0.0
  %1723 = vmatprep.subr.mxu0 0.0
  %1724 = vmatpush1.msra.mxu0 0.0
  %1725 = vmatprep.subr.mxu0 0.0
  %1726 = vmatpush1.msra.mxu0 0.0
  %1727 = vmatprep.subr.mxu0 0.0
  %1728 = vmatpush1.msra.mxu0 0.0
  %1729 = vmatprep.subr.mxu0 0.0
  %1730 = vmatpush1.msra.mxu0 0.0
  %1731 = vmatprep.subr.mxu0 0.0
  %1732 = vmatpush1.msra.mxu0 0.0
  %1733 = vmatprep.subr.mxu0 0.0
  %1734 = vmatpush1.msra.mxu0 0.0
  %1735 = vmatprep.subr.mxu0 0.0
  %1736 = vmatpush1.msra.mxu0 0.0
  %1737 = vmatprep.subr.mxu0 0.0
  %1738 = vmatpush1.msra.mxu0 0.0
  %1739 = vmatprep.subr.mxu0 0.0
  %1740 = vmatpush1.msra.mxu0 0.0
  %1741 = vmatprep.subr.mxu0 0.0
  %1742 = vmatpush1.msra.mxu0 0.0
  %1743 = vmatprep.subr.mxu0 0.0
  %1744 = vmatpush1.msra.mxu0 0.0
  %1745 = vmatprep.subr.mxu0 0.0
  %1746 = vmatpush1.msra.mxu0 0.0
  %1747 = vmatprep.subr.mxu0 0.0
  %1748 = vmatpush1.msra.mxu0 0.0
  %1749 = vmatprep.subr.mxu0 0.0
  %1750 = vmatpush1.msra.mxu0 0.0
  %1751 = vmatprep.subr.mxu0 0.0
  %1752 = vmatpush1.msra.mxu0 0.0
  %1753 = vmatprep.subr.mxu0 0.0
  %1754 = vmatpush1.msra.mxu0 0.0
  %1755 = vmatprep.subr.mxu0 0.0
  %1756 = vmatpush1.msra.mxu0 0.0
  %1757 = vmatprep.subr.mxu0 0.0
  %1758 = vmatpush1.msra.mxu0 0.0
  %1759 = vmatprep.subr.mxu0 0.0
  %1760 = vmatpush1.msra.mxu0 0.0
  %1761 = vmatprep.subr.mxu0 0.0
  %1762 = vmatpush1.msra.mxu0 0.0
  %1763 = vmatprep.mubr.f32.mxu0 0.0
  %1764 = vmatmul.mubr.f32.gmra.mrb[0].mxu0 %v1697
  %v1765 = vpop.f32.mrb[0].mxu0
  %v1766 = vadd.f32 0.0, %v1765
  %v1767 = vpop.f32.mrb[0].mxu0
  %1768 = vdwg.mxu0
  %v1770 = vsel %vm549, %v1766, 0
  %1772 = vmatprep.subr.mxu0 0.0
  %1773 = vmatpush1.msra.mxu0 %v542
  %1774 = vmatprep.subr.mxu0 0.0
  %1775 = vmatpush1.msra.mxu0 0.0
  %1776 = vmatprep.subr.mxu0 0.0
  %1777 = vmatpush1.msra.mxu0 0.0
  %1778 = vmatprep.subr.mxu0 0.0
  %1779 = vmatpush1.msra.mxu0 0.0
  %1780 = vmatprep.subr.mxu0 0.0
  %1781 = vmatpush1.msra.mxu0 0.0
  %1782 = vmatprep.subr.mxu0 0.0
  %1783 = vmatpush1.msra.mxu0 0.0
  %1784 = vmatprep.subr.mxu0 0.0
  %1785 = vmatpush1.msra.mxu0 0.0
  %1786 = vmatprep.subr.mxu0 0.0
  %1787 = vmatpush1.msra.mxu0 0.0
  %1788 = vmatprep.subr.mxu0 0.0
  %1789 = vmatpush1.msra.mxu0 0.0
  %1790 = vmatprep.subr.mxu0 0.0
  %1791 = vmatpush1.msra.mxu0 0.0
  %1792 = vmatprep.subr.mxu0 0.0
  %1793 = vmatpush1.msra.mxu0 0.0
  %1794 = vmatprep.subr.mxu0 0.0
  %1795 = vmatpush1.msra.mxu0 0.0
  %1796 = vmatprep.subr.mxu0 0.0
  %1797 = vmatpush1.msra.mxu0 0.0
  %1798 = vmatprep.subr.mxu0 0.0
  %1799 = vmatpush1.msra.mxu0 0.0
  %1800 = vmatprep.subr.mxu0 0.0
  %1801 = vmatpush1.msra.mxu0 0.0
  %1802 = vmatprep.subr.mxu0 0.0
  %1803 = vmatpush1.msra.mxu0 0.0
  %1804 = vmatprep.subr.mxu0 0.0
  %1805 = vmatpush1.msra.mxu0 0.0
  %1806 = vmatprep.subr.mxu0 0.0
  %1807 = vmatpush1.msra.mxu0 0.0
  %1808 = vmatprep.subr.mxu0 0.0
  %1809 = vmatpush1.msra.mxu0 0.0
  %1810 = vmatprep.subr.mxu0 0.0
  %1811 = vmatpush1.msra.mxu0 0.0
  %1812 = vmatprep.subr.mxu0 0.0
  %1813 = vmatpush1.msra.mxu0 0.0
  %1814 = vmatprep.subr.mxu0 0.0
  %1815 = vmatpush1.msra.mxu0 0.0
  %1816 = vmatprep.subr.mxu0 0.0
  %1817 = vmatpush1.msra.mxu0 0.0
  %1818 = vmatprep.subr.mxu0 0.0
  %1819 = vmatpush1.msra.mxu0 0.0
  %1820 = vmatprep.subr.mxu0 0.0
  %1821 = vmatpush1.msra.mxu0 0.0
  %1822 = vmatprep.subr.mxu0 0.0
  %1823 = vmatpush1.msra.mxu0 0.0
  %1824 = vmatprep.subr.mxu0 0.0
  %1825 = vmatpush1.msra.mxu0 0.0
  %1826 = vmatprep.subr.mxu0 0.0
  %1827 = vmatpush1.msra.mxu0 0.0
  %1828 = vmatprep.subr.mxu0 0.0
  %1829 = vmatpush1.msra.mxu0 0.0
  %1830 = vmatprep.subr.mxu0 0.0
  %1831 = vmatpush1.msra.mxu0 0.0
  %1832 = vmatprep.subr.mxu0 0.0
  %1833 = vmatpush1.msra.mxu0 0.0
  %1834 = vmatprep.subr.mxu0 0.0
  %1835 = vmatpush1.msra.mxu0 0.0
  %1836 = vmatprep.mubr.f32.mxu0 0.0
  %1837 = vmatmul.mubr.f32.gmra.mrb[0].mxu0 %v1770
  %v1838 = vpop.f32.mrb[0].mxu0
  %v1839 = vadd.f32 0.0, %v1838
  %v1840 = vpop.f32.mrb[0].mxu0
  %1841 = vdwg.mxu0
  %v1842 = vmul.f32 %v542, 0.25
  %v1844 = vsel %vm549, %v542, 0
  %1846 = vmatprep.subr.mxu0 0.0
  %1847 = vmatpush1.msra.mxu0 %v1839
  %1848 = vmatprep.subr.mxu0 0.0
  %1849 = vmatpush1.msra.mxu0 0.0
  %1850 = vmatprep.subr.mxu0 0.0
  %1851 = vmatpush1.msra.mxu0 0.0
  %1852 = vmatprep.subr.mxu0 0.0
  %1853 = vmatpush1.msra.mxu0 0.0
  %1854 = vmatprep.subr.mxu0 0.0
  %1855 = vmatpush1.msra.mxu0 0.0
  %1856 = vmatprep.subr.mxu0 0.0
  %1857 = vmatpush1.msra.mxu0 0.0
  %1858 = vmatprep.subr.mxu0 0.0
  %1859 = vmatpush1.msra.mxu0 0.0
  %1860 = vmatprep.subr.mxu0 0.0
  %1861 = vmatpush1.msra.mxu0 0.0
  %1862 = vmatprep.subr.mxu0 0.0
  %1863 = vmatpush1.msra.mxu0 0.0
  %1864 = vmatprep.subr.mxu0 0.0
  %1865 = vmatpush1.msra.mxu0 0.0
  %1866 = vmatprep.subr.mxu0 0.0
  %1867 = vmatpush1.msra.mxu0 0.0
  %1868 = vmatprep.subr.mxu0 0.0
  %1869 = vmatpush1.msra.mxu0 0.0
  %1870 = vmatprep.subr.mxu0 0.0
  %1871 = vmatpush1.msra.mxu0 0.0
  %1872 = vmatprep.subr.mxu0 0.0
  %1873 = vmatpush1.msra.mxu0 0.0
  %1874 = vmatprep.subr.mxu0 0.0
  %1875 = vmatpush1.msra.mxu0 0.0
  %1876 = vmatprep.subr.mxu0 0.0
  %1877 = vmatpush1.msra.mxu0 0.0
  %1878 = vmatprep.subr.mxu0 0.0
  %1879 = vmatpush1.msra.mxu0 0.0
  %1880 = vmatprep.subr.mxu0 0.0
  %1881 = vmatpush1.msra.mxu0 0.0
  %1882 = vmatprep.subr.mxu0 0.0
  %1883 = vmatpush1.msra.mxu0 0.0
  %1884 = vmatprep.subr.mxu0 0.0
  %1885 = vmatpush1.msra.mxu0 0.0
  %1886 = vmatprep.subr.mxu0 0.0
  %1887 = vmatpush1.msra.mxu0 0.0
  %1888 = vmatprep.subr.mxu0 0.0
  %1889 = vmatpush1.msra.mxu0 0.0
  %1890 = vmatprep.subr.mxu0 0.0
  %1891 = vmatpush1.msra.mxu0 0.0
  %1892 = vmatprep.subr.mxu0 0.0
  %1893 = vmatpush1.msra.mxu0 0.0
  %1894 = vmatprep.subr.mxu0 0.0
  %1895 = vmatpush1.msra.mxu0 0.0
  %1896 = vmatprep.subr.mxu0 0.0
  %1897 = vmatpush1.msra.mxu0 0.0
  %1898 = vmatprep.subr.mxu0 0.0
  %1899 = vmatpush1.msra.mxu0 0.0
  %1900 = vmatprep.subr.mxu0 0.0
  %1901 = vmatpush1.msra.mxu0 0.0
  %1902 = vmatprep.subr.mxu0 0.0
  %1903 = vmatpush1.msra.mxu0 0.0
  %1904 = vmatprep.subr.mxu0 0.0
  %1905 = vmatpush1.msra.mxu0 0.0
  %1906 = vmatprep.subr.mxu0 0.0
  %1907 = vmatpush1.msra.mxu0 0.0
  %1908 = vmatprep.subr.mxu0 0.0
  %1909 = vmatpush1.msra.mxu0 0.0
  %1910 = vmatprep.mubr.f32.mxu0 0.0
  %1911 = vmatmul.mubr.f32.gmra.mrb[0].mxu0 %v1844
  %v1912 = vpop.f32.mrb[0].mxu0
  %v1913 = vadd.f32 0.0, %v1912
  %v1914 = vpop.f32.mrb[0].mxu0
  %1915 = vdwg.mxu0
  %v1916 = vmul.f32 %v1913, 0.125
  %v1917 = vsub.f32 %v1842, %v1916
  %v1918 = vmul.f32 %v274, 0.25
  %v1919 = vmul.f32 %v279, 0.25
  %v1921 = vsel %vm549, %v274, 0
  %v1924 = vsel %vm549, %v279, 0
  %1926 = vmatprep.subr.mxu0 0.0
  %1927 = vmatpush1.msra.mxu0 %v1839
  %1928 = vmatprep.subr.mxu0 0.0
  %1929 = vmatpush1.msra.mxu0 0.0
  %1930 = vmatprep.subr.mxu0 0.0
  %1931 = vmatpush1.msra.mxu0 0.0
  %1932 = vmatprep.subr.mxu0 0.0
  %1933 = vmatpush1.msra.mxu0 0.0
  %1934 = vmatprep.subr.mxu0 0.0
  %1935 = vmatpush1.msra.mxu0 0.0
  %1936 = vmatprep.subr.mxu0 0.0
  %1937 = vmatpush1.msra.mxu0 0.0
  %1938 = vmatprep.subr.mxu0 0.0
  %1939 = vmatpush1.msra.mxu0 0.0
  %1940 = vmatprep.subr.mxu0 0.0
  %1941 = vmatpush1.msra.mxu0 0.0
  %1942 = vmatprep.subr.mxu0 0.0
  %1943 = vmatpush1.msra.mxu0 0.0
  %1944 = vmatprep.subr.mxu0 0.0
  %1945 = vmatpush1.msra.mxu0 0.0
  %1946 = vmatprep.subr.mxu0 0.0
  %1947 = vmatpush1.msra.mxu0 0.0
  %1948 = vmatprep.subr.mxu0 0.0
  %1949 = vmatpush1.msra.mxu0 0.0
  %1950 = vmatprep.subr.mxu0 0.0
  %1951 = vmatpush1.msra.mxu0 0.0
  %1952 = vmatprep.subr.mxu0 0.0
  %1953 = vmatpush1.msra.mxu0 0.0
  %1954 = vmatprep.subr.mxu0 0.0
  %1955 = vmatpush1.msra.mxu0 0.0
  %1956 = vmatprep.subr.mxu0 0.0
  %1957 = vmatpush1.msra.mxu0 0.0
  %1958 = vmatprep.subr.mxu0 0.0
  %1959 = vmatpush1.msra.mxu0 0.0
  %1960 = vmatprep.subr.mxu0 0.0
  %1961 = vmatpush1.msra.mxu0 0.0
  %1962 = vmatprep.subr.mxu0 0.0
  %1963 = vmatpush1.msra.mxu0 0.0
  %1964 = vmatprep.subr.mxu0 0.0
  %1965 = vmatpush1.msra.mxu0 0.0
  %1966 = vmatprep.subr.mxu0 0.0
  %1967 = vmatpush1.msra.mxu0 0.0
  %1968 = vmatprep.subr.mxu0 0.0
  %1969 = vmatpush1.msra.mxu0 0.0
  %1970 = vmatprep.subr.mxu0 0.0
  %1971 = vmatpush1.msra.mxu0 0.0
  %1972 = vmatprep.subr.mxu0 0.0
  %1973 = vmatpush1.msra.mxu0 0.0
  %1974 = vmatprep.subr.mxu0 0.0
  %1975 = vmatpush1.msra.mxu0 0.0
  %1976 = vmatprep.subr.mxu0 0.0
  %1977 = vmatpush1.msra.mxu0 0.0
  %1978 = vmatprep.subr.mxu0 0.0
  %1979 = vmatpush1.msra.mxu0 0.0
  %1980 = vmatprep.subr.mxu0 0.0
  %1981 = vmatpush1.msra.mxu0 0.0
  %1982 = vmatprep.subr.mxu0 0.0
  %1983 = vmatpush1.msra.mxu0 0.0
  %1984 = vmatprep.subr.mxu0 0.0
  %1985 = vmatpush1.msra.mxu0 0.0
  %1986 = vmatprep.subr.mxu0 0.0
  %1987 = vmatpush1.msra.mxu0 0.0
  %1988 = vmatprep.subr.mxu0 0.0
  %1989 = vmatpush1.msra.mxu0 0.0
  %1990 = vmatprep.mubr.f32.mxu0 0.0
  %1991 = vmatmul.mubr.f32.gmra.mrb[0].mxu0 %v1921
  %v1992 = vpop.f32.mrb[0].mxu0
  %v1993 = vadd.f32 0.0, %v1992
  %v1994 = vpop.f32.mrb[0].mxu0
  %1995 = vmatprep.mubr.f32.mxu0 0.0
  %1996 = vmatmul.mubr.f32.gmra.mrb[0].mxu0 %v1924
  %v1997 = vpop.f32.mrb[0].mxu0
  %v1998 = vadd.f32 0.0, %v1997
  %v1999 = vpop.f32.mrb[0].mxu0
  %2000 = vdwg.mxu0
  %v2001 = vmul.f32 %v1993, 0.125
  %v2002 = vmul.f32 %v1998, 0.125
  %v2003 = vsub.f32 %v1918, %v2001
  %v2004 = vsub.f32 %v1919, %v2002
  %2005 = vmatprep.subr.mxu0 0.0
  %2006 = vmatpush1.msra.mxu0 %v2003
  %2007 = vmatprep.subr.mxu0 0.0
  %2008 = vmatpush1.msra.mxu0 %v2004
  %2009 = vmatprep.subr.mxu0 0.0
  %2010 = vmatpush1.msra.mxu0 0.0
  %2011 = vmatprep.subr.mxu0 0.0
  %2012 = vmatpush1.msra.mxu0 0.0
  %2013 = vmatprep.subr.mxu0 0.0
  %2014 = vmatpush1.msra.mxu0 0.0
  %2015 = vmatprep.subr.mxu0 0.0
  %2016 = vmatpush1.msra.mxu0 0.0
  %2017 = vmatprep.subr.mxu0 0.0
  %2018 = vmatpush1.msra.mxu0 0.0
  %2019 = vmatprep.subr.mxu0 0.0
  %2020 = vmatpush1.msra.mxu0 0.0
  %2021 = vmatprep.subr.mxu0 0.0
  %2022 = vmatpush1.msra.mxu0 0.0
  %2023 = vmatprep.subr.mxu0 0.0
  %2024 = vmatpush1.msra.mxu0 0.0
  %2025 = vmatprep.subr.mxu0 0.0
  %2026 = vmatpush1.msra.mxu0 0.0
  %2027 = vmatprep.subr.mxu0 0.0
  %2028 = vmatpush1.msra.mxu0 0.0
  %2029 = vmatprep.subr.mxu0 0.0
  %2030 = vmatpush1.msra.mxu0 0.0
  %2031 = vmatprep.subr.mxu0 0.0
  %2032 = vmatpush1.msra.mxu0 0.0
  %2033 = vmatprep.subr.mxu0 0.0
  %2034 = vmatpush1.msra.mxu0 0.0
  %2035 = vmatprep.subr.mxu0 0.0
  %2036 = vmatpush1.msra.mxu0 0.0
  %2037 = vmatprep.subr.mxu0 0.0
  %2038 = vmatpush1.msra.mxu0 0.0
  %2039 = vmatprep.subr.mxu0 0.0
  %2040 = vmatpush1.msra.mxu0 0.0
  %2041 = vmatprep.subr.mxu0 0.0
  %2042 = vmatpush1.msra.mxu0 0.0
  %2043 = vmatprep.subr.mxu0 0.0
  %2044 = vmatpush1.msra.mxu0 0.0
  %2045 = vmatprep.subr.mxu0 0.0
  %2046 = vmatpush1.msra.mxu0 0.0
  %2047 = vmatprep.subr.mxu0 0.0
  %2048 = vmatpush1.msra.mxu0 0.0
  %2049 = vmatprep.subr.mxu0 0.0
  %2050 = vmatpush1.msra.mxu0 0.0
  %2051 = vmatprep.subr.mxu0 0.0
  %2052 = vmatpush1.msra.mxu0 0.0
  %2053 = vmatprep.subr.mxu0 0.0
  %2054 = vmatpush1.msra.mxu0 0.0
  %2055 = vmatprep.subr.mxu0 0.0
  %2056 = vmatpush1.msra.mxu0 0.0
  %2057 = vmatprep.subr.mxu0 0.0
  %2058 = vmatpush1.msra.mxu0 0.0
  %2059 = vmatprep.subr.mxu0 0.0
  %2060 = vmatpush1.msra.mxu0 0.0
  %2061 = vmatprep.subr.mxu0 0.0
  %2062 = vmatpush1.msra.mxu0 0.0
  %2063 = vmatprep.subr.mxu0 0.0
  %2064 = vmatpush1.msra.mxu0 0.0
  %2065 = vmatprep.subr.mxu0 0.0
  %2066 = vmatpush1.msra.mxu0 0.0
  %2067 = vmatprep.subr.mxu0 0.0
  %2068 = vmatpush1.msra.mxu0 0.0
  %2069 = vmatprep.mubr.f32.mxu0 0.0
  %2070 = vmatmul.mubr.f32.gmra.mrb[0].mxu0 %v27
  %v2071 = vpop.f32.mrb[0].mxu0
  %v2072 = vadd.f32 0.0, %v2071
  %v2073 = vpop.f32.mrb[0].mxu0
  %2074 = vmatprep.mubr.f32.mxu0 0.0
  %2075 = vmatmul.mubr.f32.gmra.mrb[0].mxu0 %v30
  %v2076 = vpop.f32.mrb[0].mxu0
  %v2077 = vadd.f32 0.0, %v2076
  %v2078 = vpop.f32.mrb[0].mxu0
  %2079 = vdwg.mxu0
  %v2080 = vadd.f32 %v2003, %v2072
  %v2081 = vadd.f32 %v2004, %v2077
  %v2083 = vsel %vm25, %v349, 0
  %v2086 = vsel %vm25, %v354, 0
  %2088 = vmatprep.subr.mxu0 0.0
  %2089 = vmatpush1.msra.mxu0 %v2003
  %2090 = vmatprep.subr.mxu0 0.0
  %2091 = vmatpush1.msra.mxu0 %v2004
  %2092 = vmatprep.subr.mxu0 0.0
  %2093 = vmatpush1.msra.mxu0 0.0
  %2094 = vmatprep.subr.mxu0 0.0
  %2095 = vmatpush1.msra.mxu0 0.0
  %2096 = vmatprep.subr.mxu0 0.0
  %2097 = vmatpush1.msra.mxu0 0.0
  %2098 = vmatprep.subr.mxu0 0.0
  %2099 = vmatpush1.msra.mxu0 0.0
  %2100 = vmatprep.subr.mxu0 0.0
  %2101 = vmatpush1.msra.mxu0 0.0
  %2102 = vmatprep.subr.mxu0 0.0
  %2103 = vmatpush1.msra.mxu0 0.0
  %2104 = vmatprep.subr.mxu0 0.0
  %2105 = vmatpush1.msra.mxu0 0.0
  %2106 = vmatprep.subr.mxu0 0.0
  %2107 = vmatpush1.msra.mxu0 0.0
  %2108 = vmatprep.subr.mxu0 0.0
  %2109 = vmatpush1.msra.mxu0 0.0
  %2110 = vmatprep.subr.mxu0 0.0
  %2111 = vmatpush1.msra.mxu0 0.0
  %2112 = vmatprep.subr.mxu0 0.0
  %2113 = vmatpush1.msra.mxu0 0.0
  %2114 = vmatprep.subr.mxu0 0.0
  %2115 = vmatpush1.msra.mxu0 0.0
  %2116 = vmatprep.subr.mxu0 0.0
  %2117 = vmatpush1.msra.mxu0 0.0
  %2118 = vmatprep.subr.mxu0 0.0
  %2119 = vmatpush1.msra.mxu0 0.0
  %2120 = vmatprep.subr.mxu0 0.0
  %2121 = vmatpush1.msra.mxu0 0.0
  %2122 = vmatprep.subr.mxu0 0.0
  %2123 = vmatpush1.msra.mxu0 0.0
  %2124 = vmatprep.subr.mxu0 0.0
  %2125 = vmatpush1.msra.mxu0 0.0
  %2126 = vmatprep.subr.mxu0 0.0
  %2127 = vmatpush1.msra.mxu0 0.0
  %2128 = vmatprep.subr.mxu0 0.0
  %2129 = vmatpush1.msra.mxu0 0.0
  %2130 = vmatprep.subr.mxu0 0.0
  %2131 = vmatpush1.msra.mxu0 0.0
  %2132 = vmatprep.subr.mxu0 0.0
  %2133 = vmatpush1.msra.mxu0 0.0
  %2134 = vmatprep.subr.mxu0 0.0
  %2135 = vmatpush1.msra.mxu0 0.0
  %2136 = vmatprep.subr.mxu0 0.0
  %2137 = vmatpush1.msra.mxu0 0.0
  %2138 = vmatprep.subr.mxu0 0.0
  %2139 = vmatpush1.msra.mxu0 0.0
  %2140 = vmatprep.subr.mxu0 0.0
  %2141 = vmatpush1.msra.mxu0 0.0
  %2142 = vmatprep.subr.mxu0 0.0
  %2143 = vmatpush1.msra.mxu0 0.0
  %2144 = vmatprep.subr.mxu0 0.0
  %2145 = vmatpush1.msra.mxu0 0.0
  %2146 = vmatprep.subr.mxu0 0.0
  %2147 = vmatpush1.msra.mxu0 0.0
  %2148 = vmatprep.subr.mxu0 0.0
  %2149 = vmatpush1.msra.mxu0 0.0
  %2150 = vmatprep.subr.mxu0 0.0
  %2151 = vmatpush1.msra.mxu0 0.0
  %2152 = vmatprep.mubr.f32.mxu0 0.0
  %2153 = vmatmul.mubr.f32.gmra.mrb[0].mxu0 %v2083
  %v2154 = vpop.f32.mrb[0].mxu0
  %v2155 = vadd.f32 0.0, %v2154
  %v2156 = vpop.f32.mrb[0].mxu0
  %2157 = vmatprep.mubr.f32.mxu0 0.0
  %2158 = vmatmul.mubr.f32.gmra.mrb[0].mxu0 %v2086
  %v2159 = vpop.f32.mrb[0].mxu0
  %v2160 = vadd.f32 0.0, %v2159
  %v2161 = vpop.f32.mrb[0].mxu0
  %2162 = vdwg.mxu0
  %v2163 = vadd.f32 %v2080, %v2155
  %v2164 = vadd.f32 %v2081, %v2160
  %v2166 = vsel %vm25, %v424, 0
  %v2169 = vsel %vm25, %v429, 0
  %2171 = vmatprep.subr.mxu0 0.0
  %2172 = vmatpush1.msra.mxu0 %v2003
  %2173 = vmatprep.subr.mxu0 0.0
  %2174 = vmatpush1.msra.mxu0 %v2004
  %2175 = vmatprep.subr.mxu0 0.0
  %2176 = vmatpush1.msra.mxu0 0.0
  %2177 = vmatprep.subr.mxu0 0.0
  %2178 = vmatpush1.msra.mxu0 0.0
  %2179 = vmatprep.subr.mxu0 0.0
  %2180 = vmatpush1.msra.mxu0 0.0
  %2181 = vmatprep.subr.mxu0 0.0
  %2182 = vmatpush1.msra.mxu0 0.0
  %2183 = vmatprep.subr.mxu0 0.0
  %2184 = vmatpush1.msra.mxu0 0.0
  %2185 = vmatprep.subr.mxu0 0.0
  %2186 = vmatpush1.msra.mxu0 0.0
  %2187 = vmatprep.subr.mxu0 0.0
  %2188 = vmatpush1.msra.mxu0 0.0
  %2189 = vmatprep.subr.mxu0 0.0
  %2190 = vmatpush1.msra.mxu0 0.0
  %2191 = vmatprep.subr.mxu0 0.0
  %2192 = vmatpush1.msra.mxu0 0.0
  %2193 = vmatprep.subr.mxu0 0.0
  %2194 = vmatpush1.msra.mxu0 0.0
  %2195 = vmatprep.subr.mxu0 0.0
  %2196 = vmatpush1.msra.mxu0 0.0
  %2197 = vmatprep.subr.mxu0 0.0
  %2198 = vmatpush1.msra.mxu0 0.0
  %2199 = vmatprep.subr.mxu0 0.0
  %2200 = vmatpush1.msra.mxu0 0.0
  %2201 = vmatprep.subr.mxu0 0.0
  %2202 = vmatpush1.msra.mxu0 0.0
  %2203 = vmatprep.subr.mxu0 0.0
  %2204 = vmatpush1.msra.mxu0 0.0
  %2205 = vmatprep.subr.mxu0 0.0
  %2206 = vmatpush1.msra.mxu0 0.0
  %2207 = vmatprep.subr.mxu0 0.0
  %2208 = vmatpush1.msra.mxu0 0.0
  %2209 = vmatprep.subr.mxu0 0.0
  %2210 = vmatpush1.msra.mxu0 0.0
  %2211 = vmatprep.subr.mxu0 0.0
  %2212 = vmatpush1.msra.mxu0 0.0
  %2213 = vmatprep.subr.mxu0 0.0
  %2214 = vmatpush1.msra.mxu0 0.0
  %2215 = vmatprep.subr.mxu0 0.0
  %2216 = vmatpush1.msra.mxu0 0.0
  %2217 = vmatprep.subr.mxu0 0.0
  %2218 = vmatpush1.msra.mxu0 0.0
  %2219 = vmatprep.subr.mxu0 0.0
  %2220 = vmatpush1.msra.mxu0 0.0
  %2221 = vmatprep.subr.mxu0 0.0
  %2222 = vmatpush1.msra.mxu0 0.0
  %2223 = vmatprep.subr.mxu0 0.0
  %2224 = vmatpush1.msra.mxu0 0.0
  %2225 = vmatprep.subr.mxu0 0.0
  %2226 = vmatpush1.msra.mxu0 0.0
  %2227 = vmatprep.subr.mxu0 0.0
  %2228 = vmatpush1.msra.mxu0 0.0
  %2229 = vmatprep.subr.mxu0 0.0
  %2230 = vmatpush1.msra.mxu0 0.0
  %2231 = vmatprep.subr.mxu0 0.0
  %2232 = vmatpush1.msra.mxu0 0.0
  %2233 = vmatprep.subr.mxu0 0.0
  %2234 = vmatpush1.msra.mxu0 0.0
  %2235 = vmatprep.mubr.f32.mxu0 0.0
  %2236 = vmatmul.mubr.f32.gmra.mrb[0].mxu0 %v2166
  %v2237 = vpop.f32.mrb[0].mxu0
  %v2238 = vadd.f32 0.0, %v2237
  %v2239 = vpop.f32.mrb[0].mxu0
  %2240 = vmatprep.mubr.f32.mxu0 0.0
  %2241 = vmatmul.mubr.f32.gmra.mrb[0].mxu0 %v2169
  %v2242 = vpop.f32.mrb[0].mxu0
  %v2243 = vadd.f32 0.0, %v2242
  %v2244 = vpop.f32.mrb[0].mxu0
  %2245 = vdwg.mxu0
  %v2246 = vadd.f32 %v2163, %v2238
  %v2247 = vadd.f32 %v2164, %v2243
  %2248 = vmatprep.subr.mxu0 0.0
  %2249 = vmatpush1.msra.mxu0 %v1917
  %2250 = vmatprep.subr.mxu0 0.0
  %2251 = vmatpush1.msra.mxu0 0.0
  %2252 = vmatprep.subr.mxu0 0.0
  %2253 = vmatpush1.msra.mxu0 0.0
  %2254 = vmatprep.subr.mxu0 0.0
  %2255 = vmatpush1.msra.mxu0 0.0
  %2256 = vmatprep.subr.mxu0 0.0
  %2257 = vmatpush1.msra.mxu0 0.0
  %2258 = vmatprep.subr.mxu0 0.0
  %2259 = vmatpush1.msra.mxu0 0.0
  %2260 = vmatprep.subr.mxu0 0.0
  %2261 = vmatpush1.msra.mxu0 0.0
  %2262 = vmatprep.subr.mxu0 0.0
  %2263 = vmatpush1.msra.mxu0 0.0
  %2264 = vmatprep.subr.mxu0 0.0
  %2265 = vmatpush1.msra.mxu0 0.0
  %2266 = vmatprep.subr.mxu0 0.0
  %2267 = vmatpush1.msra.mxu0 0.0
  %2268 = vmatprep.subr.mxu0 0.0
  %2269 = vmatpush1.msra.mxu0 0.0
  %2270 = vmatprep.subr.mxu0 0.0
  %2271 = vmatpush1.msra.mxu0 0.0
  %2272 = vmatprep.subr.mxu0 0.0
  %2273 = vmatpush1.msra.mxu0 0.0
  %2274 = vmatprep.subr.mxu0 0.0
  %2275 = vmatpush1.msra.mxu0 0.0
  %2276 = vmatprep.subr.mxu0 0.0
  %2277 = vmatpush1.msra.mxu0 0.0
  %2278 = vmatprep.subr.mxu0 0.0
  %2279 = vmatpush1.msra.mxu0 0.0
  %2280 = vmatprep.subr.mxu0 0.0
  %2281 = vmatpush1.msra.mxu0 0.0
  %2282 = vmatprep.subr.mxu0 0.0
  %2283 = vmatpush1.msra.mxu0 0.0
  %2284 = vmatprep.subr.mxu0 0.0
  %2285 = vmatpush1.msra.mxu0 0.0
  %2286 = vmatprep.subr.mxu0 0.0
  %2287 = vmatpush1.msra.mxu0 0.0
  %2288 = vmatprep.subr.mxu0 0.0
  %2289 = vmatpush1.msra.mxu0 0.0
  %2290 = vmatprep.subr.mxu0 0.0
  %2291 = vmatpush1.msra.mxu0 0.0
  %2292 = vmatprep.subr.mxu0 0.0
  %2293 = vmatpush1.msra.mxu0 0.0
  %2294 = vmatprep.subr.mxu0 0.0
  %2295 = vmatpush1.msra.mxu0 0.0
  %2296 = vmatprep.subr.mxu0 0.0
  %2297 = vmatpush1.msra.mxu0 0.0
  %2298 = vmatprep.subr.mxu0 0.0
  %2299 = vmatpush1.msra.mxu0 0.0
  %2300 = vmatprep.subr.mxu0 0.0
  %2301 = vmatpush1.msra.mxu0 0.0
  %2302 = vmatprep.subr.mxu0 0.0
  %2303 = vmatpush1.msra.mxu0 0.0
  %2304 = vmatprep.subr.mxu0 0.0
  %2305 = vmatpush1.msra.mxu0 0.0
  %2306 = vmatprep.subr.mxu0 0.0
  %2307 = vmatpush1.msra.mxu0 0.0
  %2308 = vmatprep.subr.mxu0 0.0
  %2309 = vmatpush1.msra.mxu0 0.0
  %2310 = vmatprep.subr.mxu0 0.0
  %2311 = vmatpush1.msra.mxu0 0.0
  %2312 = vmatprep.mubr.f32.mxu0 0.0
  %2313 = vmatmul.mubr.f32.gmra.mrb[0].mxu0 %v1921
  %v2314 = vpop.f32.mrb[0].mxu0
  %v2315 = vadd.f32 0.0, %v2314
  %v2316 = vpop.f32.mrb[0].mxu0
  %2317 = vmatprep.mubr.f32.mxu0 0.0
  %2318 = vmatmul.mubr.f32.gmra.mrb[0].mxu0 %v1924
  %v2319 = vpop.f32.mrb[0].mxu0
  %v2320 = vadd.f32 0.0, %v2319
  %v2321 = vpop.f32.mrb[0].mxu0
  %2322 = vdwg.mxu0
  %v2323 = vmul.f32 %v2315, 0.5
  %v2324 = vmul.f32 %v2320, 0.5
  %v2325 = vadd.f32 %v2323, %v2246
  %v2326 = vadd.f32 %v2324, %v2247
  %v2327 = vmul.f32 %v2315, 0.25
  %v2328 = vmul.f32 %v2320, 0.25
  %v2329 = vsub.f32 %v2325, %v2327
  %v2330 = vsub.f32 %v2326, %v2328
  %v2331 = vmul.f32 %v274, 0.5
  %v2332 = vmul.f32 %v279, 0.5
  %v2333 = vadd.f32 %v2329, %v2331
  %v2334 = vadd.f32 %v2330, %v2332
  %2335 = vxpose.xlu0.b32.start [1/16] %v2333, 128
  %2336 = vxpose.xlu0.b32.cont [2/16] %v2334, 128
  %2337 = vxpose.xlu0.b32.cont [3/16] 0.0, 128
  %2338 = vxpose.xlu0.b32.cont [4/16] 0.0, 128
  %2339 = vxpose.xlu0.b32.cont [5/16] 0.0, 128
  %2340 = vxpose.xlu0.b32.cont [6/16] 0.0, 128
  %2341 = vxpose.xlu0.b32.cont [7/16] 0.0, 128
  %2342 = vxpose.xlu0.b32.cont [8/16] 0.0, 128
  %2343 = vxpose.xlu0.b32.cont [9/16] 0.0, 128
  %2344 = vxpose.xlu0.b32.cont [10/16] 0.0, 128
  %2345 = vxpose.xlu0.b32.cont [11/16] 0.0, 128
  %2346 = vxpose.xlu0.b32.cont [12/16] 0.0, 128
  %2347 = vxpose.xlu0.b32.cont [13/16] 0.0, 128
  %2348 = vxpose.xlu0.b32.cont [14/16] 0.0, 128
  %2349 = vxpose.xlu0.b32.cont [15/16] 0.0, 128
  %2350 = vxpose.xlu0.b32.end [16/16] 0.0, 128
  %v2351 = vpop.trf.xlu0
  %v2352 = vpop.trf.xlu0
  %v2353 = vpop.trf.xlu0
  %v2354 = vpop.trf.xlu0
  %v2355 = vpop.trf.xlu0
  %v2356 = vpop.trf.xlu0
  %v2357 = vpop.trf.xlu0
  %v2358 = vpop.trf.xlu0
  %v2359 = vpop.trf.xlu0
  %v2360 = vpop.trf.xlu0
  %v2361 = vpop.trf.xlu0
  %v2362 = vpop.trf.xlu0
  %v2363 = vpop.trf.xlu0
  %v2364 = vpop.trf.xlu0
  %v2365 = vpop.trf.xlu0
  %v2366 = vpop.trf.xlu0
  %v2368 = vsel %vm25, %v2351, 0
  %2370 = vmatprep.subr.mxu0 0.0
  %2371 = vmatpush1.msra.mxu0 %v2333
  %2372 = vmatprep.subr.mxu0 0.0
  %2373 = vmatpush1.msra.mxu0 %v2334
  %2374 = vmatprep.subr.mxu0 0.0
  %2375 = vmatpush1.msra.mxu0 0.0
  %2376 = vmatprep.subr.mxu0 0.0
  %2377 = vmatpush1.msra.mxu0 0.0
  %2378 = vmatprep.subr.mxu0 0.0
  %2379 = vmatpush1.msra.mxu0 0.0
  %2380 = vmatprep.subr.mxu0 0.0
  %2381 = vmatpush1.msra.mxu0 0.0
  %2382 = vmatprep.subr.mxu0 0.0
  %2383 = vmatpush1.msra.mxu0 0.0
  %2384 = vmatprep.subr.mxu0 0.0
  %2385 = vmatpush1.msra.mxu0 0.0
  %2386 = vmatprep.subr.mxu0 0.0
  %2387 = vmatpush1.msra.mxu0 0.0
  %2388 = vmatprep.subr.mxu0 0.0
  %2389 = vmatpush1.msra.mxu0 0.0
  %2390 = vmatprep.subr.mxu0 0.0
  %2391 = vmatpush1.msra.mxu0 0.0
  %2392 = vmatprep.subr.mxu0 0.0
  %2393 = vmatpush1.msra.mxu0 0.0
  %2394 = vmatprep.subr.mxu0 0.0
  %2395 = vmatpush1.msra.mxu0 0.0
  %2396 = vmatprep.subr.mxu0 0.0
  %2397 = vmatpush1.msra.mxu0 0.0
  %2398 = vmatprep.subr.mxu0 0.0
  %2399 = vmatpush1.msra.mxu0 0.0
  %2400 = vmatprep.subr.mxu0 0.0
  %2401 = vmatpush1.msra.mxu0 0.0
  %2402 = vmatprep.subr.mxu0 0.0
  %2403 = vmatpush1.msra.mxu0 0.0
  %2404 = vmatprep.subr.mxu0 0.0
  %2405 = vmatpush1.msra.mxu0 0.0
  %2406 = vmatprep.subr.mxu0 0.0
  %2407 = vmatpush1.msra.mxu0 0.0
  %2408 = vmatprep.subr.mxu0 0.0
  %2409 = vmatpush1.msra.mxu0 0.0
  %2410 = vmatprep.subr.mxu0 0.0
  %2411 = vmatpush1.msra.mxu0 0.0
  %2412 = vmatprep.subr.mxu0 0.0
  %2413 = vmatpush1.msra.mxu0 0.0
  %2414 = vmatprep.subr.mxu0 0.0
  %2415 = vmatpush1.msra.mxu0 0.0
  %2416 = vmatprep.subr.mxu0 0.0
  %2417 = vmatpush1.msra.mxu0 0.0
  %2418 = vmatprep.subr.mxu0 0.0
  %2419 = vmatpush1.msra.mxu0 0.0
  %2420 = vmatprep.subr.mxu0 0.0
  %2421 = vmatpush1.msra.mxu0 0.0
  %2422 = vmatprep.subr.mxu0 0.0
  %2423 = vmatpush1.msra.mxu0 0.0
  %2424 = vmatprep.subr.mxu0 0.0
  %2425 = vmatpush1.msra.mxu0 0.0
  %2426 = vmatprep.subr.mxu0 0.0
  %2427 = vmatpush1.msra.mxu0 0.0
  %2428 = vmatprep.subr.mxu0 0.0
  %2429 = vmatpush1.msra.mxu0 0.0
  %2430 = vmatprep.subr.mxu0 0.0
  %2431 = vmatpush1.msra.mxu0 0.0
  %2432 = vmatprep.subr.mxu0 0.0
  %2433 = vmatpush1.msra.mxu0 0.0
  %2434 = vmatprep.mubr.f32.mxu0 0.0
  %2435 = vmatmul.mubr.f32.gmra.mrb[0].mxu0 %v2368
  %v2436 = vpop.f32.mrb[0].mxu0
  %v2437 = vadd.f32 0.0, %v2436
  %v2438 = vpop.f32.mrb[0].mxu0
  %2439 = vdwg.mxu0
  %v2440 = vmul.f32 %v2437, 0.5
  %v2441 = vadd.f32 %v545, %v2440
  %v2442 = vand.u32 2147483647, %v2441
  %v2443 = vsel %vm549, %v2442, 0.0
  %2444 = vadd.xlane.f32.xlu0 %v2443
  %v2445 = vpop.xlane.xlu0 %2444
  %v2446 = vrot.slane %v2445, 4
  %v2447 = vmax.f32 %v2445, %v2446
  %v2448 = vrot.slane %v2447, 2
  %v2449 = vmax.f32 %v2447, %v2448
  %v2450 = vrot.slane %v2449, 1
  %v2451 = vmax.f32 %v2449, %v2450
  %v2452 = vadd.f32 %v2451, 4.0
  %v2453 = vrcp.pop %v2452
  %v2454 = vmul.f32 %v2453, 2.0
  %v2455 = vmul.f32 %v2454, %v438
  %v2456 = vpack.c.bf16 %v2441, %v2441
  %v2457 = vpack.c.bf16 %v2455, %v2455
  %v2459 = vsel %vm549, %v2456, 0
  %v2462 = vsel %vm568, %v2457, 0
  %2464 = vmatprep.subr.bf16.mxu0 0
  %2465 = vmatpush1.bf16.msra.mxu0 %v2462
  %2466 = vmatprep.subr.bf16.mxu0 0
  %2467 = vmatpush1.bf16.msra.mxu0 0
  %2468 = vmatprep.subr.bf16.mxu0 0
  %2469 = vmatpush1.bf16.msra.mxu0 0
  %2470 = vmatprep.subr.bf16.mxu0 0
  %2471 = vmatpush1.bf16.msra.mxu0 0
  %2472 = vmatprep.subr.bf16.mxu0 0
  %2473 = vmatpush1.bf16.msra.mxu0 0
  %2474 = vmatprep.subr.bf16.mxu0 0
  %2475 = vmatpush1.bf16.msra.mxu0 0
  %2476 = vmatprep.subr.bf16.mxu0 0
  %2477 = vmatpush1.bf16.msra.mxu0 0
  %2478 = vmatprep.subr.bf16.mxu0 0
  %2479 = vmatpush1.bf16.msra.mxu0 0
  %2480 = vmatprep.subr.bf16.mxu0 0
  %2481 = vmatpush1.bf16.msra.mxu0 0
  %2482 = vmatprep.subr.bf16.mxu0 0
  %2483 = vmatpush1.bf16.msra.mxu0 0
  %2484 = vmatprep.subr.bf16.mxu0 0
  %2485 = vmatpush1.bf16.msra.mxu0 0
  %2486 = vmatprep.subr.bf16.mxu0 0
  %2487 = vmatpush1.bf16.msra.mxu0 0
  %2488 = vmatprep.subr.bf16.mxu0 0
  %2489 = vmatpush1.bf16.msra.mxu0 0
  %2490 = vmatprep.subr.bf16.mxu0 0
  %2491 = vmatpush1.bf16.msra.mxu0 0
  %2492 = vmatprep.subr.bf16.mxu0 0
  %2493 = vmatpush1.bf16.msra.mxu0 0
  %2494 = vmatprep.subr.bf16.mxu0 0
  %2495 = vmatpush1.bf16.msra.mxu0 0
  %2496 = vmatprep.mubr.bf16.mxu0 0
  %2497 = vmatmul.mubr.bf16.gmra.mrb[0].mxu0 %v2459
  %v2498 = vpop.f32.mrb[0].mxu0
  %v2499 = vadd.f32 0.0, %v2498
  %v2500 = vpop.f32.mrb[0].mxu0
  %v2501 = vpop.f32.mrb[0].mxu0
  %v2502 = vpop.f32.mrb[0].mxu0
  %2503 = vdwg.mxu0
  %v2504 = vsub.f32 %v439, %v2499
  %v2505 = vpack.c.bf16 %v2504, %v2504
  %v2506 = vsel %vm549, %v2457, 0
  %v2509 = vsel %vm568, %v2505, 0
  %2511 = vmatprep.subr.bf16.mxu0 0
  %2512 = vmatpush1.bf16.msra.mxu0 %v2509
  %2513 = vmatprep.subr.bf16.mxu0 0
  %2514 = vmatpush1.bf16.msra.mxu0 0
  %2515 = vmatprep.subr.bf16.mxu0 0
  %2516 = vmatpush1.bf16.msra.mxu0 0
  %2517 = vmatprep.subr.bf16.mxu0 0
  %2518 = vmatpush1.bf16.msra.mxu0 0
  %2519 = vmatprep.subr.bf16.mxu0 0
  %2520 = vmatpush1.bf16.msra.mxu0 0
  %2521 = vmatprep.subr.bf16.mxu0 0
  %2522 = vmatpush1.bf16.msra.mxu0 0
  %2523 = vmatprep.subr.bf16.mxu0 0
  %2524 = vmatpush1.bf16.msra.mxu0 0
  %2525 = vmatprep.subr.bf16.mxu0 0
  %2526 = vmatpush1.bf16.msra.mxu0 0
  %2527 = vmatprep.subr.bf16.mxu0 0
  %2528 = vmatpush1.bf16.msra.mxu0 0
  %2529 = vmatprep.subr.bf16.mxu0 0
  %2530 = vmatpush1.bf16.msra.mxu0 0
  %2531 = vmatprep.subr.bf16.mxu0 0
  %2532 = vmatpush1.bf16.msra.mxu0 0
  %2533 = vmatprep.subr.bf16.mxu0 0
  %2534 = vmatpush1.bf16.msra.mxu0 0
  %2535 = vmatprep.subr.bf16.mxu0 0
  %2536 = vmatpush1.bf16.msra.mxu0 0
  %2537 = vmatprep.subr.bf16.mxu0 0
  %2538 = vmatpush1.bf16.msra.mxu0 0
  %2539 = vmatprep.subr.bf16.mxu0 0
  %2540 = vmatpush1.bf16.msra.mxu0 0
  %2541 = vmatprep.subr.bf16.mxu0 0
  %2542 = vmatpush1.bf16.msra.mxu0 0
  %2543 = vmatprep.mubr.bf16.mxu0 0
  %2544 = vmatmul.mubr.bf16.gmra.mrb[0].mxu0 %v2506
  %v2545 = vpop.f32.mrb[0].mxu0
  %v2546 = vadd.f32 0.0, %v2545
  %v2547 = vpop.f32.mrb[0].mxu0
  %v2548 = vpop.f32.mrb[0].mxu0
  %v2549 = vpop.f32.mrb[0].mxu0
  %2550 = vdwg.mxu0
  %v2551 = vpack.c.bf16 %v2546, %v2546
  %v2553 = vsel %vm568, %v2551, 0
  %2555 = vmatprep.subr.bf16.mxu0 0
  %2556 = vmatpush1.bf16.msra.mxu0 %v2553
  %2557 = vmatprep.subr.bf16.mxu0 0
  %2558 = vmatpush1.bf16.msra.mxu0 0
  %2559 = vmatprep.subr.bf16.mxu0 0
  %2560 = vmatpush1.bf16.msra.mxu0 0
  %2561 = vmatprep.subr.bf16.mxu0 0
  %2562 = vmatpush1.bf16.msra.mxu0 0
  %2563 = vmatprep.subr.bf16.mxu0 0
  %2564 = vmatpush1.bf16.msra.mxu0 0
  %2565 = vmatprep.subr.bf16.mxu0 0
  %2566 = vmatpush1.bf16.msra.mxu0 0
  %2567 = vmatprep.subr.bf16.mxu0 0
  %2568 = vmatpush1.bf16.msra.mxu0 0
  %2569 = vmatprep.subr.bf16.mxu0 0
  %2570 = vmatpush1.bf16.msra.mxu0 0
  %2571 = vmatprep.subr.bf16.mxu0 0
  %2572 = vmatpush1.bf16.msra.mxu0 0
  %2573 = vmatprep.subr.bf16.mxu0 0
  %2574 = vmatpush1.bf16.msra.mxu0 0
  %2575 = vmatprep.subr.bf16.mxu0 0
  %2576 = vmatpush1.bf16.msra.mxu0 0
  %2577 = vmatprep.subr.bf16.mxu0 0
  %2578 = vmatpush1.bf16.msra.mxu0 0
  %2579 = vmatprep.subr.bf16.mxu0 0
  %2580 = vmatpush1.bf16.msra.mxu0 0
  %2581 = vmatprep.subr.bf16.mxu0 0
  %2582 = vmatpush1.bf16.msra.mxu0 0
  %2583 = vmatprep.subr.bf16.mxu0 0
  %2584 = vmatpush1.bf16.msra.mxu0 0
  %2585 = vmatprep.subr.bf16.mxu0 0
  %2586 = vmatpush1.bf16.msra.mxu0 0
  %2587 = vmatprep.mubr.bf16.mxu0 0
  %2588 = vmatmul.mubr.bf16.gmra.mrb[0].mxu0 %v2459
  %v2589 = vpop.f32.mrb[0].mxu0
  %v2590 = vadd.f32 0.0, %v2589
  %v2591 = vpop.f32.mrb[0].mxu0
  %v2592 = vpop.f32.mrb[0].mxu0
  %v2593 = vpop.f32.mrb[0].mxu0
  %2594 = vdwg.mxu0
  %v2595 = vsub.f32 %v439, %v2590
  %v2596 = vpack.c.bf16 %v2595, %v2595
  %v2597 = vsel %vm549, %v2551, 0
  %v2600 = vsel %vm568, %v2596, 0
  %2602 = vmatprep.subr.bf16.mxu0 0
  %2603 = vmatpush1.bf16.msra.mxu0 %v2600
  %2604 = vmatprep.subr.bf16.mxu0 0
  %2605 = vmatpush1.bf16.msra.mxu0 0
  %2606 = vmatprep.subr.bf16.mxu0 0
  %2607 = vmatpush1.bf16.msra.mxu0 0
  %2608 = vmatprep.subr.bf16.mxu0 0
  %2609 = vmatpush1.bf16.msra.mxu0 0
  %2610 = vmatprep.subr.bf16.mxu0 0
  %2611 = vmatpush1.bf16.msra.mxu0 0
  %2612 = vmatprep.subr.bf16.mxu0 0
  %2613 = vmatpush1.bf16.msra.mxu0 0
  %2614 = vmatprep.subr.bf16.mxu0 0
  %2615 = vmatpush1.bf16.msra.mxu0 0
  %2616 = vmatprep.subr.bf16.mxu0 0
  %2617 = vmatpush1.bf16.msra.mxu0 0
  %2618 = vmatprep.subr.bf16.mxu0 0
  %2619 = vmatpush1.bf16.msra.mxu0 0
  %2620 = vmatprep.subr.bf16.mxu0 0
  %2621 = vmatpush1.bf16.msra.mxu0 0
  %2622 = vmatprep.subr.bf16.mxu0 0
  %2623 = vmatpush1.bf16.msra.mxu0 0
  %2624 = vmatprep.subr.bf16.mxu0 0
  %2625 = vmatpush1.bf16.msra.mxu0 0
  %2626 = vmatprep.subr.bf16.mxu0 0
  %2627 = vmatpush1.bf16.msra.mxu0 0
  %2628 = vmatprep.subr.bf16.mxu0 0
  %2629 = vmatpush1.bf16.msra.mxu0 0
  %2630 = vmatprep.subr.bf16.mxu0 0
  %2631 = vmatpush1.bf16.msra.mxu0 0
  %2632 = vmatprep.subr.bf16.mxu0 0
  %2633 = vmatpush1.bf16.msra.mxu0 0
  %2634 = vmatprep.mubr.bf16.mxu0 0
  %2635 = vmatmul.mubr.bf16.gmra.mrb[0].mxu0 %v2597
  %v2636 = vpop.f32.mrb[0].mxu0
  %v2637 = vadd.f32 0.0, %v2636
  %v2638 = vpop.f32.mrb[0].mxu0
  %v2639 = vpop.f32.mrb[0].mxu0
  %v2640 = vpop.f32.mrb[0].mxu0
  %2641 = vdwg.mxu0
  %v2642 = vpack.c.bf16 %v2637, %v2637
  %v2644 = vsel %vm568, %v2642, 0
  %2646 = vmatprep.subr.bf16.mxu0 0
  %2647 = vmatpush1.bf16.msra.mxu0 %v2644
  %2648 = vmatprep.subr.bf16.mxu0 0
  %2649 = vmatpush1.bf16.msra.mxu0 0
  %2650 = vmatprep.subr.bf16.mxu0 0
  %2651 = vmatpush1.bf16.msra.mxu0 0
  %2652 = vmatprep.subr.bf16.mxu0 0
  %2653 = vmatpush1.bf16.msra.mxu0 0
  %2654 = vmatprep.subr.bf16.mxu0 0
  %2655 = vmatpush1.bf16.msra.mxu0 0
  %2656 = vmatprep.subr.bf16.mxu0 0
  %2657 = vmatpush1.bf16.msra.mxu0 0
  %2658 = vmatprep.subr.bf16.mxu0 0
  %2659 = vmatpush1.bf16.msra.mxu0 0
  %2660 = vmatprep.subr.bf16.mxu0 0
  %2661 = vmatpush1.bf16.msra.mxu0 0
  %2662 = vmatprep.subr.bf16.mxu0 0
  %2663 = vmatpush1.bf16.msra.mxu0 0
  %2664 = vmatprep.subr.bf16.mxu0 0
  %2665 = vmatpush1.bf16.msra.mxu0 0
  %2666 = vmatprep.subr.bf16.mxu0 0
  %2667 = vmatpush1.bf16.msra.mxu0 0
  %2668 = vmatprep.subr.bf16.mxu0 0
  %2669 = vmatpush1.bf16.msra.mxu0 0
  %2670 = vmatprep.subr.bf16.mxu0 0
  %2671 = vmatpush1.bf16.msra.mxu0 0
  %2672 = vmatprep.subr.bf16.mxu0 0
  %2673 = vmatpush1.bf16.msra.mxu0 0
  %2674 = vmatprep.subr.bf16.mxu0 0
  %2675 = vmatpush1.bf16.msra.mxu0 0
  %2676 = vmatprep.subr.bf16.mxu0 0
  %2677 = vmatpush1.bf16.msra.mxu0 0
  %2678 = vmatprep.mubr.bf16.mxu0 0
  %2679 = vmatmul.mubr.bf16.gmra.mrb[0].mxu0 %v2459
  %v2680 = vpop.f32.mrb[0].mxu0
  %v2681 = vadd.f32 0.0, %v2680
  %v2682 = vpop.f32.mrb[0].mxu0
  %v2683 = vpop.f32.mrb[0].mxu0
  %v2684 = vpop.f32.mrb[0].mxu0
  %2685 = vdwg.mxu0
  %v2686 = vsub.f32 %v439, %v2681
  %v2687 = vpack.c.bf16 %v2686, %v2686
  %v2688 = vsel %vm549, %v2642, 0
  %v2691 = vsel %vm568, %v2687, 0
  %2693 = vmatprep.subr.bf16.mxu0 0
  %2694 = vmatpush1.bf16.msra.mxu0 %v2691
  %2695 = vmatprep.subr.bf16.mxu0 0
  %2696 = vmatpush1.bf16.msra.mxu0 0
  %2697 = vmatprep.subr.bf16.mxu0 0
  %2698 = vmatpush1.bf16.msra.mxu0 0
  %2699 = vmatprep.subr.bf16.mxu0 0
  %2700 = vmatpush1.bf16.msra.mxu0 0
  %2701 = vmatprep.subr.bf16.mxu0 0
  %2702 = vmatpush1.bf16.msra.mxu0 0
  %2703 = vmatprep.subr.bf16.mxu0 0
  %2704 = vmatpush1.bf16.msra.mxu0 0
  %2705 = vmatprep.subr.bf16.mxu0 0
  %2706 = vmatpush1.bf16.msra.mxu0 0
  %2707 = vmatprep.subr.bf16.mxu0 0
  %2708 = vmatpush1.bf16.msra.mxu0 0
  %2709 = vmatprep.subr.bf16.mxu0 0
  %2710 = vmatpush1.bf16.msra.mxu0 0
  %2711 = vmatprep.subr.bf16.mxu0 0
  %2712 = vmatpush1.bf16.msra.mxu0 0
  %2713 = vmatprep.subr.bf16.mxu0 0
  %2714 = vmatpush1.bf16.msra.mxu0 0
  %2715 = vmatprep.subr.bf16.mxu0 0
  %2716 = vmatpush1.bf16.msra.mxu0 0
  %2717 = vmatprep.subr.bf16.mxu0 0
  %2718 = vmatpush1.bf16.msra.mxu0 0
  %2719 = vmatprep.subr.bf16.mxu0 0
  %2720 = vmatpush1.bf16.msra.mxu0 0
  %2721 = vmatprep.subr.bf16.mxu0 0
  %2722 = vmatpush1.bf16.msra.mxu0 0
  %2723 = vmatprep.subr.bf16.mxu0 0
  %2724 = vmatpush1.bf16.msra.mxu0 0
  %2725 = vmatprep.mubr.bf16.mxu0 0
  %2726 = vmatmul.mubr.bf16.gmra.mrb[0].mxu0 %v2688
  %v2727 = vpop.f32.mrb[0].mxu0
  %v2728 = vadd.f32 0.0, %v2727
  %v2729 = vpop.f32.mrb[0].mxu0
  %v2730 = vpop.f32.mrb[0].mxu0
  %v2731 = vpop.f32.mrb[0].mxu0
  %2732 = vdwg.mxu0
  %v2733 = vpack.c.bf16 %v2728, %v2728
  %v2735 = vsel %vm568, %v2733, 0
  %2737 = vmatprep.subr.bf16.mxu0 0
  %2738 = vmatpush1.bf16.msra.mxu0 %v2735
  %2739 = vmatprep.subr.bf16.mxu0 0
  %2740 = vmatpush1.bf16.msra.mxu0 0
  %2741 = vmatprep.subr.bf16.mxu0 0
  %2742 = vmatpush1.bf16.msra.mxu0 0
  %2743 = vmatprep.subr.bf16.mxu0 0
  %2744 = vmatpush1.bf16.msra.mxu0 0
  %2745 = vmatprep.subr.bf16.mxu0 0
  %2746 = vmatpush1.bf16.msra.mxu0 0
  %2747 = vmatprep.subr.bf16.mxu0 0
  %2748 = vmatpush1.bf16.msra.mxu0 0
  %2749 = vmatprep.subr.bf16.mxu0 0
  %2750 = vmatpush1.bf16.msra.mxu0 0
  %2751 = vmatprep.subr.bf16.mxu0 0
  %2752 = vmatpush1.bf16.msra.mxu0 0
  %2753 = vmatprep.subr.bf16.mxu0 0
  %2754 = vmatpush1.bf16.msra.mxu0 0
  %2755 = vmatprep.subr.bf16.mxu0 0
  %2756 = vmatpush1.bf16.msra.mxu0 0
  %2757 = vmatprep.subr.bf16.mxu0 0
  %2758 = vmatpush1.bf16.msra.mxu0 0
  %2759 = vmatprep.subr.bf16.mxu0 0
  %2760 = vmatpush1.bf16.msra.mxu0 0
  %2761 = vmatprep.subr.bf16.mxu0 0
  %2762 = vmatpush1.bf16.msra.mxu0 0
  %2763 = vmatprep.subr.bf16.mxu0 0
  %2764 = vmatpush1.bf16.msra.mxu0 0
  %2765 = vmatprep.subr.bf16.mxu0 0
  %2766 = vmatpush1.bf16.msra.mxu0 0
  %2767 = vmatprep.subr.bf16.mxu0 0
  %2768 = vmatpush1.bf16.msra.mxu0 0
  %2769 = vmatprep.mubr.bf16.mxu0 0
  %2770 = vmatmul.mubr.bf16.gmra.mrb[0].mxu0 %v2459
  %v2771 = vpop.f32.mrb[0].mxu0
  %v2772 = vadd.f32 0.0, %v2771
  %v2773 = vpop.f32.mrb[0].mxu0
  %v2774 = vpop.f32.mrb[0].mxu0
  %v2775 = vpop.f32.mrb[0].mxu0
  %2776 = vdwg.mxu0
  %v2777 = vsub.f32 %v439, %v2772
  %v2778 = vpack.c.bf16 %v2777, %v2777
  %v2779 = vsel %vm549, %v2733, 0
  %v2782 = vsel %vm568, %v2778, 0
  %2784 = vmatprep.subr.bf16.mxu0 0
  %2785 = vmatpush1.bf16.msra.mxu0 %v2782
  %2786 = vmatprep.subr.bf16.mxu0 0
  %2787 = vmatpush1.bf16.msra.mxu0 0
  %2788 = vmatprep.subr.bf16.mxu0 0
  %2789 = vmatpush1.bf16.msra.mxu0 0
  %2790 = vmatprep.subr.bf16.mxu0 0
  %2791 = vmatpush1.bf16.msra.mxu0 0
  %2792 = vmatprep.subr.bf16.mxu0 0
  %2793 = vmatpush1.bf16.msra.mxu0 0
  %2794 = vmatprep.subr.bf16.mxu0 0
  %2795 = vmatpush1.bf16.msra.mxu0 0
  %2796 = vmatprep.subr.bf16.mxu0 0
  %2797 = vmatpush1.bf16.msra.mxu0 0
  %2798 = vmatprep.subr.bf16.mxu0 0
  %2799 = vmatpush1.bf16.msra.mxu0 0
  %2800 = vmatprep.subr.bf16.mxu0 0
  %2801 = vmatpush1.bf16.msra.mxu0 0
  %2802 = vmatprep.subr.bf16.mxu0 0
  %2803 = vmatpush1.bf16.msra.mxu0 0
  %2804 = vmatprep.subr.bf16.mxu0 0
  %2805 = vmatpush1.bf16.msra.mxu0 0
  %2806 = vmatprep.subr.bf16.mxu0 0
  %2807 = vmatpush1.bf16.msra.mxu0 0
  %2808 = vmatprep.subr.bf16.mxu0 0
  %2809 = vmatpush1.bf16.msra.mxu0 0
  %2810 = vmatprep.subr.bf16.mxu0 0
  %2811 = vmatpush1.bf16.msra.mxu0 0
  %2812 = vmatprep.subr.bf16.mxu0 0
  %2813 = vmatpush1.bf16.msra.mxu0 0
  %2814 = vmatprep.subr.bf16.mxu0 0
  %2815 = vmatpush1.bf16.msra.mxu0 0
  %2816 = vmatprep.mubr.bf16.mxu0 0
  %2817 = vmatmul.mubr.bf16.gmra.mrb[0].mxu0 %v2779
  %v2818 = vpop.f32.mrb[0].mxu0
  %v2819 = vadd.f32 0.0, %v2818
  %v2820 = vpop.f32.mrb[0].mxu0
  %v2821 = vpop.f32.mrb[0].mxu0
  %v2822 = vpop.f32.mrb[0].mxu0
  %2823 = vdwg.mxu0
  %v2824 = vpack.c.bf16 %v2819, %v2819
  %v2826 = vsel %vm568, %v2824, 0
  %2828 = vmatprep.subr.bf16.mxu0 0
  %2829 = vmatpush1.bf16.msra.mxu0 %v2826
  %2830 = vmatprep.subr.bf16.mxu0 0
  %2831 = vmatpush1.bf16.msra.mxu0 0
  %2832 = vmatprep.subr.bf16.mxu0 0
  %2833 = vmatpush1.bf16.msra.mxu0 0
  %2834 = vmatprep.subr.bf16.mxu0 0
  %2835 = vmatpush1.bf16.msra.mxu0 0
  %2836 = vmatprep.subr.bf16.mxu0 0
  %2837 = vmatpush1.bf16.msra.mxu0 0
  %2838 = vmatprep.subr.bf16.mxu0 0
  %2839 = vmatpush1.bf16.msra.mxu0 0
  %2840 = vmatprep.subr.bf16.mxu0 0
  %2841 = vmatpush1.bf16.msra.mxu0 0
  %2842 = vmatprep.subr.bf16.mxu0 0
  %2843 = vmatpush1.bf16.msra.mxu0 0
  %2844 = vmatprep.subr.bf16.mxu0 0
  %2845 = vmatpush1.bf16.msra.mxu0 0
  %2846 = vmatprep.subr.bf16.mxu0 0
  %2847 = vmatpush1.bf16.msra.mxu0 0
  %2848 = vmatprep.subr.bf16.mxu0 0
  %2849 = vmatpush1.bf16.msra.mxu0 0
  %2850 = vmatprep.subr.bf16.mxu0 0
  %2851 = vmatpush1.bf16.msra.mxu0 0
  %2852 = vmatprep.subr.bf16.mxu0 0
  %2853 = vmatpush1.bf16.msra.mxu0 0
  %2854 = vmatprep.subr.bf16.mxu0 0
  %2855 = vmatpush1.bf16.msra.mxu0 0
  %2856 = vmatprep.subr.bf16.mxu0 0
  %2857 = vmatpush1.bf16.msra.mxu0 0
  %2858 = vmatprep.subr.bf16.mxu0 0
  %2859 = vmatpush1.bf16.msra.mxu0 0
  %2860 = vmatprep.mubr.bf16.mxu0 0
  %2861 = vmatmul.mubr.bf16.gmra.mrb[0].mxu0 %v2459
  %v2862 = vpop.f32.mrb[0].mxu0
  %v2863 = vadd.f32 0.0, %v2862
  %v2864 = vpop.f32.mrb[0].mxu0
  %v2865 = vpop.f32.mrb[0].mxu0
  %v2866 = vpop.f32.mrb[0].mxu0
  %2867 = vdwg.mxu0
  %v2868 = vsub.f32 %v439, %v2863
  %v2869 = vpack.c.bf16 %v2868, %v2868
  %v2870 = vsel %vm549, %v2824, 0
  %v2873 = vsel %vm568, %v2869, 0
  %2875 = vmatprep.subr.bf16.mxu0 0
  %2876 = vmatpush1.bf16.msra.mxu0 %v2873
  %2877 = vmatprep.subr.bf16.mxu0 0
  %2878 = vmatpush1.bf16.msra.mxu0 0
  %2879 = vmatprep.subr.bf16.mxu0 0
  %2880 = vmatpush1.bf16.msra.mxu0 0
  %2881 = vmatprep.subr.bf16.mxu0 0
  %2882 = vmatpush1.bf16.msra.mxu0 0
  %2883 = vmatprep.subr.bf16.mxu0 0
  %2884 = vmatpush1.bf16.msra.mxu0 0
  %2885 = vmatprep.subr.bf16.mxu0 0
  %2886 = vmatpush1.bf16.msra.mxu0 0
  %2887 = vmatprep.subr.bf16.mxu0 0
  %2888 = vmatpush1.bf16.msra.mxu0 0
  %2889 = vmatprep.subr.bf16.mxu0 0
  %2890 = vmatpush1.bf16.msra.mxu0 0
  %2891 = vmatprep.subr.bf16.mxu0 0
  %2892 = vmatpush1.bf16.msra.mxu0 0
  %2893 = vmatprep.subr.bf16.mxu0 0
  %2894 = vmatpush1.bf16.msra.mxu0 0
  %2895 = vmatprep.subr.bf16.mxu0 0
  %2896 = vmatpush1.bf16.msra.mxu0 0
  %2897 = vmatprep.subr.bf16.mxu0 0
  %2898 = vmatpush1.bf16.msra.mxu0 0
  %2899 = vmatprep.subr.bf16.mxu0 0
  %2900 = vmatpush1.bf16.msra.mxu0 0
  %2901 = vmatprep.subr.bf16.mxu0 0
  %2902 = vmatpush1.bf16.msra.mxu0 0
  %2903 = vmatprep.subr.bf16.mxu0 0
  %2904 = vmatpush1.bf16.msra.mxu0 0
  %2905 = vmatprep.subr.bf16.mxu0 0
  %2906 = vmatpush1.bf16.msra.mxu0 0
  %2907 = vmatprep.mubr.bf16.mxu0 0
  %2908 = vmatmul.mubr.bf16.gmra.mrb[0].mxu0 %v2870
  %v2909 = vpop.f32.mrb[0].mxu0
  %v2910 = vadd.f32 0.0, %v2909
  %v2911 = vpop.f32.mrb[0].mxu0
  %v2912 = vpop.f32.mrb[0].mxu0
  %v2913 = vpop.f32.mrb[0].mxu0
  %2914 = vdwg.mxu0
  %v2915 = vpack.c.bf16 %v2910, %v2910
  %v2917 = vsel %vm568, %v2915, 0
  %2919 = vmatprep.subr.bf16.mxu0 0
  %2920 = vmatpush1.bf16.msra.mxu0 %v2917
  %2921 = vmatprep.subr.bf16.mxu0 0
  %2922 = vmatpush1.bf16.msra.mxu0 0
  %2923 = vmatprep.subr.bf16.mxu0 0
  %2924 = vmatpush1.bf16.msra.mxu0 0
  %2925 = vmatprep.subr.bf16.mxu0 0
  %2926 = vmatpush1.bf16.msra.mxu0 0
  %2927 = vmatprep.subr.bf16.mxu0 0
  %2928 = vmatpush1.bf16.msra.mxu0 0
  %2929 = vmatprep.subr.bf16.mxu0 0
  %2930 = vmatpush1.bf16.msra.mxu0 0
  %2931 = vmatprep.subr.bf16.mxu0 0
  %2932 = vmatpush1.bf16.msra.mxu0 0
  %2933 = vmatprep.subr.bf16.mxu0 0
  %2934 = vmatpush1.bf16.msra.mxu0 0
  %2935 = vmatprep.subr.bf16.mxu0 0
  %2936 = vmatpush1.bf16.msra.mxu0 0
  %2937 = vmatprep.subr.bf16.mxu0 0
  %2938 = vmatpush1.bf16.msra.mxu0 0
  %2939 = vmatprep.subr.bf16.mxu0 0
  %2940 = vmatpush1.bf16.msra.mxu0 0
  %2941 = vmatprep.subr.bf16.mxu0 0
  %2942 = vmatpush1.bf16.msra.mxu0 0
  %2943 = vmatprep.subr.bf16.mxu0 0
  %2944 = vmatpush1.bf16.msra.mxu0 0
  %2945 = vmatprep.subr.bf16.mxu0 0
  %2946 = vmatpush1.bf16.msra.mxu0 0
  %2947 = vmatprep.subr.bf16.mxu0 0
  %2948 = vmatpush1.bf16.msra.mxu0 0
  %2949 = vmatprep.subr.bf16.mxu0 0
  %2950 = vmatpush1.bf16.msra.mxu0 0
  %2951 = vmatprep.mubr.bf16.mxu0 0
  %2952 = vmatmul.mubr.bf16.gmra.mrb[0].mxu0 %v2459
  %v2953 = vpop.f32.mrb[0].mxu0
  %v2954 = vadd.f32 0.0, %v2953
  %v2955 = vpop.f32.mrb[0].mxu0
  %v2956 = vpop.f32.mrb[0].mxu0
  %v2957 = vpop.f32.mrb[0].mxu0
  %2958 = vdwg.mxu0
  %v2959 = vsub.f32 %v439, %v2954
  %v2960 = vpack.c.bf16 %v2959, %v2959
  %v2961 = vsel %vm549, %v2915, 0
  %v2964 = vsel %vm568, %v2960, 0
  %2966 = vmatprep.subr.bf16.mxu0 0
  %2967 = vmatpush1.bf16.msra.mxu0 %v2964
  %2968 = vmatprep.subr.bf16.mxu0 0
  %2969 = vmatpush1.bf16.msra.mxu0 0
  %2970 = vmatprep.subr.bf16.mxu0 0
  %2971 = vmatpush1.bf16.msra.mxu0 0
  %2972 = vmatprep.subr.bf16.mxu0 0
  %2973 = vmatpush1.bf16.msra.mxu0 0
  %2974 = vmatprep.subr.bf16.mxu0 0
  %2975 = vmatpush1.bf16.msra.mxu0 0
  %2976 = vmatprep.subr.bf16.mxu0 0
  %2977 = vmatpush1.bf16.msra.mxu0 0
  %2978 = vmatprep.subr.bf16.mxu0 0
  %2979 = vmatpush1.bf16.msra.mxu0 0
  %2980 = vmatprep.subr.bf16.mxu0 0
  %2981 = vmatpush1.bf16.msra.mxu0 0
  %2982 = vmatprep.subr.bf16.mxu0 0
  %2983 = vmatpush1.bf16.msra.mxu0 0
  %2984 = vmatprep.subr.bf16.mxu0 0
  %2985 = vmatpush1.bf16.msra.mxu0 0
  %2986 = vmatprep.subr.bf16.mxu0 0
  %2987 = vmatpush1.bf16.msra.mxu0 0
  %2988 = vmatprep.subr.bf16.mxu0 0
  %2989 = vmatpush1.bf16.msra.mxu0 0
  %2990 = vmatprep.subr.bf16.mxu0 0
  %2991 = vmatpush1.bf16.msra.mxu0 0
  %2992 = vmatprep.subr.bf16.mxu0 0
  %2993 = vmatpush1.bf16.msra.mxu0 0
  %2994 = vmatprep.subr.bf16.mxu0 0
  %2995 = vmatpush1.bf16.msra.mxu0 0
  %2996 = vmatprep.subr.bf16.mxu0 0
  %2997 = vmatpush1.bf16.msra.mxu0 0
  %2998 = vmatprep.mubr.bf16.mxu0 0
  %2999 = vmatmul.mubr.bf16.gmra.mrb[0].mxu0 %v2961
  %v3000 = vpop.f32.mrb[0].mxu0
  %v3001 = vadd.f32 0.0, %v3000
  %v3002 = vpop.f32.mrb[0].mxu0
  %v3003 = vpop.f32.mrb[0].mxu0
  %v3004 = vpop.f32.mrb[0].mxu0
  %3005 = vdwg.mxu0
  %v3006 = vpack.c.bf16 %v3001, %v3001
  %v3008 = vsel %vm568, %v3006, 0
  %3010 = vmatprep.subr.bf16.mxu0 0
  %3011 = vmatpush1.bf16.msra.mxu0 %v3008
  %3012 = vmatprep.subr.bf16.mxu0 0
  %3013 = vmatpush1.bf16.msra.mxu0 0
  %3014 = vmatprep.subr.bf16.mxu0 0
  %3015 = vmatpush1.bf16.msra.mxu0 0
  %3016 = vmatprep.subr.bf16.mxu0 0
  %3017 = vmatpush1.bf16.msra.mxu0 0
  %3018 = vmatprep.subr.bf16.mxu0 0
  %3019 = vmatpush1.bf16.msra.mxu0 0
  %3020 = vmatprep.subr.bf16.mxu0 0
  %3021 = vmatpush1.bf16.msra.mxu0 0
  %3022 = vmatprep.subr.bf16.mxu0 0
  %3023 = vmatpush1.bf16.msra.mxu0 0
  %3024 = vmatprep.subr.bf16.mxu0 0
  %3025 = vmatpush1.bf16.msra.mxu0 0
  %3026 = vmatprep.subr.bf16.mxu0 0
  %3027 = vmatpush1.bf16.msra.mxu0 0
  %3028 = vmatprep.subr.bf16.mxu0 0
  %3029 = vmatpush1.bf16.msra.mxu0 0
  %3030 = vmatprep.subr.bf16.mxu0 0
  %3031 = vmatpush1.bf16.msra.mxu0 0
  %3032 = vmatprep.subr.bf16.mxu0 0
  %3033 = vmatpush1.bf16.msra.mxu0 0
  %3034 = vmatprep.subr.bf16.mxu0 0
  %3035 = vmatpush1.bf16.msra.mxu0 0
  %3036 = vmatprep.subr.bf16.mxu0 0
  %3037 = vmatpush1.bf16.msra.mxu0 0
  %3038 = vmatprep.subr.bf16.mxu0 0
  %3039 = vmatpush1.bf16.msra.mxu0 0
  %3040 = vmatprep.subr.bf16.mxu0 0
  %3041 = vmatpush1.bf16.msra.mxu0 0
  %3042 = vmatprep.mubr.bf16.mxu0 0
  %3043 = vmatmul.mubr.bf16.gmra.mrb[0].mxu0 %v2459
  %v3044 = vpop.f32.mrb[0].mxu0
  %v3045 = vadd.f32 0.0, %v3044
  %v3046 = vpop.f32.mrb[0].mxu0
  %v3047 = vpop.f32.mrb[0].mxu0
  %v3048 = vpop.f32.mrb[0].mxu0
  %3049 = vdwg.mxu0
  %v3050 = vsub.f32 %v439, %v3045
  %v3051 = vpack.c.bf16 %v3050, %v3050
  %v3052 = vsel %vm549, %v3006, 0
  %v3055 = vsel %vm568, %v3051, 0
  %3057 = vmatprep.subr.bf16.mxu0 0
  %3058 = vmatpush1.bf16.msra.mxu0 %v3055
  %3059 = vmatprep.subr.bf16.mxu0 0
  %3060 = vmatpush1.bf16.msra.mxu0 0
  %3061 = vmatprep.subr.bf16.mxu0 0
  %3062 = vmatpush1.bf16.msra.mxu0 0
  %3063 = vmatprep.subr.bf16.mxu0 0
  %3064 = vmatpush1.bf16.msra.mxu0 0
  %3065 = vmatprep.subr.bf16.mxu0 0
  %3066 = vmatpush1.bf16.msra.mxu0 0
  %3067 = vmatprep.subr.bf16.mxu0 0
  %3068 = vmatpush1.bf16.msra.mxu0 0
  %3069 = vmatprep.subr.bf16.mxu0 0
  %3070 = vmatpush1.bf16.msra.mxu0 0
  %3071 = vmatprep.subr.bf16.mxu0 0
  %3072 = vmatpush1.bf16.msra.mxu0 0
  %3073 = vmatprep.subr.bf16.mxu0 0
  %3074 = vmatpush1.bf16.msra.mxu0 0
  %3075 = vmatprep.subr.bf16.mxu0 0
  %3076 = vmatpush1.bf16.msra.mxu0 0
  %3077 = vmatprep.subr.bf16.mxu0 0
  %3078 = vmatpush1.bf16.msra.mxu0 0
  %3079 = vmatprep.subr.bf16.mxu0 0
  %3080 = vmatpush1.bf16.msra.mxu0 0
  %3081 = vmatprep.subr.bf16.mxu0 0
  %3082 = vmatpush1.bf16.msra.mxu0 0
  %3083 = vmatprep.subr.bf16.mxu0 0
  %3084 = vmatpush1.bf16.msra.mxu0 0
  %3085 = vmatprep.subr.bf16.mxu0 0
  %3086 = vmatpush1.bf16.msra.mxu0 0
  %3087 = vmatprep.subr.bf16.mxu0 0
  %3088 = vmatpush1.bf16.msra.mxu0 0
  %3089 = vmatprep.mubr.bf16.mxu0 0
  %3090 = vmatmul.mubr.bf16.gmra.mrb[0].mxu0 %v3052
  %v3091 = vpop.f32.mrb[0].mxu0
  %v3092 = vadd.f32 0.0, %v3091
  %v3093 = vpop.f32.mrb[0].mxu0
  %v3094 = vpop.f32.mrb[0].mxu0
  %v3095 = vpop.f32.mrb[0].mxu0
  %3096 = vdwg.mxu0
  %v3097 = vpack.c.bf16 %v3092, %v3092
  %v3099 = vsel %vm568, %v3097, 0
  %3101 = vmatprep.subr.bf16.mxu0 0
  %3102 = vmatpush1.bf16.msra.mxu0 %v3099
  %3103 = vmatprep.subr.bf16.mxu0 0
  %3104 = vmatpush1.bf16.msra.mxu0 0
  %3105 = vmatprep.subr.bf16.mxu0 0
  %3106 = vmatpush1.bf16.msra.mxu0 0
  %3107 = vmatprep.subr.bf16.mxu0 0
  %3108 = vmatpush1.bf16.msra.mxu0 0
  %3109 = vmatprep.subr.bf16.mxu0 0
  %3110 = vmatpush1.bf16.msra.mxu0 0
  %3111 = vmatprep.subr.bf16.mxu0 0
  %3112 = vmatpush1.bf16.msra.mxu0 0
  %3113 = vmatprep.subr.bf16.mxu0 0
  %3114 = vmatpush1.bf16.msra.mxu0 0
  %3115 = vmatprep.subr.bf16.mxu0 0
  %3116 = vmatpush1.bf16.msra.mxu0 0
  %3117 = vmatprep.subr.bf16.mxu0 0
  %3118 = vmatpush1.bf16.msra.mxu0 0
  %3119 = vmatprep.subr.bf16.mxu0 0
  %3120 = vmatpush1.bf16.msra.mxu0 0
  %3121 = vmatprep.subr.bf16.mxu0 0
  %3122 = vmatpush1.bf16.msra.mxu0 0
  %3123 = vmatprep.subr.bf16.mxu0 0
  %3124 = vmatpush1.bf16.msra.mxu0 0
  %3125 = vmatprep.subr.bf16.mxu0 0
  %3126 = vmatpush1.bf16.msra.mxu0 0
  %3127 = vmatprep.subr.bf16.mxu0 0
  %3128 = vmatpush1.bf16.msra.mxu0 0
  %3129 = vmatprep.subr.bf16.mxu0 0
  %3130 = vmatpush1.bf16.msra.mxu0 0
  %3131 = vmatprep.subr.bf16.mxu0 0
  %3132 = vmatpush1.bf16.msra.mxu0 0
  %3133 = vmatprep.mubr.bf16.mxu0 0
  %3134 = vmatmul.mubr.bf16.gmra.mrb[0].mxu0 %v2459
  %v3135 = vpop.f32.mrb[0].mxu0
  %v3136 = vadd.f32 0.0, %v3135
  %v3137 = vpop.f32.mrb[0].mxu0
  %v3138 = vpop.f32.mrb[0].mxu0
  %v3139 = vpop.f32.mrb[0].mxu0
  %3140 = vdwg.mxu0
  %v3141 = vsub.f32 %v439, %v3136
  %v3142 = vpack.c.bf16 %v3141, %v3141
  %v3143 = vsel %vm549, %v3097, 0
  %v3146 = vsel %vm568, %v3142, 0
  %3148 = vmatprep.subr.bf16.mxu0 0
  %3149 = vmatpush1.bf16.msra.mxu0 %v3146
  %3150 = vmatprep.subr.bf16.mxu0 0
  %3151 = vmatpush1.bf16.msra.mxu0 0
  %3152 = vmatprep.subr.bf16.mxu0 0
  %3153 = vmatpush1.bf16.msra.mxu0 0
  %3154 = vmatprep.subr.bf16.mxu0 0
  %3155 = vmatpush1.bf16.msra.mxu0 0
  %3156 = vmatprep.subr.bf16.mxu0 0
  %3157 = vmatpush1.bf16.msra.mxu0 0
  %3158 = vmatprep.subr.bf16.mxu0 0
  %3159 = vmatpush1.bf16.msra.mxu0 0
  %3160 = vmatprep.subr.bf16.mxu0 0
  %3161 = vmatpush1.bf16.msra.mxu0 0
  %3162 = vmatprep.subr.bf16.mxu0 0
  %3163 = vmatpush1.bf16.msra.mxu0 0
  %3164 = vmatprep.subr.bf16.mxu0 0
  %3165 = vmatpush1.bf16.msra.mxu0 0
  %3166 = vmatprep.subr.bf16.mxu0 0
  %3167 = vmatpush1.bf16.msra.mxu0 0
  %3168 = vmatprep.subr.bf16.mxu0 0
  %3169 = vmatpush1.bf16.msra.mxu0 0
  %3170 = vmatprep.subr.bf16.mxu0 0
  %3171 = vmatpush1.bf16.msra.mxu0 0
  %3172 = vmatprep.subr.bf16.mxu0 0
  %3173 = vmatpush1.bf16.msra.mxu0 0
  %3174 = vmatprep.subr.bf16.mxu0 0
  %3175 = vmatpush1.bf16.msra.mxu0 0
  %3176 = vmatprep.subr.bf16.mxu0 0
  %3177 = vmatpush1.bf16.msra.mxu0 0
  %3178 = vmatprep.subr.bf16.mxu0 0
  %3179 = vmatpush1.bf16.msra.mxu0 0
  %3180 = vmatprep.mubr.bf16.mxu0 0
  %3181 = vmatmul.mubr.bf16.gmra.mrb[0].mxu0 %v3143
  %v3182 = vpop.f32.mrb[0].mxu0
  %v3183 = vadd.f32 0.0, %v3182
  %v3184 = vpop.f32.mrb[0].mxu0
  %v3185 = vpop.f32.mrb[0].mxu0
  %v3186 = vpop.f32.mrb[0].mxu0
  %3187 = vdwg.mxu0
  %v3188 = vpack.c.bf16 %v3183, %v3183
  %v3190 = vsel %vm568, %v3188, 0
  %3192 = vmatprep.subr.bf16.mxu0 0
  %3193 = vmatpush1.bf16.msra.mxu0 %v3190
  %3194 = vmatprep.subr.bf16.mxu0 0
  %3195 = vmatpush1.bf16.msra.mxu0 0
  %3196 = vmatprep.subr.bf16.mxu0 0
  %3197 = vmatpush1.bf16.msra.mxu0 0
  %3198 = vmatprep.subr.bf16.mxu0 0
  %3199 = vmatpush1.bf16.msra.mxu0 0
  %3200 = vmatprep.subr.bf16.mxu0 0
  %3201 = vmatpush1.bf16.msra.mxu0 0
  %3202 = vmatprep.subr.bf16.mxu0 0
  %3203 = vmatpush1.bf16.msra.mxu0 0
  %3204 = vmatprep.subr.bf16.mxu0 0
  %3205 = vmatpush1.bf16.msra.mxu0 0
  %3206 = vmatprep.subr.bf16.mxu0 0
  %3207 = vmatpush1.bf16.msra.mxu0 0
  %3208 = vmatprep.subr.bf16.mxu0 0
  %3209 = vmatpush1.bf16.msra.mxu0 0
  %3210 = vmatprep.subr.bf16.mxu0 0
  %3211 = vmatpush1.bf16.msra.mxu0 0
  %3212 = vmatprep.subr.bf16.mxu0 0
  %3213 = vmatpush1.bf16.msra.mxu0 0
  %3214 = vmatprep.subr.bf16.mxu0 0
  %3215 = vmatpush1.bf16.msra.mxu0 0
  %3216 = vmatprep.subr.bf16.mxu0 0
  %3217 = vmatpush1.bf16.msra.mxu0 0
  %3218 = vmatprep.subr.bf16.mxu0 0
  %3219 = vmatpush1.bf16.msra.mxu0 0
  %3220 = vmatprep.subr.bf16.mxu0 0
  %3221 = vmatpush1.bf16.msra.mxu0 0
  %3222 = vmatprep.subr.bf16.mxu0 0
  %3223 = vmatpush1.bf16.msra.mxu0 0
  %3224 = vmatprep.mubr.bf16.mxu0 0
  %3225 = vmatmul.mubr.bf16.gmra.mrb[0].mxu0 %v2459
  %v3226 = vpop.f32.mrb[0].mxu0
  %v3227 = vadd.f32 0.0, %v3226
  %v3228 = vpop.f32.mrb[0].mxu0
  %v3229 = vpop.f32.mrb[0].mxu0
  %v3230 = vpop.f32.mrb[0].mxu0
  %3231 = vdwg.mxu0
  %v3232 = vsub.f32 %v439, %v3227
  %v3233 = vpack.c.bf16 %v3232, %v3232
  %v3234 = vsel %vm549, %v3188, 0
  %v3237 = vsel %vm568, %v3233, 0
  %3239 = vmatprep.subr.bf16.mxu0 0
  %3240 = vmatpush1.bf16.msra.mxu0 %v3237
  %3241 = vmatprep.subr.bf16.mxu0 0
  %3242 = vmatpush1.bf16.msra.mxu0 0
  %3243 = vmatprep.subr.bf16.mxu0 0
  %3244 = vmatpush1.bf16.msra.mxu0 0
  %3245 = vmatprep.subr.bf16.mxu0 0
  %3246 = vmatpush1.bf16.msra.mxu0 0
  %3247 = vmatprep.subr.bf16.mxu0 0
  %3248 = vmatpush1.bf16.msra.mxu0 0
  %3249 = vmatprep.subr.bf16.mxu0 0
  %3250 = vmatpush1.bf16.msra.mxu0 0
  %3251 = vmatprep.subr.bf16.mxu0 0
  %3252 = vmatpush1.bf16.msra.mxu0 0
  %3253 = vmatprep.subr.bf16.mxu0 0
  %3254 = vmatpush1.bf16.msra.mxu0 0
  %3255 = vmatprep.subr.bf16.mxu0 0
  %3256 = vmatpush1.bf16.msra.mxu0 0
  %3257 = vmatprep.subr.bf16.mxu0 0
  %3258 = vmatpush1.bf16.msra.mxu0 0
  %3259 = vmatprep.subr.bf16.mxu0 0
  %3260 = vmatpush1.bf16.msra.mxu0 0
  %3261 = vmatprep.subr.bf16.mxu0 0
  %3262 = vmatpush1.bf16.msra.mxu0 0
  %3263 = vmatprep.subr.bf16.mxu0 0
  %3264 = vmatpush1.bf16.msra.mxu0 0
  %3265 = vmatprep.subr.bf16.mxu0 0
  %3266 = vmatpush1.bf16.msra.mxu0 0
  %3267 = vmatprep.subr.bf16.mxu0 0
  %3268 = vmatpush1.bf16.msra.mxu0 0
  %3269 = vmatprep.subr.bf16.mxu0 0
  %3270 = vmatpush1.bf16.msra.mxu0 0
  %3271 = vmatprep.mubr.bf16.mxu0 0
  %3272 = vmatmul.mubr.bf16.gmra.mrb[0].mxu0 %v3234
  %v3273 = vpop.f32.mrb[0].mxu0
  %v3274 = vadd.f32 0.0, %v3273
  %v3275 = vpop.f32.mrb[0].mxu0
  %v3276 = vpop.f32.mrb[0].mxu0
  %v3277 = vpop.f32.mrb[0].mxu0
  %3278 = vdwg.mxu0
  %v3279 = vpack.c.bf16 %v3274, %v3274
  %v3281 = vsel %vm568, %v3279, 0
  %3283 = vmatprep.subr.bf16.mxu0 0
  %3284 = vmatpush1.bf16.msra.mxu0 %v3281
  %3285 = vmatprep.subr.bf16.mxu0 0
  %3286 = vmatpush1.bf16.msra.mxu0 0
  %3287 = vmatprep.subr.bf16.mxu0 0
  %3288 = vmatpush1.bf16.msra.mxu0 0
  %3289 = vmatprep.subr.bf16.mxu0 0
  %3290 = vmatpush1.bf16.msra.mxu0 0
  %3291 = vmatprep.subr.bf16.mxu0 0
  %3292 = vmatpush1.bf16.msra.mxu0 0
  %3293 = vmatprep.subr.bf16.mxu0 0
  %3294 = vmatpush1.bf16.msra.mxu0 0
  %3295 = vmatprep.subr.bf16.mxu0 0
  %3296 = vmatpush1.bf16.msra.mxu0 0
  %3297 = vmatprep.subr.bf16.mxu0 0
  %3298 = vmatpush1.bf16.msra.mxu0 0
  %3299 = vmatprep.subr.bf16.mxu0 0
  %3300 = vmatpush1.bf16.msra.mxu0 0
  %3301 = vmatprep.subr.bf16.mxu0 0
  %3302 = vmatpush1.bf16.msra.mxu0 0
  %3303 = vmatprep.subr.bf16.mxu0 0
  %3304 = vmatpush1.bf16.msra.mxu0 0
  %3305 = vmatprep.subr.bf16.mxu0 0
  %3306 = vmatpush1.bf16.msra.mxu0 0
  %3307 = vmatprep.subr.bf16.mxu0 0
  %3308 = vmatpush1.bf16.msra.mxu0 0
  %3309 = vmatprep.subr.bf16.mxu0 0
  %3310 = vmatpush1.bf16.msra.mxu0 0
  %3311 = vmatprep.subr.bf16.mxu0 0
  %3312 = vmatpush1.bf16.msra.mxu0 0
  %3313 = vmatprep.subr.bf16.mxu0 0
  %3314 = vmatpush1.bf16.msra.mxu0 0
  %3315 = vmatprep.mubr.bf16.mxu0 0
  %3316 = vmatmul.mubr.bf16.gmra.mrb[0].mxu0 %v2459
  %v3317 = vpop.f32.mrb[0].mxu0
  %v3318 = vadd.f32 0.0, %v3317
  %v3319 = vpop.f32.mrb[0].mxu0
  %v3320 = vpop.f32.mrb[0].mxu0
  %v3321 = vpop.f32.mrb[0].mxu0
  %3322 = vdwg.mxu0
  %v3323 = vsub.f32 %v439, %v3318
  %v3324 = vpack.c.bf16 %v3323, %v3323
  %v3325 = vsel %vm549, %v3279, 0
  %v3328 = vsel %vm568, %v3324, 0
  %3330 = vmatprep.subr.bf16.mxu0 0
  %3331 = vmatpush1.bf16.msra.mxu0 %v3328
  %3332 = vmatprep.subr.bf16.mxu0 0
  %3333 = vmatpush1.bf16.msra.mxu0 0
  %3334 = vmatprep.subr.bf16.mxu0 0
  %3335 = vmatpush1.bf16.msra.mxu0 0
  %3336 = vmatprep.subr.bf16.mxu0 0
  %3337 = vmatpush1.bf16.msra.mxu0 0
  %3338 = vmatprep.subr.bf16.mxu0 0
  %3339 = vmatpush1.bf16.msra.mxu0 0
  %3340 = vmatprep.subr.bf16.mxu0 0
  %3341 = vmatpush1.bf16.msra.mxu0 0
  %3342 = vmatprep.subr.bf16.mxu0 0
  %3343 = vmatpush1.bf16.msra.mxu0 0
  %3344 = vmatprep.subr.bf16.mxu0 0
  %3345 = vmatpush1.bf16.msra.mxu0 0
  %3346 = vmatprep.subr.bf16.mxu0 0
  %3347 = vmatpush1.bf16.msra.mxu0 0
  %3348 = vmatprep.subr.bf16.mxu0 0
  %3349 = vmatpush1.bf16.msra.mxu0 0
  %3350 = vmatprep.subr.bf16.mxu0 0
  %3351 = vmatpush1.bf16.msra.mxu0 0
  %3352 = vmatprep.subr.bf16.mxu0 0
  %3353 = vmatpush1.bf16.msra.mxu0 0
  %3354 = vmatprep.subr.bf16.mxu0 0
  %3355 = vmatpush1.bf16.msra.mxu0 0
  %3356 = vmatprep.subr.bf16.mxu0 0
  %3357 = vmatpush1.bf16.msra.mxu0 0
  %3358 = vmatprep.subr.bf16.mxu0 0
  %3359 = vmatpush1.bf16.msra.mxu0 0
  %3360 = vmatprep.subr.bf16.mxu0 0
  %3361 = vmatpush1.bf16.msra.mxu0 0
  %3362 = vmatprep.mubr.bf16.mxu0 0
  %3363 = vmatmul.mubr.bf16.gmra.mrb[0].mxu0 %v3325
  %v3364 = vpop.f32.mrb[0].mxu0
  %v3365 = vadd.f32 0.0, %v3364
  %v3366 = vpop.f32.mrb[0].mxu0
  %v3367 = vpop.f32.mrb[0].mxu0
  %v3368 = vpop.f32.mrb[0].mxu0
  %3369 = vdwg.mxu0
  %v3371 = vsel %vm549, %v2441, 0
  %3373 = vmatprep.subr.mxu0 0.0
  %3374 = vmatpush1.msra.mxu0 %v3365
  %3375 = vmatprep.subr.mxu0 0.0
  %3376 = vmatpush1.msra.mxu0 0.0
  %3377 = vmatprep.subr.mxu0 0.0
  %3378 = vmatpush1.msra.mxu0 0.0
  %3379 = vmatprep.subr.mxu0 0.0
  %3380 = vmatpush1.msra.mxu0 0.0
  %3381 = vmatprep.subr.mxu0 0.0
  %3382 = vmatpush1.msra.mxu0 0.0
  %3383 = vmatprep.subr.mxu0 0.0
  %3384 = vmatpush1.msra.mxu0 0.0
  %3385 = vmatprep.subr.mxu0 0.0
  %3386 = vmatpush1.msra.mxu0 0.0
  %3387 = vmatprep.subr.mxu0 0.0
  %3388 = vmatpush1.msra.mxu0 0.0
  %3389 = vmatprep.subr.mxu0 0.0
  %3390 = vmatpush1.msra.mxu0 0.0
  %3391 = vmatprep.subr.mxu0 0.0
  %3392 = vmatpush1.msra.mxu0 0.0
  %3393 = vmatprep.subr.mxu0 0.0
  %3394 = vmatpush1.msra.mxu0 0.0
  %3395 = vmatprep.subr.mxu0 0.0
  %3396 = vmatpush1.msra.mxu0 0.0
  %3397 = vmatprep.subr.mxu0 0.0
  %3398 = vmatpush1.msra.mxu0 0.0
  %3399 = vmatprep.subr.mxu0 0.0
  %3400 = vmatpush1.msra.mxu0 0.0
  %3401 = vmatprep.subr.mxu0 0.0
  %3402 = vmatpush1.msra.mxu0 0.0
  %3403 = vmatprep.subr.mxu0 0.0
  %3404 = vmatpush1.msra.mxu0 0.0
  %3405 = vmatprep.subr.mxu0 0.0
  %3406 = vmatpush1.msra.mxu0 0.0
  %3407 = vmatprep.subr.mxu0 0.0
  %3408 = vmatpush1.msra.mxu0 0.0
  %3409 = vmatprep.subr.mxu0 0.0
  %3410 = vmatpush1.msra.mxu0 0.0
  %3411 = vmatprep.subr.mxu0 0.0
  %3412 = vmatpush1.msra.mxu0 0.0
  %3413 = vmatprep.subr.mxu0 0.0
  %3414 = vmatpush1.msra.mxu0 0.0
  %3415 = vmatprep.subr.mxu0 0.0
  %3416 = vmatpush1.msra.mxu0 0.0
  %3417 = vmatprep.subr.mxu0 0.0
  %3418 = vmatpush1.msra.mxu0 0.0
  %3419 = vmatprep.subr.mxu0 0.0
  %3420 = vmatpush1.msra.mxu0 0.0
  %3421 = vmatprep.subr.mxu0 0.0
  %3422 = vmatpush1.msra.mxu0 0.0
  %3423 = vmatprep.subr.mxu0 0.0
  %3424 = vmatpush1.msra.mxu0 0.0
  %3425 = vmatprep.subr.mxu0 0.0
  %3426 = vmatpush1.msra.mxu0 0.0
  %3427 = vmatprep.subr.mxu0 0.0
  %3428 = vmatpush1.msra.mxu0 0.0
  %3429 = vmatprep.subr.mxu0 0.0
  %3430 = vmatpush1.msra.mxu0 0.0
  %3431 = vmatprep.subr.mxu0 0.0
  %3432 = vmatpush1.msra.mxu0 0.0
  %3433 = vmatprep.subr.mxu0 0.0
  %3434 = vmatpush1.msra.mxu0 0.0
  %3435 = vmatprep.subr.mxu0 0.0
  %3436 = vmatpush1.msra.mxu0 0.0
  %3437 = vmatprep.mubr.f32.mxu0 0.0
  %3438 = vmatmul.mubr.f32.gmra.mrb[0].mxu0 %v3371
  %v3439 = vpop.f32.mrb[0].mxu0
  %v3440 = vadd.f32 0.0, %v3439
  %v3441 = vpop.f32.mrb[0].mxu0
  %3442 = vdwg.mxu0
  %v3443 = vsub.f32 %v439, %v3440
  %v3445 = vsel %vm549, %v3365, 0
  %3447 = vmatprep.subr.mxu0 0.0
  %3448 = vmatpush1.msra.mxu0 %v3443
  %3449 = vmatprep.subr.mxu0 0.0
  %3450 = vmatpush1.msra.mxu0 0.0
  %3451 = vmatprep.subr.mxu0 0.0
  %3452 = vmatpush1.msra.mxu0 0.0
  %3453 = vmatprep.subr.mxu0 0.0
  %3454 = vmatpush1.msra.mxu0 0.0
  %3455 = vmatprep.subr.mxu0 0.0
  %3456 = vmatpush1.msra.mxu0 0.0
  %3457 = vmatprep.subr.mxu0 0.0
  %3458 = vmatpush1.msra.mxu0 0.0
  %3459 = vmatprep.subr.mxu0 0.0
  %3460 = vmatpush1.msra.mxu0 0.0
  %3461 = vmatprep.subr.mxu0 0.0
  %3462 = vmatpush1.msra.mxu0 0.0
  %3463 = vmatprep.subr.mxu0 0.0
  %3464 = vmatpush1.msra.mxu0 0.0
  %3465 = vmatprep.subr.mxu0 0.0
  %3466 = vmatpush1.msra.mxu0 0.0
  %3467 = vmatprep.subr.mxu0 0.0
  %3468 = vmatpush1.msra.mxu0 0.0
  %3469 = vmatprep.subr.mxu0 0.0
  %3470 = vmatpush1.msra.mxu0 0.0
  %3471 = vmatprep.subr.mxu0 0.0
  %3472 = vmatpush1.msra.mxu0 0.0
  %3473 = vmatprep.subr.mxu0 0.0
  %3474 = vmatpush1.msra.mxu0 0.0
  %3475 = vmatprep.subr.mxu0 0.0
  %3476 = vmatpush1.msra.mxu0 0.0
  %3477 = vmatprep.subr.mxu0 0.0
  %3478 = vmatpush1.msra.mxu0 0.0
  %3479 = vmatprep.subr.mxu0 0.0
  %3480 = vmatpush1.msra.mxu0 0.0
  %3481 = vmatprep.subr.mxu0 0.0
  %3482 = vmatpush1.msra.mxu0 0.0
  %3483 = vmatprep.subr.mxu0 0.0
  %3484 = vmatpush1.msra.mxu0 0.0
  %3485 = vmatprep.subr.mxu0 0.0
  %3486 = vmatpush1.msra.mxu0 0.0
  %3487 = vmatprep.subr.mxu0 0.0
  %3488 = vmatpush1.msra.mxu0 0.0
  %3489 = vmatprep.subr.mxu0 0.0
  %3490 = vmatpush1.msra.mxu0 0.0
  %3491 = vmatprep.subr.mxu0 0.0
  %3492 = vmatpush1.msra.mxu0 0.0
  %3493 = vmatprep.subr.mxu0 0.0
  %3494 = vmatpush1.msra.mxu0 0.0
  %3495 = vmatprep.subr.mxu0 0.0
  %3496 = vmatpush1.msra.mxu0 0.0
  %3497 = vmatprep.subr.mxu0 0.0
  %3498 = vmatpush1.msra.mxu0 0.0
  %3499 = vmatprep.subr.mxu0 0.0
  %3500 = vmatpush1.msra.mxu0 0.0
  %3501 = vmatprep.subr.mxu0 0.0
  %3502 = vmatpush1.msra.mxu0 0.0
  %3503 = vmatprep.subr.mxu0 0.0
  %3504 = vmatpush1.msra.mxu0 0.0
  %3505 = vmatprep.subr.mxu0 0.0
  %3506 = vmatpush1.msra.mxu0 0.0
  %3507 = vmatprep.subr.mxu0 0.0
  %3508 = vmatpush1.msra.mxu0 0.0
  %3509 = vmatprep.subr.mxu0 0.0
  %3510 = vmatpush1.msra.mxu0 0.0
  %3511 = vmatprep.mubr.f32.mxu0 0.0
  %3512 = vmatmul.mubr.f32.gmra.mrb[0].mxu0 %v3445
  %v3513 = vpop.f32.mrb[0].mxu0
  %v3514 = vadd.f32 0.0, %v3513
  %v3515 = vpop.f32.mrb[0].mxu0
  %3516 = vdwg.mxu0
  %3517 = vmatprep.subr.mxu0 0.0
  %3518 = vmatpush1.msra.mxu0 %v3514
  %3519 = vmatprep.subr.mxu0 0.0
  %3520 = vmatpush1.msra.mxu0 0.0
  %3521 = vmatprep.subr.mxu0 0.0
  %3522 = vmatpush1.msra.mxu0 0.0
  %3523 = vmatprep.subr.mxu0 0.0
  %3524 = vmatpush1.msra.mxu0 0.0
  %3525 = vmatprep.subr.mxu0 0.0
  %3526 = vmatpush1.msra.mxu0 0.0
  %3527 = vmatprep.subr.mxu0 0.0
  %3528 = vmatpush1.msra.mxu0 0.0
  %3529 = vmatprep.subr.mxu0 0.0
  %3530 = vmatpush1.msra.mxu0 0.0
  %3531 = vmatprep.subr.mxu0 0.0
  %3532 = vmatpush1.msra.mxu0 0.0
  %3533 = vmatprep.subr.mxu0 0.0
  %3534 = vmatpush1.msra.mxu0 0.0
  %3535 = vmatprep.subr.mxu0 0.0
  %3536 = vmatpush1.msra.mxu0 0.0
  %3537 = vmatprep.subr.mxu0 0.0
  %3538 = vmatpush1.msra.mxu0 0.0
  %3539 = vmatprep.subr.mxu0 0.0
  %3540 = vmatpush1.msra.mxu0 0.0
  %3541 = vmatprep.subr.mxu0 0.0
  %3542 = vmatpush1.msra.mxu0 0.0
  %3543 = vmatprep.subr.mxu0 0.0
  %3544 = vmatpush1.msra.mxu0 0.0
  %3545 = vmatprep.subr.mxu0 0.0
  %3546 = vmatpush1.msra.mxu0 0.0
  %3547 = vmatprep.subr.mxu0 0.0
  %3548 = vmatpush1.msra.mxu0 0.0
  %3549 = vmatprep.subr.mxu0 0.0
  %3550 = vmatpush1.msra.mxu0 0.0
  %3551 = vmatprep.subr.mxu0 0.0
  %3552 = vmatpush1.msra.mxu0 0.0
  %3553 = vmatprep.subr.mxu0 0.0
  %3554 = vmatpush1.msra.mxu0 0.0
  %3555 = vmatprep.subr.mxu0 0.0
  %3556 = vmatpush1.msra.mxu0 0.0
  %3557 = vmatprep.subr.mxu0 0.0
  %3558 = vmatpush1.msra.mxu0 0.0
  %3559 = vmatprep.subr.mxu0 0.0
  %3560 = vmatpush1.msra.mxu0 0.0
  %3561 = vmatprep.subr.mxu0 0.0
  %3562 = vmatpush1.msra.mxu0 0.0
  %3563 = vmatprep.subr.mxu0 0.0
  %3564 = vmatpush1.msra.mxu0 0.0
  %3565 = vmatprep.subr.mxu0 0.0
  %3566 = vmatpush1.msra.mxu0 0.0
  %3567 = vmatprep.subr.mxu0 0.0
  %3568 = vmatpush1.msra.mxu0 0.0
  %3569 = vmatprep.subr.mxu0 0.0
  %3570 = vmatpush1.msra.mxu0 0.0
  %3571 = vmatprep.subr.mxu0 0.0
  %3572 = vmatpush1.msra.mxu0 0.0
  %3573 = vmatprep.subr.mxu0 0.0
  %3574 = vmatpush1.msra.mxu0 0.0
  %3575 = vmatprep.subr.mxu0 0.0
  %3576 = vmatpush1.msra.mxu0 0.0
  %3577 = vmatprep.subr.mxu0 0.0
  %3578 = vmatpush1.msra.mxu0 0.0
  %3579 = vmatprep.subr.mxu0 0.0
  %3580 = vmatpush1.msra.mxu0 0.0
  %3581 = vmatprep.mubr.f32.mxu0 0.0
  %3582 = vmatmul.mubr.f32.gmra.mrb[0].mxu0 %v3371
  %v3583 = vpop.f32.mrb[0].mxu0
  %v3584 = vadd.f32 0.0, %v3583
  %v3585 = vpop.f32.mrb[0].mxu0
  %3586 = vdwg.mxu0
  %v3587 = vsub.f32 %v439, %v3584
  %v3589 = vsel %vm549, %v3514, 0
  %3591 = vmatprep.subr.mxu0 0.0
  %3592 = vmatpush1.msra.mxu0 %v3587
  %3593 = vmatprep.subr.mxu0 0.0
  %3594 = vmatpush1.msra.mxu0 0.0
  %3595 = vmatprep.subr.mxu0 0.0
  %3596 = vmatpush1.msra.mxu0 0.0
  %3597 = vmatprep.subr.mxu0 0.0
  %3598 = vmatpush1.msra.mxu0 0.0
  %3599 = vmatprep.subr.mxu0 0.0
  %3600 = vmatpush1.msra.mxu0 0.0
  %3601 = vmatprep.subr.mxu0 0.0
  %3602 = vmatpush1.msra.mxu0 0.0
  %3603 = vmatprep.subr.mxu0 0.0
  %3604 = vmatpush1.msra.mxu0 0.0
  %3605 = vmatprep.subr.mxu0 0.0
  %3606 = vmatpush1.msra.mxu0 0.0
  %3607 = vmatprep.subr.mxu0 0.0
  %3608 = vmatpush1.msra.mxu0 0.0
  %3609 = vmatprep.subr.mxu0 0.0
  %3610 = vmatpush1.msra.mxu0 0.0
  %3611 = vmatprep.subr.mxu0 0.0
  %3612 = vmatpush1.msra.mxu0 0.0
  %3613 = vmatprep.subr.mxu0 0.0
  %3614 = vmatpush1.msra.mxu0 0.0
  %3615 = vmatprep.subr.mxu0 0.0
  %3616 = vmatpush1.msra.mxu0 0.0
  %3617 = vmatprep.subr.mxu0 0.0
  %3618 = vmatpush1.msra.mxu0 0.0
  %3619 = vmatprep.subr.mxu0 0.0
  %3620 = vmatpush1.msra.mxu0 0.0
  %3621 = vmatprep.subr.mxu0 0.0
  %3622 = vmatpush1.msra.mxu0 0.0
  %3623 = vmatprep.subr.mxu0 0.0
  %3624 = vmatpush1.msra.mxu0 0.0
  %3625 = vmatprep.subr.mxu0 0.0
  %3626 = vmatpush1.msra.mxu0 0.0
  %3627 = vmatprep.subr.mxu0 0.0
  %3628 = vmatpush1.msra.mxu0 0.0
  %3629 = vmatprep.subr.mxu0 0.0
  %3630 = vmatpush1.msra.mxu0 0.0
  %3631 = vmatprep.subr.mxu0 0.0
  %3632 = vmatpush1.msra.mxu0 0.0
  %3633 = vmatprep.subr.mxu0 0.0
  %3634 = vmatpush1.msra.mxu0 0.0
  %3635 = vmatprep.subr.mxu0 0.0
  %3636 = vmatpush1.msra.mxu0 0.0
  %3637 = vmatprep.subr.mxu0 0.0
  %3638 = vmatpush1.msra.mxu0 0.0
  %3639 = vmatprep.subr.mxu0 0.0
  %3640 = vmatpush1.msra.mxu0 0.0
  %3641 = vmatprep.subr.mxu0 0.0
  %3642 = vmatpush1.msra.mxu0 0.0
  %3643 = vmatprep.subr.mxu0 0.0
  %3644 = vmatpush1.msra.mxu0 0.0
  %3645 = vmatprep.subr.mxu0 0.0
  %3646 = vmatpush1.msra.mxu0 0.0
  %3647 = vmatprep.subr.mxu0 0.0
  %3648 = vmatpush1.msra.mxu0 0.0
  %3649 = vmatprep.subr.mxu0 0.0
  %3650 = vmatpush1.msra.mxu0 0.0
  %3651 = vmatprep.subr.mxu0 0.0
  %3652 = vmatpush1.msra.mxu0 0.0
  %3653 = vmatprep.subr.mxu0 0.0
  %3654 = vmatpush1.msra.mxu0 0.0
  %3655 = vmatprep.mubr.f32.mxu0 0.0
  %3656 = vmatmul.mubr.f32.gmra.mrb[0].mxu0 %v3589
  %v3657 = vpop.f32.mrb[0].mxu0
  %v3658 = vadd.f32 0.0, %v3657
  %v3659 = vpop.f32.mrb[0].mxu0
  %3660 = vdwg.mxu0
  %v3662 = vsel %vm549, %v3658, 0
  %3664 = vmatprep.subr.mxu0 0.0
  %3665 = vmatpush1.msra.mxu0 %v2437
  %3666 = vmatprep.subr.mxu0 0.0
  %3667 = vmatpush1.msra.mxu0 0.0
  %3668 = vmatprep.subr.mxu0 0.0
  %3669 = vmatpush1.msra.mxu0 0.0
  %3670 = vmatprep.subr.mxu0 0.0
  %3671 = vmatpush1.msra.mxu0 0.0
  %3672 = vmatprep.subr.mxu0 0.0
  %3673 = vmatpush1.msra.mxu0 0.0
  %3674 = vmatprep.subr.mxu0 0.0
  %3675 = vmatpush1.msra.mxu0 0.0
  %3676 = vmatprep.subr.mxu0 0.0
  %3677 = vmatpush1.msra.mxu0 0.0
  %3678 = vmatprep.subr.mxu0 0.0
  %3679 = vmatpush1.msra.mxu0 0.0
  %3680 = vmatprep.subr.mxu0 0.0
  %3681 = vmatpush1.msra.mxu0 0.0
  %3682 = vmatprep.subr.mxu0 0.0
  %3683 = vmatpush1.msra.mxu0 0.0
  %3684 = vmatprep.subr.mxu0 0.0
  %3685 = vmatpush1.msra.mxu0 0.0
  %3686 = vmatprep.subr.mxu0 0.0
  %3687 = vmatpush1.msra.mxu0 0.0
  %3688 = vmatprep.subr.mxu0 0.0
  %3689 = vmatpush1.msra.mxu0 0.0
  %3690 = vmatprep.subr.mxu0 0.0
  %3691 = vmatpush1.msra.mxu0 0.0
  %3692 = vmatprep.subr.mxu0 0.0
  %3693 = vmatpush1.msra.mxu0 0.0
  %3694 = vmatprep.subr.mxu0 0.0
  %3695 = vmatpush1.msra.mxu0 0.0
  %3696 = vmatprep.subr.mxu0 0.0
  %3697 = vmatpush1.msra.mxu0 0.0
  %3698 = vmatprep.subr.mxu0 0.0
  %3699 = vmatpush1.msra.mxu0 0.0
  %3700 = vmatprep.subr.mxu0 0.0
  %3701 = vmatpush1.msra.mxu0 0.0
  %3702 = vmatprep.subr.mxu0 0.0
  %3703 = vmatpush1.msra.mxu0 0.0
  %3704 = vmatprep.subr.mxu0 0.0
  %3705 = vmatpush1.msra.mxu0 0.0
  %3706 = vmatprep.subr.mxu0 0.0
  %3707 = vmatpush1.msra.mxu0 0.0
  %3708 = vmatprep.subr.mxu0 0.0
  %3709 = vmatpush1.msra.mxu0 0.0
  %3710 = vmatprep.subr.mxu0 0.0
  %3711 = vmatpush1.msra.mxu0 0.0
  %3712 = vmatprep.subr.mxu0 0.0
  %3713 = vmatpush1.msra.mxu0 0.0
  %3714 = vmatprep.subr.mxu0 0.0
  %3715 = vmatpush1.msra.mxu0 0.0
  %3716 = vmatprep.subr.mxu0 0.0
  %3717 = vmatpush1.msra.mxu0 0.0
  %3718 = vmatprep.subr.mxu0 0.0
  %3719 = vmatpush1.msra.mxu0 0.0
  %3720 = vmatprep.subr.mxu0 0.0
  %3721 = vmatpush1.msra.mxu0 0.0
  %3722 = vmatprep.subr.mxu0 0.0
  %3723 = vmatpush1.msra.mxu0 0.0
  %3724 = vmatprep.subr.mxu0 0.0
  %3725 = vmatpush1.msra.mxu0 0.0
  %3726 = vmatprep.subr.mxu0 0.0
  %3727 = vmatpush1.msra.mxu0 0.0
  %3728 = vmatprep.mubr.f32.mxu0 0.0
  %3729 = vmatmul.mubr.f32.gmra.mrb[0].mxu0 %v3662
  %v3730 = vpop.f32.mrb[0].mxu0
  %v3731 = vadd.f32 0.0, %v3730
  %v3732 = vpop.f32.mrb[0].mxu0
  %3733 = vdwg.mxu0
  %v3734 = vmul.f32 %v2437, 0.25
  %v3736 = vsel %vm549, %v2437, 0
  %3738 = vmatprep.subr.mxu0 0.0
  %3739 = vmatpush1.msra.mxu0 %v3731
  %3740 = vmatprep.subr.mxu0 0.0
  %3741 = vmatpush1.msra.mxu0 0.0
  %3742 = vmatprep.subr.mxu0 0.0
  %3743 = vmatpush1.msra.mxu0 0.0
  %3744 = vmatprep.subr.mxu0 0.0
  %3745 = vmatpush1.msra.mxu0 0.0
  %3746 = vmatprep.subr.mxu0 0.0
  %3747 = vmatpush1.msra.mxu0 0.0
  %3748 = vmatprep.subr.mxu0 0.0
  %3749 = vmatpush1.msra.mxu0 0.0
  %3750 = vmatprep.subr.mxu0 0.0
  %3751 = vmatpush1.msra.mxu0 0.0
  %3752 = vmatprep.subr.mxu0 0.0
  %3753 = vmatpush1.msra.mxu0 0.0
  %3754 = vmatprep.subr.mxu0 0.0
  %3755 = vmatpush1.msra.mxu0 0.0
  %3756 = vmatprep.subr.mxu0 0.0
  %3757 = vmatpush1.msra.mxu0 0.0
  %3758 = vmatprep.subr.mxu0 0.0
  %3759 = vmatpush1.msra.mxu0 0.0
  %3760 = vmatprep.subr.mxu0 0.0
  %3761 = vmatpush1.msra.mxu0 0.0
  %3762 = vmatprep.subr.mxu0 0.0
  %3763 = vmatpush1.msra.mxu0 0.0
  %3764 = vmatprep.subr.mxu0 0.0
  %3765 = vmatpush1.msra.mxu0 0.0
  %3766 = vmatprep.subr.mxu0 0.0
  %3767 = vmatpush1.msra.mxu0 0.0
  %3768 = vmatprep.subr.mxu0 0.0
  %3769 = vmatpush1.msra.mxu0 0.0
  %3770 = vmatprep.subr.mxu0 0.0
  %3771 = vmatpush1.msra.mxu0 0.0
  %3772 = vmatprep.subr.mxu0 0.0
  %3773 = vmatpush1.msra.mxu0 0.0
  %3774 = vmatprep.subr.mxu0 0.0
  %3775 = vmatpush1.msra.mxu0 0.0
  %3776 = vmatprep.subr.mxu0 0.0
  %3777 = vmatpush1.msra.mxu0 0.0
  %3778 = vmatprep.subr.mxu0 0.0
  %3779 = vmatpush1.msra.mxu0 0.0
  %3780 = vmatprep.subr.mxu0 0.0
  %3781 = vmatpush1.msra.mxu0 0.0
  %3782 = vmatprep.subr.mxu0 0.0
  %3783 = vmatpush1.msra.mxu0 0.0
  %3784 = vmatprep.subr.mxu0 0.0
  %3785 = vmatpush1.msra.mxu0 0.0
  %3786 = vmatprep.subr.mxu0 0.0
  %3787 = vmatpush1.msra.mxu0 0.0
  %3788 = vmatprep.subr.mxu0 0.0
  %3789 = vmatpush1.msra.mxu0 0.0
  %3790 = vmatprep.subr.mxu0 0.0
  %3791 = vmatpush1.msra.mxu0 0.0
  %3792 = vmatprep.subr.mxu0 0.0
  %3793 = vmatpush1.msra.mxu0 0.0
  %3794 = vmatprep.subr.mxu0 0.0
  %3795 = vmatpush1.msra.mxu0 0.0
  %3796 = vmatprep.subr.mxu0 0.0
  %3797 = vmatpush1.msra.mxu0 0.0
  %3798 = vmatprep.subr.mxu0 0.0
  %3799 = vmatpush1.msra.mxu0 0.0
  %3800 = vmatprep.subr.mxu0 0.0
  %3801 = vmatpush1.msra.mxu0 0.0
  %3802 = vmatprep.mubr.f32.mxu0 0.0
  %3803 = vmatmul.mubr.f32.gmra.mrb[0].mxu0 %v3736
  %v3804 = vpop.f32.mrb[0].mxu0
  %v3805 = vadd.f32 0.0, %v3804
  %v3806 = vpop.f32.mrb[0].mxu0
  %3807 = vdwg.mxu0
  %v3808 = vmul.f32 %v3805, 0.125
  %v3809 = vsub.f32 %v3734, %v3808
  %v3810 = vmul.f32 %v2333, 0.25
  %v3811 = vmul.f32 %v2334, 0.25
  %v3813 = vsel %vm549, %v2333, 0
  %v3816 = vsel %vm549, %v2334, 0
  %3818 = vmatprep.subr.mxu0 0.0
  %3819 = vmatpush1.msra.mxu0 %v3731
  %3820 = vmatprep.subr.mxu0 0.0
  %3821 = vmatpush1.msra.mxu0 0.0
  %3822 = vmatprep.subr.mxu0 0.0
  %3823 = vmatpush1.msra.mxu0 0.0
  %3824 = vmatprep.subr.mxu0 0.0
  %3825 = vmatpush1.msra.mxu0 0.0
  %3826 = vmatprep.subr.mxu0 0.0
  %3827 = vmatpush1.msra.mxu0 0.0
  %3828 = vmatprep.subr.mxu0 0.0
  %3829 = vmatpush1.msra.mxu0 0.0
  %3830 = vmatprep.subr.mxu0 0.0
  %3831 = vmatpush1.msra.mxu0 0.0
  %3832 = vmatprep.subr.mxu0 0.0
  %3833 = vmatpush1.msra.mxu0 0.0
  %3834 = vmatprep.subr.mxu0 0.0
  %3835 = vmatpush1.msra.mxu0 0.0
  %3836 = vmatprep.subr.mxu0 0.0
  %3837 = vmatpush1.msra.mxu0 0.0
  %3838 = vmatprep.subr.mxu0 0.0
  %3839 = vmatpush1.msra.mxu0 0.0
  %3840 = vmatprep.subr.mxu0 0.0
  %3841 = vmatpush1.msra.mxu0 0.0
  %3842 = vmatprep.subr.mxu0 0.0
  %3843 = vmatpush1.msra.mxu0 0.0
  %3844 = vmatprep.subr.mxu0 0.0
  %3845 = vmatpush1.msra.mxu0 0.0
  %3846 = vmatprep.subr.mxu0 0.0
  %3847 = vmatpush1.msra.mxu0 0.0
  %3848 = vmatprep.subr.mxu0 0.0
  %3849 = vmatpush1.msra.mxu0 0.0
  %3850 = vmatprep.subr.mxu0 0.0
  %3851 = vmatpush1.msra.mxu0 0.0
  %3852 = vmatprep.subr.mxu0 0.0
  %3853 = vmatpush1.msra.mxu0 0.0
  %3854 = vmatprep.subr.mxu0 0.0
  %3855 = vmatpush1.msra.mxu0 0.0
  %3856 = vmatprep.subr.mxu0 0.0
  %3857 = vmatpush1.msra.mxu0 0.0
  %3858 = vmatprep.subr.mxu0 0.0
  %3859 = vmatpush1.msra.mxu0 0.0
  %3860 = vmatprep.subr.mxu0 0.0
  %3861 = vmatpush1.msra.mxu0 0.0
  %3862 = vmatprep.subr.mxu0 0.0
  %3863 = vmatpush1.msra.mxu0 0.0
  %3864 = vmatprep.subr.mxu0 0.0
  %3865 = vmatpush1.msra.mxu0 0.0
  %3866 = vmatprep.subr.mxu0 0.0
  %3867 = vmatpush1.msra.mxu0 0.0
  %3868 = vmatprep.subr.mxu0 0.0
  %3869 = vmatpush1.msra.mxu0 0.0
  %3870 = vmatprep.subr.mxu0 0.0
  %3871 = vmatpush1.msra.mxu0 0.0
  %3872 = vmatprep.subr.mxu0 0.0
  %3873 = vmatpush1.msra.mxu0 0.0
  %3874 = vmatprep.subr.mxu0 0.0
  %3875 = vmatpush1.msra.mxu0 0.0
  %3876 = vmatprep.subr.mxu0 0.0
  %3877 = vmatpush1.msra.mxu0 0.0
  %3878 = vmatprep.subr.mxu0 0.0
  %3879 = vmatpush1.msra.mxu0 0.0
  %3880 = vmatprep.subr.mxu0 0.0
  %3881 = vmatpush1.msra.mxu0 0.0
  %3882 = vmatprep.mubr.f32.mxu0 0.0
  %3883 = vmatmul.mubr.f32.gmra.mrb[0].mxu0 %v3813
  %v3884 = vpop.f32.mrb[0].mxu0
  %v3885 = vadd.f32 0.0, %v3884
  %v3886 = vpop.f32.mrb[0].mxu0
  %3887 = vmatprep.mubr.f32.mxu0 0.0
  %3888 = vmatmul.mubr.f32.gmra.mrb[0].mxu0 %v3816
  %v3889 = vpop.f32.mrb[0].mxu0
  %v3890 = vadd.f32 0.0, %v3889
  %v3891 = vpop.f32.mrb[0].mxu0
  %3892 = vdwg.mxu0
  %v3893 = vmul.f32 %v3885, 0.125
  %v3894 = vmul.f32 %v3890, 0.125
  %v3895 = vsub.f32 %v3810, %v3893
  %v3896 = vsub.f32 %v3811, %v3894
  %3897 = vmatprep.subr.mxu0 0.0
  %3898 = vmatpush1.msra.mxu0 %v3895
  %3899 = vmatprep.subr.mxu0 0.0
  %3900 = vmatpush1.msra.mxu0 %v3896
  %3901 = vmatprep.subr.mxu0 0.0
  %3902 = vmatpush1.msra.mxu0 0.0
  %3903 = vmatprep.subr.mxu0 0.0
  %3904 = vmatpush1.msra.mxu0 0.0
  %3905 = vmatprep.subr.mxu0 0.0
  %3906 = vmatpush1.msra.mxu0 0.0
  %3907 = vmatprep.subr.mxu0 0.0
  %3908 = vmatpush1.msra.mxu0 0.0
  %3909 = vmatprep.subr.mxu0 0.0
  %3910 = vmatpush1.msra.mxu0 0.0
  %3911 = vmatprep.subr.mxu0 0.0
  %3912 = vmatpush1.msra.mxu0 0.0
  %3913 = vmatprep.subr.mxu0 0.0
  %3914 = vmatpush1.msra.mxu0 0.0
  %3915 = vmatprep.subr.mxu0 0.0
  %3916 = vmatpush1.msra.mxu0 0.0
  %3917 = vmatprep.subr.mxu0 0.0
  %3918 = vmatpush1.msra.mxu0 0.0
  %3919 = vmatprep.subr.mxu0 0.0
  %3920 = vmatpush1.msra.mxu0 0.0
  %3921 = vmatprep.subr.mxu0 0.0
  %3922 = vmatpush1.msra.mxu0 0.0
  %3923 = vmatprep.subr.mxu0 0.0
  %3924 = vmatpush1.msra.mxu0 0.0
  %3925 = vmatprep.subr.mxu0 0.0
  %3926 = vmatpush1.msra.mxu0 0.0
  %3927 = vmatprep.subr.mxu0 0.0
  %3928 = vmatpush1.msra.mxu0 0.0
  %3929 = vmatprep.subr.mxu0 0.0
  %3930 = vmatpush1.msra.mxu0 0.0
  %3931 = vmatprep.subr.mxu0 0.0
  %3932 = vmatpush1.msra.mxu0 0.0
  %3933 = vmatprep.subr.mxu0 0.0
  %3934 = vmatpush1.msra.mxu0 0.0
  %3935 = vmatprep.subr.mxu0 0.0
  %3936 = vmatpush1.msra.mxu0 0.0
  %3937 = vmatprep.subr.mxu0 0.0
  %3938 = vmatpush1.msra.mxu0 0.0
  %3939 = vmatprep.subr.mxu0 0.0
  %3940 = vmatpush1.msra.mxu0 0.0
  %3941 = vmatprep.subr.mxu0 0.0
  %3942 = vmatpush1.msra.mxu0 0.0
  %3943 = vmatprep.subr.mxu0 0.0
  %3944 = vmatpush1.msra.mxu0 0.0
  %3945 = vmatprep.subr.mxu0 0.0
  %3946 = vmatpush1.msra.mxu0 0.0
  %3947 = vmatprep.subr.mxu0 0.0
  %3948 = vmatpush1.msra.mxu0 0.0
  %3949 = vmatprep.subr.mxu0 0.0
  %3950 = vmatpush1.msra.mxu0 0.0
  %3951 = vmatprep.subr.mxu0 0.0
  %3952 = vmatpush1.msra.mxu0 0.0
  %3953 = vmatprep.subr.mxu0 0.0
  %3954 = vmatpush1.msra.mxu0 0.0
  %3955 = vmatprep.subr.mxu0 0.0
  %3956 = vmatpush1.msra.mxu0 0.0
  %3957 = vmatprep.subr.mxu0 0.0
  %3958 = vmatpush1.msra.mxu0 0.0
  %3959 = vmatprep.subr.mxu0 0.0
  %3960 = vmatpush1.msra.mxu0 0.0
  %3961 = vmatprep.mubr.f32.mxu0 0.0
  %3962 = vmatmul.mubr.f32.gmra.mrb[0].mxu0 %v27
  %v3963 = vpop.f32.mrb[0].mxu0
  %v3964 = vadd.f32 0.0, %v3963
  %v3965 = vpop.f32.mrb[0].mxu0
  %3966 = vmatprep.mubr.f32.mxu0 0.0
  %3967 = vmatmul.mubr.f32.gmra.mrb[0].mxu0 %v30
  %v3968 = vpop.f32.mrb[0].mxu0
  %v3969 = vadd.f32 0.0, %v3968
  %v3970 = vpop.f32.mrb[0].mxu0
  %3971 = vdwg.mxu0
  %v3972 = vadd.f32 %v3895, %v3964
  %v3973 = vadd.f32 %v3896, %v3969
  %3974 = vmatprep.subr.mxu0 0.0
  %3975 = vmatpush1.msra.mxu0 %v3895
  %3976 = vmatprep.subr.mxu0 0.0
  %3977 = vmatpush1.msra.mxu0 %v3896
  %3978 = vmatprep.subr.mxu0 0.0
  %3979 = vmatpush1.msra.mxu0 0.0
  %3980 = vmatprep.subr.mxu0 0.0
  %3981 = vmatpush1.msra.mxu0 0.0
  %3982 = vmatprep.subr.mxu0 0.0
  %3983 = vmatpush1.msra.mxu0 0.0
  %3984 = vmatprep.subr.mxu0 0.0
  %3985 = vmatpush1.msra.mxu0 0.0
  %3986 = vmatprep.subr.mxu0 0.0
  %3987 = vmatpush1.msra.mxu0 0.0
  %3988 = vmatprep.subr.mxu0 0.0
  %3989 = vmatpush1.msra.mxu0 0.0
  %3990 = vmatprep.subr.mxu0 0.0
  %3991 = vmatpush1.msra.mxu0 0.0
  %3992 = vmatprep.subr.mxu0 0.0
  %3993 = vmatpush1.msra.mxu0 0.0
  %3994 = vmatprep.subr.mxu0 0.0
  %3995 = vmatpush1.msra.mxu0 0.0
  %3996 = vmatprep.subr.mxu0 0.0
  %3997 = vmatpush1.msra.mxu0 0.0
  %3998 = vmatprep.subr.mxu0 0.0
  %3999 = vmatpush1.msra.mxu0 0.0
  %4000 = vmatprep.subr.mxu0 0.0
  %4001 = vmatpush1.msra.mxu0 0.0
  %4002 = vmatprep.subr.mxu0 0.0
  %4003 = vmatpush1.msra.mxu0 0.0
  %4004 = vmatprep.subr.mxu0 0.0
  %4005 = vmatpush1.msra.mxu0 0.0
  %4006 = vmatprep.subr.mxu0 0.0
  %4007 = vmatpush1.msra.mxu0 0.0
  %4008 = vmatprep.subr.mxu0 0.0
  %4009 = vmatpush1.msra.mxu0 0.0
  %4010 = vmatprep.subr.mxu0 0.0
  %4011 = vmatpush1.msra.mxu0 0.0
  %4012 = vmatprep.subr.mxu0 0.0
  %4013 = vmatpush1.msra.mxu0 0.0
  %4014 = vmatprep.subr.mxu0 0.0
  %4015 = vmatpush1.msra.mxu0 0.0
  %4016 = vmatprep.subr.mxu0 0.0
  %4017 = vmatpush1.msra.mxu0 0.0
  %4018 = vmatprep.subr.mxu0 0.0
  %4019 = vmatpush1.msra.mxu0 0.0
  %4020 = vmatprep.subr.mxu0 0.0
  %4021 = vmatpush1.msra.mxu0 0.0
  %4022 = vmatprep.subr.mxu0 0.0
  %4023 = vmatpush1.msra.mxu0 0.0
  %4024 = vmatprep.subr.mxu0 0.0
  %4025 = vmatpush1.msra.mxu0 0.0
  %4026 = vmatprep.subr.mxu0 0.0
  %4027 = vmatpush1.msra.mxu0 0.0
  %4028 = vmatprep.subr.mxu0 0.0
  %4029 = vmatpush1.msra.mxu0 0.0
  %4030 = vmatprep.subr.mxu0 0.0
  %4031 = vmatpush1.msra.mxu0 0.0
  %4032 = vmatprep.subr.mxu0 0.0
  %4033 = vmatpush1.msra.mxu0 0.0
  %4034 = vmatprep.subr.mxu0 0.0
  %4035 = vmatpush1.msra.mxu0 0.0
  %4036 = vmatprep.subr.mxu0 0.0
  %4037 = vmatpush1.msra.mxu0 0.0
  %4038 = vmatprep.mubr.f32.mxu0 0.0
  %4039 = vmatmul.mubr.f32.gmra.mrb[0].mxu0 %v2083
  %v4040 = vpop.f32.mrb[0].mxu0
  %v4041 = vadd.f32 0.0, %v4040
  %v4042 = vpop.f32.mrb[0].mxu0
  %4043 = vmatprep.mubr.f32.mxu0 0.0
  %4044 = vmatmul.mubr.f32.gmra.mrb[0].mxu0 %v2086
  %v4045 = vpop.f32.mrb[0].mxu0
  %v4046 = vadd.f32 0.0, %v4045
  %v4047 = vpop.f32.mrb[0].mxu0
  %4048 = vdwg.mxu0
  %v4049 = vadd.f32 %v3972, %v4041
  %v4050 = vadd.f32 %v3973, %v4046
  %4051 = vmatprep.subr.mxu0 0.0
  %4052 = vmatpush1.msra.mxu0 %v3895
  %4053 = vmatprep.subr.mxu0 0.0
  %4054 = vmatpush1.msra.mxu0 %v3896
  %4055 = vmatprep.subr.mxu0 0.0
  %4056 = vmatpush1.msra.mxu0 0.0
  %4057 = vmatprep.subr.mxu0 0.0
  %4058 = vmatpush1.msra.mxu0 0.0
  %4059 = vmatprep.subr.mxu0 0.0
  %4060 = vmatpush1.msra.mxu0 0.0
  %4061 = vmatprep.subr.mxu0 0.0
  %4062 = vmatpush1.msra.mxu0 0.0
  %4063 = vmatprep.subr.mxu0 0.0
  %4064 = vmatpush1.msra.mxu0 0.0
  %4065 = vmatprep.subr.mxu0 0.0
  %4066 = vmatpush1.msra.mxu0 0.0
  %4067 = vmatprep.subr.mxu0 0.0
  %4068 = vmatpush1.msra.mxu0 0.0
  %4069 = vmatprep.subr.mxu0 0.0
  %4070 = vmatpush1.msra.mxu0 0.0
  %4071 = vmatprep.subr.mxu0 0.0
  %4072 = vmatpush1.msra.mxu0 0.0
  %4073 = vmatprep.subr.mxu0 0.0
  %4074 = vmatpush1.msra.mxu0 0.0
  %4075 = vmatprep.subr.mxu0 0.0
  %4076 = vmatpush1.msra.mxu0 0.0
  %4077 = vmatprep.subr.mxu0 0.0
  %4078 = vmatpush1.msra.mxu0 0.0
  %4079 = vmatprep.subr.mxu0 0.0
  %4080 = vmatpush1.msra.mxu0 0.0
  %4081 = vmatprep.subr.mxu0 0.0
  %4082 = vmatpush1.msra.mxu0 0.0
  %4083 = vmatprep.subr.mxu0 0.0
  %4084 = vmatpush1.msra.mxu0 0.0
  %4085 = vmatprep.subr.mxu0 0.0
  %4086 = vmatpush1.msra.mxu0 0.0
  %4087 = vmatprep.subr.mxu0 0.0
  %4088 = vmatpush1.msra.mxu0 0.0
  %4089 = vmatprep.subr.mxu0 0.0
  %4090 = vmatpush1.msra.mxu0 0.0
  %4091 = vmatprep.subr.mxu0 0.0
  %4092 = vmatpush1.msra.mxu0 0.0
  %4093 = vmatprep.subr.mxu0 0.0
  %4094 = vmatpush1.msra.mxu0 0.0
  %4095 = vmatprep.subr.mxu0 0.0
  %4096 = vmatpush1.msra.mxu0 0.0
  %4097 = vmatprep.subr.mxu0 0.0
  %4098 = vmatpush1.msra.mxu0 0.0
  %4099 = vmatprep.subr.mxu0 0.0
  %4100 = vmatpush1.msra.mxu0 0.0
  %4101 = vmatprep.subr.mxu0 0.0
  %4102 = vmatpush1.msra.mxu0 0.0
  %4103 = vmatprep.subr.mxu0 0.0
  %4104 = vmatpush1.msra.mxu0 0.0
  %4105 = vmatprep.subr.mxu0 0.0
  %4106 = vmatpush1.msra.mxu0 0.0
  %4107 = vmatprep.subr.mxu0 0.0
  %4108 = vmatpush1.msra.mxu0 0.0
  %4109 = vmatprep.subr.mxu0 0.0
  %4110 = vmatpush1.msra.mxu0 0.0
  %4111 = vmatprep.subr.mxu0 0.0
  %4112 = vmatpush1.msra.mxu0 0.0
  %4113 = vmatprep.subr.mxu0 0.0
  %4114 = vmatpush1.msra.mxu0 0.0
  %4115 = vmatprep.mubr.f32.mxu0 0.0
  %4116 = vmatmul.mubr.f32.gmra.mrb[0].mxu0 %v2166
  %v4117 = vpop.f32.mrb[0].mxu0
  %v4118 = vadd.f32 0.0, %v4117
  %v4119 = vpop.f32.mrb[0].mxu0
  %4120 = vmatprep.mubr.f32.mxu0 0.0
  %4121 = vmatmul.mubr.f32.gmra.mrb[0].mxu0 %v2169
  %v4122 = vpop.f32.mrb[0].mxu0
  %v4123 = vadd.f32 0.0, %v4122
  %v4124 = vpop.f32.mrb[0].mxu0
  %4125 = vdwg.mxu0
  %v4126 = vadd.f32 %v4049, %v4118
  %v4127 = vadd.f32 %v4050, %v4123
  %4128 = vmatprep.subr.mxu0 0.0
  %4129 = vmatpush1.msra.mxu0 %v3809
  %4130 = vmatprep.subr.mxu0 0.0
  %4131 = vmatpush1.msra.mxu0 0.0
  %4132 = vmatprep.subr.mxu0 0.0
  %4133 = vmatpush1.msra.mxu0 0.0
  %4134 = vmatprep.subr.mxu0 0.0
  %4135 = vmatpush1.msra.mxu0 0.0
  %4136 = vmatprep.subr.mxu0 0.0
  %4137 = vmatpush1.msra.mxu0 0.0
  %4138 = vmatprep.subr.mxu0 0.0
  %4139 = vmatpush1.msra.mxu0 0.0
  %4140 = vmatprep.subr.mxu0 0.0
  %4141 = vmatpush1.msra.mxu0 0.0
  %4142 = vmatprep.subr.mxu0 0.0
  %4143 = vmatpush1.msra.mxu0 0.0
  %4144 = vmatprep.subr.mxu0 0.0
  %4145 = vmatpush1.msra.mxu0 0.0
  %4146 = vmatprep.subr.mxu0 0.0
  %4147 = vmatpush1.msra.mxu0 0.0
  %4148 = vmatprep.subr.mxu0 0.0
  %4149 = vmatpush1.msra.mxu0 0.0
  %4150 = vmatprep.subr.mxu0 0.0
  %4151 = vmatpush1.msra.mxu0 0.0
  %4152 = vmatprep.subr.mxu0 0.0
  %4153 = vmatpush1.msra.mxu0 0.0
  %4154 = vmatprep.subr.mxu0 0.0
  %4155 = vmatpush1.msra.mxu0 0.0
  %4156 = vmatprep.subr.mxu0 0.0
  %4157 = vmatpush1.msra.mxu0 0.0
  %4158 = vmatprep.subr.mxu0 0.0
  %4159 = vmatpush1.msra.mxu0 0.0
  %4160 = vmatprep.subr.mxu0 0.0
  %4161 = vmatpush1.msra.mxu0 0.0
  %4162 = vmatprep.subr.mxu0 0.0
  %4163 = vmatpush1.msra.mxu0 0.0
  %4164 = vmatprep.subr.mxu0 0.0
  %4165 = vmatpush1.msra.mxu0 0.0
  %4166 = vmatprep.subr.mxu0 0.0
  %4167 = vmatpush1.msra.mxu0 0.0
  %4168 = vmatprep.subr.mxu0 0.0
  %4169 = vmatpush1.msra.mxu0 0.0
  %4170 = vmatprep.subr.mxu0 0.0
  %4171 = vmatpush1.msra.mxu0 0.0
  %4172 = vmatprep.subr.mxu0 0.0
  %4173 = vmatpush1.msra.mxu0 0.0
  %4174 = vmatprep.subr.mxu0 0.0
  %4175 = vmatpush1.msra.mxu0 0.0
  %4176 = vmatprep.subr.mxu0 0.0
  %4177 = vmatpush1.msra.mxu0 0.0
  %4178 = vmatprep.subr.mxu0 0.0
  %4179 = vmatpush1.msra.mxu0 0.0
  %4180 = vmatprep.subr.mxu0 0.0
  %4181 = vmatpush1.msra.mxu0 0.0
  %4182 = vmatprep.subr.mxu0 0.0
  %4183 = vmatpush1.msra.mxu0 0.0
  %4184 = vmatprep.subr.mxu0 0.0
  %4185 = vmatpush1.msra.mxu0 0.0
  %4186 = vmatprep.subr.mxu0 0.0
  %4187 = vmatpush1.msra.mxu0 0.0
  %4188 = vmatprep.subr.mxu0 0.0
  %4189 = vmatpush1.msra.mxu0 0.0
  %4190 = vmatprep.subr.mxu0 0.0
  %4191 = vmatpush1.msra.mxu0 0.0
  %4192 = vmatprep.mubr.f32.mxu0 0.0
  %4193 = vmatmul.mubr.f32.gmra.mrb[0].mxu0 %v3813
  %v4194 = vpop.f32.mrb[0].mxu0
  %v4195 = vadd.f32 0.0, %v4194
  %v4196 = vpop.f32.mrb[0].mxu0
  %4197 = vmatprep.mubr.f32.mxu0 0.0
  %4198 = vmatmul.mubr.f32.gmra.mrb[0].mxu0 %v3816
  %v4199 = vpop.f32.mrb[0].mxu0
  %v4200 = vadd.f32 0.0, %v4199
  %v4201 = vpop.f32.mrb[0].mxu0
  %4202 = vdwg.mxu0
  %v4203 = vmul.f32 %v4195, 0.5
  %v4204 = vmul.f32 %v4200, 0.5
  %v4205 = vadd.f32 %v4203, %v4126
  %v4206 = vadd.f32 %v4204, %v4127
  %4207 = vmatprep.subr.mxu0 0.0
  %4208 = vmatpush1.msra.mxu0 %v3809
  %4209 = vmatprep.subr.mxu0 0.0
  %4210 = vmatpush1.msra.mxu0 0.0
  %4211 = vmatprep.subr.mxu0 0.0
  %4212 = vmatpush1.msra.mxu0 0.0
  %4213 = vmatprep.subr.mxu0 0.0
  %4214 = vmatpush1.msra.mxu0 0.0
  %4215 = vmatprep.subr.mxu0 0.0
  %4216 = vmatpush1.msra.mxu0 0.0
  %4217 = vmatprep.subr.mxu0 0.0
  %4218 = vmatpush1.msra.mxu0 0.0
  %4219 = vmatprep.subr.mxu0 0.0
  %4220 = vmatpush1.msra.mxu0 0.0
  %4221 = vmatprep.subr.mxu0 0.0
  %4222 = vmatpush1.msra.mxu0 0.0
  %4223 = vmatprep.subr.mxu0 0.0
  %4224 = vmatpush1.msra.mxu0 0.0
  %4225 = vmatprep.subr.mxu0 0.0
  %4226 = vmatpush1.msra.mxu0 0.0
  %4227 = vmatprep.subr.mxu0 0.0
  %4228 = vmatpush1.msra.mxu0 0.0
  %4229 = vmatprep.subr.mxu0 0.0
  %4230 = vmatpush1.msra.mxu0 0.0
  %4231 = vmatprep.subr.mxu0 0.0
  %4232 = vmatpush1.msra.mxu0 0.0
  %4233 = vmatprep.subr.mxu0 0.0
  %4234 = vmatpush1.msra.mxu0 0.0
  %4235 = vmatprep.subr.mxu0 0.0
  %4236 = vmatpush1.msra.mxu0 0.0
  %4237 = vmatprep.subr.mxu0 0.0
  %4238 = vmatpush1.msra.mxu0 0.0
  %4239 = vmatprep.subr.mxu0 0.0
  %4240 = vmatpush1.msra.mxu0 0.0
  %4241 = vmatprep.subr.mxu0 0.0
  %4242 = vmatpush1.msra.mxu0 0.0
  %4243 = vmatprep.subr.mxu0 0.0
  %4244 = vmatpush1.msra.mxu0 0.0
  %4245 = vmatprep.subr.mxu0 0.0
  %4246 = vmatpush1.msra.mxu0 0.0
  %4247 = vmatprep.subr.mxu0 0.0
  %4248 = vmatpush1.msra.mxu0 0.0
  %4249 = vmatprep.subr.mxu0 0.0
  %4250 = vmatpush1.msra.mxu0 0.0
  %4251 = vmatprep.subr.mxu0 0.0
  %4252 = vmatpush1.msra.mxu0 0.0
  %4253 = vmatprep.subr.mxu0 0.0
  %4254 = vmatpush1.msra.mxu0 0.0
  %4255 = vmatprep.subr.mxu0 0.0
  %4256 = vmatpush1.msra.mxu0 0.0
  %4257 = vmatprep.subr.mxu0 0.0
  %4258 = vmatpush1.msra.mxu0 0.0
  %4259 = vmatprep.subr.mxu0 0.0
  %4260 = vmatpush1.msra.mxu0 0.0
  %4261 = vmatprep.subr.mxu0 0.0
  %4262 = vmatpush1.msra.mxu0 0.0
  %4263 = vmatprep.subr.mxu0 0.0
  %4264 = vmatpush1.msra.mxu0 0.0
  %4265 = vmatprep.subr.mxu0 0.0
  %4266 = vmatpush1.msra.mxu0 0.0
  %4267 = vmatprep.subr.mxu0 0.0
  %4268 = vmatpush1.msra.mxu0 0.0
  %4269 = vmatprep.subr.mxu0 0.0
  %4270 = vmatpush1.msra.mxu0 0.0
  %4271 = vmatprep.mubr.f32.mxu0 0.0
  %4272 = vmatmul.mubr.f32.gmra.mrb[0].mxu0 %v1921
  %v4273 = vpop.f32.mrb[0].mxu0
  %v4274 = vadd.f32 0.0, %v4273
  %v4275 = vpop.f32.mrb[0].mxu0
  %4276 = vmatprep.mubr.f32.mxu0 0.0
  %4277 = vmatmul.mubr.f32.gmra.mrb[0].mxu0 %v1924
  %v4278 = vpop.f32.mrb[0].mxu0
  %v4279 = vadd.f32 0.0, %v4278
  %v4280 = vpop.f32.mrb[0].mxu0
  %4281 = vdwg.mxu0
  %v4282 = vmul.f32 %v4274, 0.25
  %v4283 = vmul.f32 %v4279, 0.25
  %v4284 = vsub.f32 %v4205, %v4282
  %v4285 = vsub.f32 %v4206, %v4283
  %v4286 = vadd.f32 %v4284, %v2331
  %v4287 = vadd.f32 %v4285, %v2332
  %v4288 = vsel %vm549, %v4286, -inf
  %4289 = vmax.xlane.f32.xlu0 %v4288
  %v4290 = vpop.xlane.xlu0 %4289
  %v4291 = vsel %vm549, %v4287, -inf
  %4292 = vmax.xlane.f32.xlu0 %v4291
  %v4293 = vpop.xlane.xlu0 %4292
  %v4294 = vsub.f32 %v4286, %v4290
  %v4295 = vsub.f32 %v4287, %v4293
  %v4296 = vmul.f32 %v4294, 1.442695
  %v4297 = vpow.pop %v4296
  %v4298 = vmul.f32 %v4295, 1.442695
  %v4299 = vpow.pop %v4298
  %v4300 = vsel %vm549, %v4297, 0.0
  %4301 = vadd.xlane.f32.xlu0 %v4300
  %v4302 = vpop.xlane.xlu0 %4301
  %v4303 = vsel %vm549, %v4299, 0.0
  %4304 = vadd.xlane.f32.xlu0 %v4303
  %v4305 = vpop.xlane.xlu0 %4304
  %v4306 = vlog2.pop %v4302
  %v4307 = vmul.f32 %v4306, 0.6931472
  %v4308 = vlog2.pop %v4305
  %v4309 = vmul.f32 %v4308, 0.6931472
  %v4310 = vsub.f32 %v4294, %v4307
  %v4311 = vsub.f32 %v4295, %v4309
  %4312 = vst.msk [vmem:[%s1] sm:$0xff] %vm549, %v4310
  %4313 = vst.msk [vmem:[%s1 + $0x8] sm:$0xff] %vm549, %v4311
  // Predicated region
  $region6: #{mlp_norm_forward.1} parent=0 // pred_check
    _
  $region7: #{mlp_norm_forward.1} parent=0 // pred_check_branch
    %4315 = sbr.rel (0) target = $region9
  $region8: #{mlp_norm_forward.1} parent=0 // pred_region
    _
  $region9: #{mlp_norm_forward.1} parent=0 // pred_fallthru
    _
  // Predicated region
  $region10: #{mlp_norm_forward.1} parent=0 // pred_check
    _
  $region11: #{mlp_norm_forward.1} parent=0 // pred_check_branch
    %4317 = sbr.rel (0) target = $region13
  $region12: #{mlp_norm_forward.1} parent=0 // pred_region
    _
  $region13: #{mlp_norm_forward.1} parent=0 // pred_fallthru
    _

</llo_original>
